<compile_context>
chip_gen: v6e
topology: v6e:2x2x1
jax: 0.10.0
libtpu: 0.0.40
codegen_flags: <defaults>
</compile_context>

<pallas_src>
import functools

import jax
import jax.numpy as jnp
from jax.experimental import pallas as pl
from jax.experimental.pallas import tpu as pltpu

EPS = 1e-5
LANE = 128
VMEM_LIMIT = 32 * 1024 * 1024


def _ceil_to(x, m):
    return (x + m - 1) // m * m


# ----------------------------- Pallas kernels ------------------------------ #

def _stage1_kernel(xph_ref, w1_ref, ws_ref,
                   y1_ref, ys_ref, s1_ref, q1_ref, ss_ref, qs_ref,
                   *, stride, pad, ksize):
    """conv1 (3x3 stride s) + skipConv (1x1 stride s) + per-image BN partial stats."""
    _, Ho, Wo, Coutp = y1_ref.shape
    Cinp = xph_ref.shape[-1]
    s = stride

    # conv1: tap accumulation over shifted slices of the polyphase-packed padded input.
    acc = jnp.zeros((Ho * Wo, Coutp), jnp.float32)
    accs = None
    for ky in range(ksize):
        for kx in range(ksize):
            ph = (ky % s) * s + (kx % s)
            oy, ox = ky // s, kx // s
            xt = xph_ref[0, ph, oy:oy + Ho, ox:ox + Wo, :].reshape(Ho * Wo, Cinp)
            acc = acc + jnp.dot(xt, w1_ref[ky * ksize + kx],
                                preferred_element_type=jnp.float32)
            if ky == pad and kx == pad:
                # skipConv (1x1, stride s, no pad) reads exactly the centre-tap slice
                # (ksize=3, pad=1) -> reuse it, no extra slice / relayout.
                accs = jnp.dot(xt, ws_ref[...], preferred_element_type=jnp.float32)

    # conv biases intentionally omitted: exactly cancelled by training-mode BatchNorm.
    y1_ref[0] = acc.reshape(Ho, Wo, Coutp)
    ys_ref[0] = accs.reshape(Ho, Wo, Coutp)

    # per-image partial sums / sum-of-squares (reduced over the batch host-side):
    # keeps the batch grid axis embarrassingly parallel (megacore-friendly).
    s1_ref[0] = jnp.sum(acc, axis=0, keepdims=True)
    q1_ref[0] = jnp.sum(acc * acc, axis=0, keepdims=True)
    ss_ref[0] = jnp.sum(accs, axis=0, keepdims=True)
    qs_ref[0] = jnp.sum(accs * accs, axis=0, keepdims=True)


def _stage2_kernel(y1_ref, a1_ref, c1_ref, w2_ref,
                   y2_ref, s2_ref, q2_ref,
                   hpad_ref, *, ksize, cdt):
    """BN1(global stats)+ReLU in VMEM, conv2 (3x3 stride 1) tap matmuls, BN2 partial stats."""
    _, Ho, Wo, Coutp = y2_ref.shape

    # h1 = ReLU(BN1(y1)) with BN folded into per-channel scale/shift; never leaves VMEM.
    h1 = jnp.maximum(y1_ref[0] * a1_ref[...] + c1_ref[...], 0.0)
    hpad_ref[...] = jnp.zeros_like(hpad_ref)            # zero halo (stateless per step)
    hpad_ref[1:Ho + 1, 1:Wo + 1, :] = h1.astype(cdt)

    # conv2: 3x3 stride-1 tap accumulation over the zero-padded VMEM tile.
    acc = jnp.zeros((Ho * Wo, Coutp), jnp.float32)
    for ky in range(ksize):
        for kx in range(ksize):
            xt = hpad_ref[ky:ky + Ho, kx:kx + Wo, :].reshape(Ho * Wo, Coutp)
            acc = acc + jnp.dot(xt, w2_ref[ky * ksize + kx],
                                preferred_element_type=jnp.float32)

    y2_ref[0] = acc.reshape(Ho, Wo, Coutp)
    s2_ref[0] = jnp.sum(acc, axis=0, keepdims=True)
    q2_ref[0] = jnp.sum(acc * acc, axis=0, keepdims=True)


def _stage3_kernel(y2_ref, ys_ref, a2_ref, as_ref, csum_ref, out_ref):
    """Finalize: BN2(y2) + skipBN(skip) folded affines (shared shift), add, ReLU."""
    out_ref[0] = jnp.maximum(
        y2_ref[0] * a2_ref[...] + ys_ref[0] * as_ref[...] + csum_ref[...], 0.0)


# ------------------------------ JAX wrapper --------------------------------- #

@functools.partial(jax.jit, static_argnames=("stride", "compute_dtype"))
def resblock_forward(x_nchw, params, *, stride, compute_dtype=jnp.float32):
    ksize, pad = 3, 1
    f32 = jnp.float32
    x = jnp.transpose(x_nchw, (0, 2, 3, 1)).astype(f32)        # NCHW -> NHWC
    N, H, W, Cin = x.shape
    Cout = params["w1"].shape[0]
    Cinp, Coutp = _ceil_to(Cin, LANE), _ceil_to(Cout, LANE)
    s = stride

    Ho = (H + 2 * pad - ksize) // s + 1
    Wo = (W + 2 * pad - ksize) // s + 1
    Hph = Ho + (ksize - 1) // s
    Wph = Wo + (ksize - 1) // s
    M = N * Ho * Wo

    # --- host-side layout prep (pure data movement, ~1x the input size) ---
    xp = jnp.pad(x, ((0, 0), (pad, pad), (pad, pad), (0, Cinp - Cin)))
    phases = []
    for py in range(s):
        for px in range(s):
            slab = xp[:, py::s, px::s, :][:, :Hph, :Wph, :]
            slab = jnp.pad(slab, ((0, 0), (0, Hph - slab.shape[1]),
                                  (0, Wph - slab.shape[2]), (0, 0)))
            phases.append(slab)
    xph = jnp.stack(phases, axis=1).astype(compute_dtype)      # (N, s*s, Hph, Wph, Cinp)

    def wmat3(w, cin_pad):        # (Cout, Cin_, 3, 3) -> (9, cin_pad, Coutp)
        co, ci = w.shape[0], w.shape[1]
        wt = jnp.transpose(w, (2, 3, 1, 0)).reshape(ksize * ksize, ci, co)
        return jnp.pad(wt, ((0, 0), (0, cin_pad - ci),
                            (0, Coutp - co))).astype(compute_dtype)

    w1m = wmat3(params["w1"], Cinp)
    w2m = wmat3(params["w2"], Coutp)
    wsm = jnp.pad(params["ws"][:, :, 0, 0].T,
                  ((0, Cinp - Cin), (0, Coutp - Cout))).astype(compute_dtype)

    def crow(v):                  # (Cout,) -> (1, Coutp) f32, zero padded
        return jnp.pad(v.astype(f32), (0, Coutp - Cout)).reshape(1, Coutp)

    row_spec = pl.BlockSpec((1, Coutp), lambda n: (0, 0))
    img_spec = pl.BlockSpec((1, Ho, Wo, Coutp), lambda n: (n, 0, 0, 0))
    stat_spec = pl.BlockSpec((1, 1, Coutp), lambda n: (n, 0, 0))
    img_shape = jax.ShapeDtypeStruct((N, Ho, Wo, Coutp), f32)
    stat_shape = jax.ShapeDtypeStruct((N, 1, Coutp), f32)

    # ---------------- stage 1: conv1 + skipConv + per-image BN statistics ----------------
    y1, ys, s1p, q1p, ssp, qsp = pl.pallas_call(
        functools.partial(_stage1_kernel, stride=s, pad=pad, ksize=ksize),
        grid=(N,),
        in_specs=[
            pl.BlockSpec((1, s * s, Hph, Wph, Cinp), lambda n: (n, 0, 0, 0, 0)),
            pl.BlockSpec((ksize * ksize, Cinp, Coutp), lambda n: (0, 0, 0)),
            pl.BlockSpec((Cinp, Coutp), lambda n: (0, 0)),
        ],
        out_specs=(img_spec, img_spec, stat_spec, stat_spec, stat_spec, stat_spec),
        out_shape=(img_shape, img_shape, stat_shape, stat_shape, stat_shape, stat_shape),
        compiler_params=pltpu.CompilerParams(
            dimension_semantics=("parallel",),        # per-image work + per-image stats
            vmem_limit_bytes=VMEM_LIMIT),
        cost_estimate=pl.CostEstimate(
            flops=2 * M * Cinp * Coutp * (ksize * ksize + 1),
            transcendentals=0,
            bytes_accessed=int(xph.size * xph.dtype.itemsize
                               + (w1m.size + wsm.size) * w1m.dtype.itemsize
                               + 2 * M * Coutp * 4 + 4 * N * Coutp * 4)),
    )(xph, w1m, wsm)

    # tiny O(N*C) finalize in plain JAX: reduce partial stats, fold into scale/shift.
    inv_m = 1.0 / M

    def fold(sum_rows, sq_rows, g, b):
        mean = jnp.sum(sum_rows, axis=0) * inv_m                 # (1, Coutp)
        var = jnp.maximum(jnp.sum(sq_rows, axis=0) * inv_m - mean * mean, 0.0)
        a = g * jax.lax.rsqrt(var + EPS)
        return a, b - mean * a

    a1, c1 = fold(s1p, q1p, crow(params["g1"]), crow(params["be1"]))
    a_s, c_s = fold(ssp, qsp, crow(params["gs"]), crow(params["bes"]))

    # ---------------- stage 2: BN1+ReLU (VMEM only) + conv2 + per-image BN2 stats ----
    y2, s2p, q2p = pl.pallas_call(
        functools.partial(_stage2_kernel, ksize=ksize, cdt=compute_dtype),
        grid=(N,),
        in_specs=[img_spec, row_spec, row_spec,
                  pl.BlockSpec((ksize * ksize, Coutp, Coutp), lambda n: (0, 0, 0))],
        out_specs=(img_spec, stat_spec, stat_spec),
        out_shape=(img_shape, stat_shape, stat_shape),
        scratch_shapes=[pltpu.VMEM((Ho + 2, Wo + 2, Coutp), compute_dtype)],
        compiler_params=pltpu.CompilerParams(
            dimension_semantics=("parallel",),
            vmem_limit_bytes=VMEM_LIMIT),
        cost_estimate=pl.CostEstimate(
            flops=2 * M * Coutp * Coutp * ksize * ksize,
            transcendentals=0,
            bytes_accessed=int((2 * M * Coutp
                                + ksize * ksize * Coutp * Coutp
                                + 2 * N * Coutp + 2 * Coutp) * 4)),
    )(y1, a1, c1, w2m)

    a2, c2 = fold(s2p, q2p, crow(params["g2"]), crow(params["be2"]))
    csum = c2 + c_s                                   # fold the two BN shifts host-side

    # ---------------- stage 3: BN2 + skipBN + residual add + ReLU ---------------
    out = pl.pallas_call(
        _stage3_kernel,
        grid=(N,),
        in_specs=[img_spec, img_spec, row_spec, row_spec, row_spec],
        out_specs=img_spec,
        out_shape=img_shape,
        compiler_params=pltpu.CompilerParams(
            dimension_semantics=("parallel",),        # pure per-image affine: megacore OK
            vmem_limit_bytes=VMEM_LIMIT),
        cost_estimate=pl.CostEstimate(
            flops=5 * M * Coutp, transcendentals=0,
            bytes_accessed=int(3 * M * Coutp * 4)),
    )(y2, ys, a2, a_s, csum)

    out = out[:, :, :, :Cout]                         # drop lane padding
    return jnp.transpose(out, (0, 3, 1, 2))           # NHWC -> NCHW


# --------------------------- pure-JAX reference ----------------------------- #

def ref_forward(x, params, stride):
    def conv(x, w, b, s, p):
        y = jax.lax.conv_general_dilated(
            x, w, (s, s), ((p, p), (p, p)),
            dimension_numbers=("NCHW", "OIHW", "NCHW"))
        return y + b[None, :, None, None]

    def bn(x, g, be):
        m = jnp.mean(x, axis=(0, 2, 3), keepdims=True)
        v = jnp.mean((x - m) ** 2, axis=(0, 2, 3), keepdims=True)
        return (x - m) * jax.lax.rsqrt(v + EPS) * g[None, :, None, None] \
            + be[None, :, None, None]

    h = jax.nn.relu(bn(conv(x, params["w1"], params["b1"], stride, 1),
                       params["g1"], params["be1"]))
    y = bn(conv(h, params["w2"], params["b2"], 1, 1), params["g2"], params["be2"])
    s = bn(conv(x, params["ws"], params["bs"], stride, 0), params["gs"], params["bes"])
    return jax.nn.relu(y + s)


# --------------------------------- main ------------------------------------ #

if __name__ == "__main__":
    N, Cin, H, W = 2, 4, 16, 16
    Cout = 8

    key = jax.random.PRNGKey(0)
    keys = jax.random.split(key, 13)
    params = {
        "w1": 0.1 * jax.random.normal(keys[0], (Cout, Cin, 3, 3), jnp.float32),
        "b1": 0.1 * jax.random.normal(keys[1], (Cout,), jnp.float32),
        "g1": 1.0 + 0.1 * jax.random.normal(keys[2], (Cout,), jnp.float32),
        "be1": 0.1 * jax.random.normal(keys[3], (Cout,), jnp.float32),
        "w2": 0.1 * jax.random.normal(keys[4], (Cout, Cout, 3, 3), jnp.float32),
        "b2": 0.1 * jax.random.normal(keys[5], (Cout,), jnp.float32),
        "g2": 1.0 + 0.1 * jax.random.normal(keys[6], (Cout,), jnp.float32),
        "be2": 0.1 * jax.random.normal(keys[7], (Cout,), jnp.float32),
        "ws": 0.1 * jax.random.normal(keys[8], (Cout, Cin, 1, 1), jnp.float32),
        "bs": 0.1 * jax.random.normal(keys[9], (Cout,), jnp.float32),
        "gs": 1.0 + 0.1 * jax.random.normal(keys[10], (Cout,), jnp.float32),
        "bes": 0.1 * jax.random.normal(keys[11], (Cout,), jnp.float32),
    }
    x = jax.random.normal(keys[12], (N, Cin, H, W), jnp.float32)

    for stride in (2, 1):
        out = jax.block_until_ready(resblock_forward(x, params, stride=stride))
        Ho = (H + 2 - 3) // stride + 1
        assert out.shape == (N, Cout, Ho, Ho), out.shape
        ref = ref_forward(x, params, stride)
        err = float(jnp.max(jnp.abs(out - ref)))
        assert err < 1e-3, f"stride={stride} max abs err {err}"

    print("KERNEL_OK")
</pallas_src>

<mosaic_0001>
module attributes {stable_mosaic.version = 11 : i64} {
  func.func @_stage3_kernel(%arg0: i32, %arg1: memref<1x8x8x128xf32, #tpu.memory_space<vmem>>, %arg2: memref<1x8x8x128xf32, #tpu.memory_space<vmem>>, %arg3: memref<1x128xf32, #tpu.memory_space<vmem>>, %arg4: memref<1x128xf32, #tpu.memory_space<vmem>>, %arg5: memref<1x128xf32, #tpu.memory_space<vmem>>, %arg6: memref<1x8x8x128xf32, #tpu.memory_space<vmem>>) attributes {dimension_semantics = [#tpu.dimension_semantics<parallel>], iteration_bounds = array<i64: 2>, scalar_prefetch = 0 : i64, scratch_operands = 0 : i64, tpu.core_type = #tpu.core_type<tc>, window_params = [{transform_indices = @transform_0, window_bounds = array<i64: 1, 8, 8, 128>}, {transform_indices = @transform_1, window_bounds = array<i64: 1, 8, 8, 128>}, {pipeline_mode = #tpu.pipeline_mode<synchronous>, transform_indices = @transform_2, window_bounds = array<i64: 1, 128>}, {pipeline_mode = #tpu.pipeline_mode<synchronous>, transform_indices = @transform_3, window_bounds = array<i64: 1, 128>}, {pipeline_mode = #tpu.pipeline_mode<synchronous>, transform_indices = @transform_4, window_bounds = array<i64: 1, 128>}, {transform_indices = @transform_5, window_bounds = array<i64: 1, 8, 8, 128>}]} {
    %c0 = arith.constant 0 : index
    %c0_0 = arith.constant 0 : index
    %c0_1 = arith.constant 0 : index
    %c0_2 = arith.constant 0 : index
    %0 = vector.load %arg1[%c0, %c0_0, %c0_1, %c0_2] : memref<1x8x8x128xf32, #tpu.memory_space<vmem>>, vector<1x8x8x128xf32>
    %1 = vector.shape_cast %0 : vector<1x8x8x128xf32> to vector<8x8x128xf32>
    %c0_3 = arith.constant 0 : index
    %c0_4 = arith.constant 0 : index
    %2 = vector.load %arg3[%c0_3, %c0_4] : memref<1x128xf32, #tpu.memory_space<vmem>>, vector<1x128xf32>
    %3 = vector.shape_cast %2 : vector<1x128xf32> to vector<1x1x128xf32>
    %4 = vector.broadcast %3 : vector<1x1x128xf32> to vector<8x8x128xf32>
    %5 = arith.mulf %1, %4 : vector<8x8x128xf32>
    %c0_5 = arith.constant 0 : index
    %c0_6 = arith.constant 0 : index
    %c0_7 = arith.constant 0 : index
    %c0_8 = arith.constant 0 : index
    %6 = vector.load %arg2[%c0_5, %c0_6, %c0_7, %c0_8] : memref<1x8x8x128xf32, #tpu.memory_space<vmem>>, vector<1x8x8x128xf32>
    %7 = vector.shape_cast %6 : vector<1x8x8x128xf32> to vector<8x8x128xf32>
    %c0_9 = arith.constant 0 : index
    %c0_10 = arith.constant 0 : index
    %8 = vector.load %arg4[%c0_9, %c0_10] : memref<1x128xf32, #tpu.memory_space<vmem>>, vector<1x128xf32>
    %9 = vector.shape_cast %8 : vector<1x128xf32> to vector<1x1x128xf32>
    %10 = vector.broadcast %9 : vector<1x1x128xf32> to vector<8x8x128xf32>
    %11 = arith.mulf %7, %10 : vector<8x8x128xf32>
    %12 = arith.addf %5, %11 : vector<8x8x128xf32>
    %c0_11 = arith.constant 0 : index
    %c0_12 = arith.constant 0 : index
    %13 = vector.load %arg5[%c0_11, %c0_12] : memref<1x128xf32, #tpu.memory_space<vmem>>, vector<1x128xf32>
    %14 = vector.shape_cast %13 : vector<1x128xf32> to vector<1x1x128xf32>
    %15 = vector.broadcast %14 : vector<1x1x128xf32> to vector<8x8x128xf32>
    %16 = arith.addf %12, %15 : vector<8x8x128xf32>
    %cst = arith.constant 0.000000e+00 : f32
    %17 = vector.broadcast %cst : f32 to vector<8x8x128xf32>
    %18 = arith.maximumf %16, %17 : vector<8x8x128xf32>
    %c0_13 = arith.constant 0 : index
    %c0_14 = arith.constant 0 : index
    %c0_15 = arith.constant 0 : index
    %c0_16 = arith.constant 0 : index
    %19 = vector.load %arg6[%c0_13, %c0_14, %c0_15, %c0_16] : memref<1x8x8x128xf32, #tpu.memory_space<vmem>>, vector<1x8x8x128xf32>
    %20 = vector.shape_cast %19 : vector<1x8x8x128xf32> to vector<8x8x128xf32>
    %21 = vector.shape_cast %18 : vector<8x8x128xf32> to vector<1x8x8x128xf32>
    tpu.vector_store %arg6[%c0_13, %c0_14, %c0_15, %c0_16], %21 {strides = array<i32>} : memref<1x8x8x128xf32, #tpu.memory_space<vmem>>, vector<1x8x8x128xf32>,
    return
  }
  func.func @transform_0(%arg0: i32) -> (i32, i32, i32, i32) {
    %c0_i32 = arith.constant 0 : i32
    %c0_i32_0 = arith.constant 0 : i32
    %c0_i32_1 = arith.constant 0 : i32
    %c0_i32_2 = arith.constant 0 : i32
    return %arg0, %c0_i32, %c0_i32_0, %c0_i32_1 : i32, i32, i32, i32
  }
  func.func @transform_1(%arg0: i32) -> (i32, i32, i32, i32) {
    %c0_i32 = arith.constant 0 : i32
    %c0_i32_0 = arith.constant 0 : i32
    %c0_i32_1 = arith.constant 0 : i32
    %c0_i32_2 = arith.constant 0 : i32
    return %arg0, %c0_i32, %c0_i32_0, %c0_i32_1 : i32, i32, i32, i32
  }
  func.func @transform_2(%arg0: i32) -> (i32, i32) {
    %c0_i32 = arith.constant 0 : i32
    %c0_i32_0 = arith.constant 0 : i32
    %c0_i32_1 = arith.constant 0 : i32
    return %c0_i32, %c0_i32_0 : i32, i32
  }
  func.func @transform_3(%arg0: i32) -> (i32, i32) {
    %c0_i32 = arith.constant 0 : i32
    %c0_i32_0 = arith.constant 0 : i32
    %c0_i32_1 = arith.constant 0 : i32
    return %c0_i32, %c0_i32_0 : i32, i32
  }
  func.func @transform_4(%arg0: i32) -> (i32, i32) {
    %c0_i32 = arith.constant 0 : i32
    %c0_i32_0 = arith.constant 0 : i32
    %c0_i32_1 = arith.constant 0 : i32
    return %c0_i32, %c0_i32_0 : i32, i32
  }
  func.func @transform_5(%arg0: i32) -> (i32, i32, i32, i32) {
    %c0_i32 = arith.constant 0 : i32
    %c0_i32_0 = arith.constant 0 : i32
    %c0_i32_1 = arith.constant 0 : i32
    %c0_i32_2 = arith.constant 0 : i32
    return %arg0, %c0_i32, %c0_i32_0, %c0_i32_1 : i32, i32, i32, i32
  }
}

module attributes {stable_mosaic.version = 11 : i64} {
  func.func @_stage2_kernel(%arg0: i32, %arg1: memref<1x8x8x128xf32, #tpu.memory_space<vmem>>, %arg2: memref<1x128xf32, #tpu.memory_space<vmem>>, %arg3: memref<1x128xf32, #tpu.memory_space<vmem>>, %arg4: memref<9x128x128xf32, #tpu.memory_space<vmem>>, %arg5: memref<1x8x8x128xf32, #tpu.memory_space<vmem>>, %arg6: memref<1x1x128xf32, #tpu.memory_space<vmem>>, %arg7: memref<1x1x128xf32, #tpu.memory_space<vmem>>, %arg8: memref<10x10x128xf32, #tpu.memory_space<vmem>>) attributes {dimension_semantics = [#tpu.dimension_semantics<parallel>], iteration_bounds = array<i64: 2>, scalar_prefetch = 0 : i64, scratch_operands = 1 : i64, tpu.core_type = #tpu.core_type<tc>, window_params = [{transform_indices = @transform_0, window_bounds = array<i64: 1, 8, 8, 128>}, {pipeline_mode = #tpu.pipeline_mode<synchronous>, transform_indices = @transform_1, window_bounds = array<i64: 1, 128>}, {pipeline_mode = #tpu.pipeline_mode<synchronous>, transform_indices = @transform_2, window_bounds = array<i64: 1, 128>}, {pipeline_mode = #tpu.pipeline_mode<synchronous>, transform_indices = @transform_3, window_bounds = array<i64: 9, 128, 128>}, {transform_indices = @transform_4, window_bounds = array<i64: 1, 8, 8, 128>}, {transform_indices = @transform_5, window_bounds = array<i64: 1, 1, 128>}, {transform_indices = @transform_6, window_bounds = array<i64: 1, 1, 128>}]} {
    %c0 = arith.constant 0 : index
    %c0_0 = arith.constant 0 : index
    %c0_1 = arith.constant 0 : index
    %c0_2 = arith.constant 0 : index
    %0 = vector.load %arg1[%c0, %c0_0, %c0_1, %c0_2] : memref<1x8x8x128xf32, #tpu.memory_space<vmem>>, vector<1x8x8x128xf32>
    %1 = vector.shape_cast %0 : vector<1x8x8x128xf32> to vector<8x8x128xf32>
    %c0_3 = arith.constant 0 : index
    %c0_4 = arith.constant 0 : index
    %2 = vector.load %arg2[%c0_3, %c0_4] : memref<1x128xf32, #tpu.memory_space<vmem>>, vector<1x128xf32>
    %3 = vector.shape_cast %2 : vector<1x128xf32> to vector<1x1x128xf32>
    %4 = vector.broadcast %3 : vector<1x1x128xf32> to vector<8x8x128xf32>
    %5 = arith.mulf %1, %4 : vector<8x8x128xf32>
    %c0_5 = arith.constant 0 : index
    %c0_6 = arith.constant 0 : index
    %6 = vector.load %arg3[%c0_5, %c0_6] : memref<1x128xf32, #tpu.memory_space<vmem>>, vector<1x128xf32>
    %7 = vector.shape_cast %6 : vector<1x128xf32> to vector<1x1x128xf32>
    %8 = vector.broadcast %7 : vector<1x1x128xf32> to vector<8x8x128xf32>
    %9 = arith.addf %5, %8 : vector<8x8x128xf32>
    %cst = arith.constant 0.000000e+00 : f32
    %10 = vector.broadcast %cst : f32 to vector<8x8x128xf32>
    %11 = arith.maximumf %9, %10 : vector<8x8x128xf32>
    %cst_7 = arith.constant 0.000000e+00 : f32
    %12 = vector.broadcast %cst_7 : f32 to vector<10x10x128xf32>
    %c0_8 = arith.constant 0 : index
    %c0_9 = arith.constant 0 : index
    %c0_10 = arith.constant 0 : index
    %13 = vector.load %arg8[%c0_8, %c0_9, %c0_10] : memref<10x10x128xf32, #tpu.memory_space<vmem>>, vector<10x10x128xf32>
    tpu.vector_store %arg8[%c0_8, %c0_9, %c0_10], %12 {strides = array<i32>} : memref<10x10x128xf32, #tpu.memory_space<vmem>>, vector<10x10x128xf32>,
    %c1 = arith.constant 1 : index
    %c1_11 = arith.constant 1 : index
    %c0_12 = arith.constant 0 : index
    %14 = vector.load %arg8[%c1, %c1_11, %c0_12] : memref<10x10x128xf32, #tpu.memory_space<vmem>>, vector<8x8x128xf32>
    tpu.vector_store %arg8[%c1, %c1_11, %c0_12], %11 {strides = array<i32>} : memref<10x10x128xf32, #tpu.memory_space<vmem>>, vector<8x8x128xf32>,
    %cst_13 = arith.constant 0.000000e+00 : f32
    %15 = vector.broadcast %cst_13 : f32 to vector<64x128xf32>
    %c0_14 = arith.constant 0 : index
    %c0_15 = arith.constant 0 : index
    %c0_16 = arith.constant 0 : index
    %16 = vector.load %arg8[%c0_14, %c0_15, %c0_16] : memref<10x10x128xf32, #tpu.memory_space<vmem>>, vector<8x8x128xf32>
    %17 = vector.shape_cast %16 : vector<8x8x128xf32> to vector<64x128xf32>
    %c0_17 = arith.constant 0 : index
    %c0_18 = arith.constant 0 : index
    %c0_19 = arith.constant 0 : index
    %18 = vector.load %arg4[%c0_17, %c0_18, %c0_19] : memref<9x128x128xf32, #tpu.memory_space<vmem>>, vector<1x128x128xf32>
    %19 = vector.shape_cast %18 : vector<1x128x128xf32> to vector<128x128xf32>
    %cst_20 = arith.constant dense<0.000000e+00> : vector<64x128xf32>
    %20 = tpu.matmul %17, %19, %cst_20 {dimension_numbers = #tpu.dot_dimension_numbers<[1], [0], [0], [1], [0, 0, 1, 1], [], []>} : vector<64x128xf32>, vector<128x128xf32>, vector<64x128xf32> -> vector<64x128xf32>
    %21 = arith.addf %15, %20 : vector<64x128xf32>
    %c0_21 = arith.constant 0 : index
    %c1_22 = arith.constant 1 : index
    %c0_23 = arith.constant 0 : index
    %22 = vector.load %arg8[%c0_21, %c1_22, %c0_23] : memref<10x10x128xf32, #tpu.memory_space<vmem>>, vector<8x8x128xf32>
    %23 = vector.shape_cast %22 : vector<8x8x128xf32> to vector<64x128xf32>
    %c1_24 = arith.constant 1 : index
    %c0_25 = arith.constant 0 : index
    %c0_26 = arith.constant 0 : index
    %24 = vector.load %arg4[%c1_24, %c0_25, %c0_26] : memref<9x128x128xf32, #tpu.memory_space<vmem>>, vector<1x128x128xf32>
    %25 = vector.shape_cast %24 : vector<1x128x128xf32> to vector<128x128xf32>
    %cst_27 = arith.constant dense<0.000000e+00> : vector<64x128xf32>
    %26 = tpu.matmul %23, %25, %cst_27 {dimension_numbers = #tpu.dot_dimension_numbers<[1], [0], [0], [1], [0, 0, 1, 1], [], []>} : vector<64x128xf32>, vector<128x128xf32>, vector<64x128xf32> -> vector<64x128xf32>
    %27 = arith.addf %21, %26 : vector<64x128xf32>
    %c0_28 = arith.constant 0 : index
    %c2 = arith.constant 2 : index
    %c0_29 = arith.constant 0 : index
    %28 = vector.load %arg8[%c0_28, %c2, %c0_29] : memref<10x10x128xf32, #tpu.memory_space<vmem>>, vector<8x8x128xf32>
    %29 = vector.shape_cast %28 : vector<8x8x128xf32> to vector<64x128xf32>
    %c2_30 = arith.constant 2 : index
    %c0_31 = arith.constant 0 : index
    %c0_32 = arith.constant 0 : index
    %30 = vector.load %arg4[%c2_30, %c0_31, %c0_32] : memref<9x128x128xf32, #tpu.memory_space<vmem>>, vector<1x128x128xf32>
    %31 = vector.shape_cast %30 : vector<1x128x128xf32> to vector<128x128xf32>
    %cst_33 = arith.constant dense<0.000000e+00> : vector<64x128xf32>
    %32 = tpu.matmul %29, %31, %cst_33 {dimension_numbers = #tpu.dot_dimension_numbers<[1], [0], [0], [1], [0, 0, 1, 1], [], []>} : vector<64x128xf32>, vector<128x128xf32>, vector<64x128xf32> -> vector<64x128xf32>
    %33 = arith.addf %27, %32 : vector<64x128xf32>
    %c1_34 = arith.constant 1 : index
    %c0_35 = arith.constant 0 : index
    %c0_36 = arith.constant 0 : index
    %34 = vector.load %arg8[%c1_34, %c0_35, %c0_36] : memref<10x10x128xf32, #tpu.memory_space<vmem>>, vector<8x8x128xf32>
    %35 = vector.shape_cast %34 : vector<8x8x128xf32> to vector<64x128xf32>
    %c3 = arith.constant 3 : index
    %c0_37 = arith.constant 0 : index
    %c0_38 = arith.constant 0 : index
    %36 = vector.load %arg4[%c3, %c0_37, %c0_38] : memref<9x128x128xf32, #tpu.memory_space<vmem>>, vector<1x128x128xf32>
    %37 = vector.shape_cast %36 : vector<1x128x128xf32> to vector<128x128xf32>
    %cst_39 = arith.constant dense<0.000000e+00> : vector<64x128xf32>
    %38 = tpu.matmul %35, %37, %cst_39 {dimension_numbers = #tpu.dot_dimension_numbers<[1], [0], [0], [1], [0, 0, 1, 1], [], []>} : vector<64x128xf32>, vector<128x128xf32>, vector<64x128xf32> -> vector<64x128xf32>
    %39 = arith.addf %33, %38 : vector<64x128xf32>
    %c1_40 = arith.constant 1 : index
    %c1_41 = arith.constant 1 : index
    %c0_42 = arith.constant 0 : index
    %40 = vector.load %arg8[%c1_40, %c1_41, %c0_42] : memref<10x10x128xf32, #tpu.memory_space<vmem>>, vector<8x8x128xf32>
    %41 = vector.shape_cast %40 : vector<8x8x128xf32> to vector<64x128xf32>
    %c4 = arith.constant 4 : index
    %c0_43 = arith.constant 0 : index
    %c0_44 = arith.constant 0 : index
    %42 = vector.load %arg4[%c4, %c0_43, %c0_44] : memref<9x128x128xf32, #tpu.memory_space<vmem>>, vector<1x128x128xf32>
    %43 = vector.shape_cast %42 : vector<1x128x128xf32> to vector<128x128xf32>
    %cst_45 = arith.constant dense<0.000000e+00> : vector<64x128xf32>
    %44 = tpu.matmul %41, %43, %cst_45 {dimension_numbers = #tpu.dot_dimension_numbers<[1], [0], [0], [1], [0, 0, 1, 1], [], []>} : vector<64x128xf32>, vector<128x128xf32>, vector<64x128xf32> -> vector<64x128xf32>
    %45 = arith.addf %39, %44 : vector<64x128xf32>
    %c1_46 = arith.constant 1 : index
    %c2_47 = arith.constant 2 : index
    %c0_48 = arith.constant 0 : index
    %46 = vector.load %arg8[%c1_46, %c2_47, %c0_48] : memref<10x10x128xf32, #tpu.memory_space<vmem>>, vector<8x8x128xf32>
    %47 = vector.shape_cast %46 : vector<8x8x128xf32> to vector<64x128xf32>
    %c5 = arith.constant 5 : index
    %c0_49 = arith.constant 0 : index
    %c0_50 = arith.constant 0 : index
    %48 = vector.load %arg4[%c5, %c0_49, %c0_50] : memref<9x128x128xf32, #tpu.memory_space<vmem>>, vector<1x128x128xf32>
    %49 = vector.shape_cast %48 : vector<1x128x128xf32> to vector<128x128xf32>
    %cst_51 = arith.constant dense<0.000000e+00> : vector<64x128xf32>
    %50 = tpu.matmul %47, %49, %cst_51 {dimension_numbers = #tpu.dot_dimension_numbers<[1], [0], [0], [1], [0, 0, 1, 1], [], []>} : vector<64x128xf32>, vector<128x128xf32>, vector<64x128xf32> -> vector<64x128xf32>
    %51 = arith.addf %45, %50 : vector<64x128xf32>
    %c2_52 = arith.constant 2 : index
    %c0_53 = arith.constant 0 : index
    %c0_54 = arith.constant 0 : index
    %52 = vector.load %arg8[%c2_52, %c0_53, %c0_54] : memref<10x10x128xf32, #tpu.memory_space<vmem>>, vector<8x8x128xf32>
    %53 = vector.shape_cast %52 : vector<8x8x128xf32> to vector<64x128xf32>
    %c6 = arith.constant 6 : index
    %c0_55 = arith.constant 0 : index
    %c0_56 = arith.constant 0 : index
    %54 = vector.load %arg4[%c6, %c0_55, %c0_56] : memref<9x128x128xf32, #tpu.memory_space<vmem>>, vector<1x128x128xf32>
    %55 = vector.shape_cast %54 : vector<1x128x128xf32> to vector<128x128xf32>
    %cst_57 = arith.constant dense<0.000000e+00> : vector<64x128xf32>
    %56 = tpu.matmul %53, %55, %cst_57 {dimension_numbers = #tpu.dot_dimension_numbers<[1], [0], [0], [1], [0, 0, 1, 1], [], []>} : vector<64x128xf32>, vector<128x128xf32>, vector<64x128xf32> -> vector<64x128xf32>
    %57 = arith.addf %51, %56 : vector<64x128xf32>
    %c2_58 = arith.constant 2 : index
    %c1_59 = arith.constant 1 : index
    %c0_60 = arith.constant 0 : index
    %58 = vector.load %arg8[%c2_58, %c1_59, %c0_60] : memref<10x10x128xf32, #tpu.memory_space<vmem>>, vector<8x8x128xf32>
    %59 = vector.shape_cast %58 : vector<8x8x128xf32> to vector<64x128xf32>
    %c7 = arith.constant 7 : index
    %c0_61 = arith.constant 0 : index
    %c0_62 = arith.constant 0 : index
    %60 = vector.load %arg4[%c7, %c0_61, %c0_62] : memref<9x128x128xf32, #tpu.memory_space<vmem>>, vector<1x128x128xf32>
    %61 = vector.shape_cast %60 : vector<1x128x128xf32> to vector<128x128xf32>
    %cst_63 = arith.constant dense<0.000000e+00> : vector<64x128xf32>
    %62 = tpu.matmul %59, %61, %cst_63 {dimension_numbers = #tpu.dot_dimension_numbers<[1], [0], [0], [1], [0, 0, 1, 1], [], []>} : vector<64x128xf32>, vector<128x128xf32>, vector<64x128xf32> -> vector<64x128xf32>
    %63 = arith.addf %57, %62 : vector<64x128xf32>
    %c2_64 = arith.constant 2 : index
    %c2_65 = arith.constant 2 : index
    %c0_66 = arith.constant 0 : index
    %64 = vector.load %arg8[%c2_64, %c2_65, %c0_66] : memref<10x10x128xf32, #tpu.memory_space<vmem>>, vector<8x8x128xf32>
    %65 = vector.shape_cast %64 : vector<8x8x128xf32> to vector<64x128xf32>
    %c8 = arith.constant 8 : index
    %c0_67 = arith.constant 0 : index
    %c0_68 = arith.constant 0 : index
    %66 = vector.load %arg4[%c8, %c0_67, %c0_68] : memref<9x128x128xf32, #tpu.memory_space<vmem>>, vector<1x128x128xf32>
    %67 = vector.shape_cast %66 : vector<1x128x128xf32> to vector<128x128xf32>
    %cst_69 = arith.constant dense<0.000000e+00> : vector<64x128xf32>
    %68 = tpu.matmul %65, %67, %cst_69 {dimension_numbers = #tpu.dot_dimension_numbers<[1], [0], [0], [1], [0, 0, 1, 1], [], []>} : vector<64x128xf32>, vector<128x128xf32>, vector<64x128xf32> -> vector<64x128xf32>
    %69 = arith.addf %63, %68 : vector<64x128xf32>
    %70 = vector.shape_cast %69 : vector<64x128xf32> to vector<8x8x128xf32>
    %c0_70 = arith.constant 0 : index
    %c0_71 = arith.constant 0 : index
    %c0_72 = arith.constant 0 : index
    %c0_73 = arith.constant 0 : index
    %71 = vector.load %arg5[%c0_70, %c0_71, %c0_72, %c0_73] : memref<1x8x8x128xf32, #tpu.memory_space<vmem>>, vector<1x8x8x128xf32>
    %72 = vector.shape_cast %71 : vector<1x8x8x128xf32> to vector<8x8x128xf32>
    %73 = vector.shape_cast %70 : vector<8x8x128xf32> to vector<1x8x8x128xf32>
    tpu.vector_store %arg5[%c0_70, %c0_71, %c0_72, %c0_73], %73 {strides = array<i32>} : memref<1x8x8x128xf32, #tpu.memory_space<vmem>>, vector<1x8x8x128xf32>,
    %cst_74 = arith.constant dense<0.000000e+00> : vector<128xf32>
    %74 = vector.multi_reduction <add>, %69, %cst_74 [0] : vector<64x128xf32> to vector<128xf32>
    %75 = vector.shape_cast %74 : vector<128xf32> to vector<1x128xf32>
    %c0_75 = arith.constant 0 : index
    %c0_76 = arith.constant 0 : index
    %c0_77 = arith.constant 0 : index
    %76 = vector.load %arg6[%c0_75, %c0_76, %c0_77] : memref<1x1x128xf32, #tpu.memory_space<vmem>>, vector<1x1x128xf32>
    %77 = vector.shape_cast %76 : vector<1x1x128xf32> to vector<1x128xf32>
    %78 = vector.shape_cast %75 : vector<1x128xf32> to vector<1x1x128xf32>
    tpu.vector_store %arg6[%c0_75, %c0_76, %c0_77], %78 {strides = array<i32>} : memref<1x1x128xf32, #tpu.memory_space<vmem>>, vector<1x1x128xf32>,
    %79 = arith.mulf %69, %69 : vector<64x128xf32>
    %cst_78 = arith.constant dense<0.000000e+00> : vector<128xf32>
    %80 = vector.multi_reduction <add>, %79, %cst_78 [0] : vector<64x128xf32> to vector<128xf32>
    %81 = vector.shape_cast %80 : vector<128xf32> to vector<1x128xf32>
    %c0_79 = arith.constant 0 : index
    %c0_80 = arith.constant 0 : index
    %c0_81 = arith.constant 0 : index
    %82 = vector.load %arg7[%c0_79, %c0_80, %c0_81] : memref<1x1x128xf32, #tpu.memory_space<vmem>>, vector<1x1x128xf32>
    %83 = vector.shape_cast %82 : vector<1x1x128xf32> to vector<1x128xf32>
    %84 = vector.shape_cast %81 : vector<1x128xf32> to vector<1x1x128xf32>
    tpu.vector_store %arg7[%c0_79, %c0_80, %c0_81], %84 {strides = array<i32>} : memref<1x1x128xf32, #tpu.memory_space<vmem>>, vector<1x1x128xf32>,
    return
  }
  func.func @transform_0(%arg0: i32) -> (i32, i32, i32, i32) {
    %c0_i32 = arith.constant 0 : i32
    %c0_i32_0 = arith.constant 0 : i32
    %c0_i32_1 = arith.constant 0 : i32
    %c0_i32_2 = arith.constant 0 : i32
    return %arg0, %c0_i32, %c0_i32_0, %c0_i32_1 : i32, i32, i32, i32
  }
  func.func @transform_1(%arg0: i32) -> (i32, i32) {
    %c0_i32 = arith.constant 0 : i32
    %c0_i32_0 = arith.constant 0 : i32
    %c0_i32_1 = arith.constant 0 : i32
    return %c0_i32, %c0_i32_0 : i32, i32
  }
  func.func @transform_2(%arg0: i32) -> (i32, i32) {
    %c0_i32 = arith.constant 0 : i32
    %c0_i32_0 = arith.constant 0 : i32
    %c0_i32_1 = arith.constant 0 : i32
    return %c0_i32, %c0_i32_0 : i32, i32
  }
  func.func @transform_3(%arg0: i32) -> (i32, i32, i32) {
    %c0_i32 = arith.constant 0 : i32
    %c0_i32_0 = arith.constant 0 : i32
    %c0_i32_1 = arith.constant 0 : i32
    %c0_i32_2 = arith.constant 0 : i32
    return %c0_i32, %c0_i32_0, %c0_i32_1 : i32, i32, i32
  }
  func.func @transform_4(%arg0: i32) -> (i32, i32, i32, i32) {
    %c0_i32 = arith.constant 0 : i32
    %c0_i32_0 = arith.constant 0 : i32
    %c0_i32_1 = arith.constant 0 : i32
    %c0_i32_2 = arith.constant 0 : i32
    return %arg0, %c0_i32, %c0_i32_0, %c0_i32_1 : i32, i32, i32, i32
  }
  func.func @transform_5(%arg0: i32) -> (i32, i32, i32) {
    %c0_i32 = arith.constant 0 : i32
    %c0_i32_0 = arith.constant 0 : i32
    %c0_i32_1 = arith.constant 0 : i32
    return %arg0, %c0_i32, %c0_i32_0 : i32, i32, i32
  }
  func.func @transform_6(%arg0: i32) -> (i32, i32, i32) {
    %c0_i32 = arith.constant 0 : i32
    %c0_i32_0 = arith.constant 0 : i32
    %c0_i32_1 = arith.constant 0 : i32
    return %arg0, %c0_i32, %c0_i32_0 : i32, i32, i32
  }
}

module attributes {stable_mosaic.version = 11 : i64} {
  func.func @_stage1_kernel(%arg0: i32, %arg1: memref<1x4x9x9x128xf32, #tpu.memory_space<vmem>>, %arg2: memref<9x128x128xf32, #tpu.memory_space<vmem>>, %arg3: memref<128x128xf32, #tpu.memory_space<vmem>>, %arg4: memref<1x8x8x128xf32, #tpu.memory_space<vmem>>, %arg5: memref<1x8x8x128xf32, #tpu.memory_space<vmem>>, %arg6: memref<1x1x128xf32, #tpu.memory_space<vmem>>, %arg7: memref<1x1x128xf32, #tpu.memory_space<vmem>>, %arg8: memref<1x1x128xf32, #tpu.memory_space<vmem>>, %arg9: memref<1x1x128xf32, #tpu.memory_space<vmem>>) attributes {dimension_semantics = [#tpu.dimension_semantics<parallel>], iteration_bounds = array<i64: 2>, scalar_prefetch = 0 : i64, scratch_operands = 0 : i64, tpu.core_type = #tpu.core_type<tc>, window_params = [{transform_indices = @transform_0, window_bounds = array<i64: 1, 4, 9, 9, 128>}, {pipeline_mode = #tpu.pipeline_mode<synchronous>, transform_indices = @transform_1, window_bounds = array<i64: 9, 128, 128>}, {pipeline_mode = #tpu.pipeline_mode<synchronous>, transform_indices = @transform_2, window_bounds = array<i64: 128, 128>}, {transform_indices = @transform_3, window_bounds = array<i64: 1, 8, 8, 128>}, {transform_indices = @transform_4, window_bounds = array<i64: 1, 8, 8, 128>}, {transform_indices = @transform_5, window_bounds = array<i64: 1, 1, 128>}, {transform_indices = @transform_6, window_bounds = array<i64: 1, 1, 128>}, {transform_indices = @transform_7, window_bounds = array<i64: 1, 1, 128>}, {transform_indices = @transform_8, window_bounds = array<i64: 1, 1, 128>}]} {
    %cst = arith.constant 0.000000e+00 : f32
    %0 = vector.broadcast %cst : f32 to vector<64x128xf32>
    %c0 = arith.constant 0 : index
    %c0_0 = arith.constant 0 : index
    %c0_1 = arith.constant 0 : index
    %c0_2 = arith.constant 0 : index
    %c0_3 = arith.constant 0 : index
    %1 = vector.load %arg1[%c0, %c0_0, %c0_1, %c0_2, %c0_3] : memref<1x4x9x9x128xf32, #tpu.memory_space<vmem>>, vector<1x1x8x8x128xf32>
    %2 = vector.shape_cast %1 : vector<1x1x8x8x128xf32> to vector<8x8x128xf32>
    %3 = vector.shape_cast %2 : vector<8x8x128xf32> to vector<64x128xf32>
    %c0_4 = arith.constant 0 : index
    %c0_5 = arith.constant 0 : index
    %c0_6 = arith.constant 0 : index
    %4 = vector.load %arg2[%c0_4, %c0_5, %c0_6] : memref<9x128x128xf32, #tpu.memory_space<vmem>>, vector<1x128x128xf32>
    %5 = vector.shape_cast %4 : vector<1x128x128xf32> to vector<128x128xf32>
    %cst_7 = arith.constant dense<0.000000e+00> : vector<64x128xf32>
    %6 = tpu.matmul %3, %5, %cst_7 {dimension_numbers = #tpu.dot_dimension_numbers<[1], [0], [0], [1], [0, 0, 1, 1], [], []>} : vector<64x128xf32>, vector<128x128xf32>, vector<64x128xf32> -> vector<64x128xf32>
    %7 = arith.addf %0, %6 : vector<64x128xf32>
    %c0_8 = arith.constant 0 : index
    %c1 = arith.constant 1 : index
    %c0_9 = arith.constant 0 : index
    %c0_10 = arith.constant 0 : index
    %c0_11 = arith.constant 0 : index
    %8 = vector.load %arg1[%c0_8, %c1, %c0_9, %c0_10, %c0_11] : memref<1x4x9x9x128xf32, #tpu.memory_space<vmem>>, vector<1x1x8x8x128xf32>
    %9 = vector.shape_cast %8 : vector<1x1x8x8x128xf32> to vector<8x8x128xf32>
    %10 = vector.shape_cast %9 : vector<8x8x128xf32> to vector<64x128xf32>
    %c1_12 = arith.constant 1 : index
    %c0_13 = arith.constant 0 : index
    %c0_14 = arith.constant 0 : index
    %11 = vector.load %arg2[%c1_12, %c0_13, %c0_14] : memref<9x128x128xf32, #tpu.memory_space<vmem>>, vector<1x128x128xf32>
    %12 = vector.shape_cast %11 : vector<1x128x128xf32> to vector<128x128xf32>
    %cst_15 = arith.constant dense<0.000000e+00> : vector<64x128xf32>
    %13 = tpu.matmul %10, %12, %cst_15 {dimension_numbers = #tpu.dot_dimension_numbers<[1], [0], [0], [1], [0, 0, 1, 1], [], []>} : vector<64x128xf32>, vector<128x128xf32>, vector<64x128xf32> -> vector<64x128xf32>
    %14 = arith.addf %7, %13 : vector<64x128xf32>
    %c0_16 = arith.constant 0 : index
    %c0_17 = arith.constant 0 : index
    %c0_18 = arith.constant 0 : index
    %c1_19 = arith.constant 1 : index
    %c0_20 = arith.constant 0 : index
    %15 = vector.load %arg1[%c0_16, %c0_17, %c0_18, %c1_19, %c0_20] : memref<1x4x9x9x128xf32, #tpu.memory_space<vmem>>, vector<1x1x8x8x128xf32>
    %16 = vector.shape_cast %15 : vector<1x1x8x8x128xf32> to vector<8x8x128xf32>
    %17 = vector.shape_cast %16 : vector<8x8x128xf32> to vector<64x128xf32>
    %c2 = arith.constant 2 : index
    %c0_21 = arith.constant 0 : index
    %c0_22 = arith.constant 0 : index
    %18 = vector.load %arg2[%c2, %c0_21, %c0_22] : memref<9x128x128xf32, #tpu.memory_space<vmem>>, vector<1x128x128xf32>
    %19 = vector.shape_cast %18 : vector<1x128x128xf32> to vector<128x128xf32>
    %cst_23 = arith.constant dense<0.000000e+00> : vector<64x128xf32>
    %20 = tpu.matmul %17, %19, %cst_23 {dimension_numbers = #tpu.dot_dimension_numbers<[1], [0], [0], [1], [0, 0, 1, 1], [], []>} : vector<64x128xf32>, vector<128x128xf32>, vector<64x128xf32> -> vector<64x128xf32>
    %21 = arith.addf %14, %20 : vector<64x128xf32>
    %c0_24 = arith.constant 0 : index
    %c2_25 = arith.constant 2 : index
    %c0_26 = arith.constant 0 : index
    %c0_27 = arith.constant 0 : index
    %c0_28 = arith.constant 0 : index
    %22 = vector.load %arg1[%c0_24, %c2_25, %c0_26, %c0_27, %c0_28] : memref<1x4x9x9x128xf32, #tpu.memory_space<vmem>>, vector<1x1x8x8x128xf32>
    %23 = vector.shape_cast %22 : vector<1x1x8x8x128xf32> to vector<8x8x128xf32>
    %24 = vector.shape_cast %23 : vector<8x8x128xf32> to vector<64x128xf32>
    %c3 = arith.constant 3 : index
    %c0_29 = arith.constant 0 : index
    %c0_30 = arith.constant 0 : index
    %25 = vector.load %arg2[%c3, %c0_29, %c0_30] : memref<9x128x128xf32, #tpu.memory_space<vmem>>, vector<1x128x128xf32>
    %26 = vector.shape_cast %25 : vector<1x128x128xf32> to vector<128x128xf32>
    %cst_31 = arith.constant dense<0.000000e+00> : vector<64x128xf32>
    %27 = tpu.matmul %24, %26, %cst_31 {dimension_numbers = #tpu.dot_dimension_numbers<[1], [0], [0], [1], [0, 0, 1, 1], [], []>} : vector<64x128xf32>, vector<128x128xf32>, vector<64x128xf32> -> vector<64x128xf32>
    %28 = arith.addf %21, %27 : vector<64x128xf32>
    %c0_32 = arith.constant 0 : index
    %c3_33 = arith.constant 3 : index
    %c0_34 = arith.constant 0 : index
    %c0_35 = arith.constant 0 : index
    %c0_36 = arith.constant 0 : index
    %29 = vector.load %arg1[%c0_32, %c3_33, %c0_34, %c0_35, %c0_36] : memref<1x4x9x9x128xf32, #tpu.memory_space<vmem>>, vector<1x1x8x8x128xf32>
    %30 = vector.shape_cast %29 : vector<1x1x8x8x128xf32> to vector<8x8x128xf32>
    %31 = vector.shape_cast %30 : vector<8x8x128xf32> to vector<64x128xf32>
    %c4 = arith.constant 4 : index
    %c0_37 = arith.constant 0 : index
    %c0_38 = arith.constant 0 : index
    %32 = vector.load %arg2[%c4, %c0_37, %c0_38] : memref<9x128x128xf32, #tpu.memory_space<vmem>>, vector<1x128x128xf32>
    %33 = vector.shape_cast %32 : vector<1x128x128xf32> to vector<128x128xf32>
    %cst_39 = arith.constant dense<0.000000e+00> : vector<64x128xf32>
    %34 = tpu.matmul %31, %33, %cst_39 {dimension_numbers = #tpu.dot_dimension_numbers<[1], [0], [0], [1], [0, 0, 1, 1], [], []>} : vector<64x128xf32>, vector<128x128xf32>, vector<64x128xf32> -> vector<64x128xf32>
    %35 = arith.addf %28, %34 : vector<64x128xf32>
    %c0_40 = arith.constant 0 : index
    %c0_41 = arith.constant 0 : index
    %36 = vector.load %arg3[%c0_40, %c0_41] : memref<128x128xf32, #tpu.memory_space<vmem>>, vector<128x128xf32>
    %cst_42 = arith.constant dense<0.000000e+00> : vector<64x128xf32>
    %37 = tpu.matmul %31, %36, %cst_42 {dimension_numbers = #tpu.dot_dimension_numbers<[1], [0], [0], [1], [0, 0, 1, 1], [], []>} : vector<64x128xf32>, vector<128x128xf32>, vector<64x128xf32> -> vector<64x128xf32>
    %c0_43 = arith.constant 0 : index
    %c2_44 = arith.constant 2 : index
    %c0_45 = arith.constant 0 : index
    %c1_46 = arith.constant 1 : index
    %c0_47 = arith.constant 0 : index
    %38 = vector.load %arg1[%c0_43, %c2_44, %c0_45, %c1_46, %c0_47] : memref<1x4x9x9x128xf32, #tpu.memory_space<vmem>>, vector<1x1x8x8x128xf32>
    %39 = vector.shape_cast %38 : vector<1x1x8x8x128xf32> to vector<8x8x128xf32>
    %40 = vector.shape_cast %39 : vector<8x8x128xf32> to vector<64x128xf32>
    %c5 = arith.constant 5 : index
    %c0_48 = arith.constant 0 : index
    %c0_49 = arith.constant 0 : index
    %41 = vector.load %arg2[%c5, %c0_48, %c0_49] : memref<9x128x128xf32, #tpu.memory_space<vmem>>, vector<1x128x128xf32>
    %42 = vector.shape_cast %41 : vector<1x128x128xf32> to vector<128x128xf32>
    %cst_50 = arith.constant dense<0.000000e+00> : vector<64x128xf32>
    %43 = tpu.matmul %40, %42, %cst_50 {dimension_numbers = #tpu.dot_dimension_numbers<[1], [0], [0], [1], [0, 0, 1, 1], [], []>} : vector<64x128xf32>, vector<128x128xf32>, vector<64x128xf32> -> vector<64x128xf32>
    %44 = arith.addf %35, %43 : vector<64x128xf32>
    %c0_51 = arith.constant 0 : index
    %c0_52 = arith.constant 0 : index
    %c1_53 = arith.constant 1 : index
    %c0_54 = arith.constant 0 : index
    %c0_55 = arith.constant 0 : index
    %45 = vector.load %arg1[%c0_51, %c0_52, %c1_53, %c0_54, %c0_55] : memref<1x4x9x9x128xf32, #tpu.memory_space<vmem>>, vector<1x1x8x8x128xf32>
    %46 = vector.shape_cast %45 : vector<1x1x8x8x128xf32> to vector<8x8x128xf32>
    %47 = vector.shape_cast %46 : vector<8x8x128xf32> to vector<64x128xf32>
    %c6 = arith.constant 6 : index
    %c0_56 = arith.constant 0 : index
    %c0_57 = arith.constant 0 : index
    %48 = vector.load %arg2[%c6, %c0_56, %c0_57] : memref<9x128x128xf32, #tpu.memory_space<vmem>>, vector<1x128x128xf32>
    %49 = vector.shape_cast %48 : vector<1x128x128xf32> to vector<128x128xf32>
    %cst_58 = arith.constant dense<0.000000e+00> : vector<64x128xf32>
    %50 = tpu.matmul %47, %49, %cst_58 {dimension_numbers = #tpu.dot_dimension_numbers<[1], [0], [0], [1], [0, 0, 1, 1], [], []>} : vector<64x128xf32>, vector<128x128xf32>, vector<64x128xf32> -> vector<64x128xf32>
    %51 = arith.addf %44, %50 : vector<64x128xf32>
    %c0_59 = arith.constant 0 : index
    %c1_60 = arith.constant 1 : index
    %c1_61 = arith.constant 1 : index
    %c0_62 = arith.constant 0 : index
    %c0_63 = arith.constant 0 : index
    %52 = vector.load %arg1[%c0_59, %c1_60, %c1_61, %c0_62, %c0_63] : memref<1x4x9x9x128xf32, #tpu.memory_space<vmem>>, vector<1x1x8x8x128xf32>
    %53 = vector.shape_cast %52 : vector<1x1x8x8x128xf32> to vector<8x8x128xf32>
    %54 = vector.shape_cast %53 : vector<8x8x128xf32> to vector<64x128xf32>
    %c7 = arith.constant 7 : index
    %c0_64 = arith.constant 0 : index
    %c0_65 = arith.constant 0 : index
    %55 = vector.load %arg2[%c7, %c0_64, %c0_65] : memref<9x128x128xf32, #tpu.memory_space<vmem>>, vector<1x128x128xf32>
    %56 = vector.shape_cast %55 : vector<1x128x128xf32> to vector<128x128xf32>
    %cst_66 = arith.constant dense<0.000000e+00> : vector<64x128xf32>
    %57 = tpu.matmul %54, %56, %cst_66 {dimension_numbers = #tpu.dot_dimension_numbers<[1], [0], [0], [1], [0, 0, 1, 1], [], []>} : vector<64x128xf32>, vector<128x128xf32>, vector<64x128xf32> -> vector<64x128xf32>
    %58 = arith.addf %51, %57 : vector<64x128xf32>
    %c0_67 = arith.constant 0 : index
    %c0_68 = arith.constant 0 : index
    %c1_69 = arith.constant 1 : index
    %c1_70 = arith.constant 1 : index
    %c0_71 = arith.constant 0 : index
    %59 = vector.load %arg1[%c0_67, %c0_68, %c1_69, %c1_70, %c0_71] : memref<1x4x9x9x128xf32, #tpu.memory_space<vmem>>, vector<1x1x8x8x128xf32>
    %60 = vector.shape_cast %59 : vector<1x1x8x8x128xf32> to vector<8x8x128xf32>
    %61 = vector.shape_cast %60 : vector<8x8x128xf32> to vector<64x128xf32>
    %c8 = arith.constant 8 : index
    %c0_72 = arith.constant 0 : index
    %c0_73 = arith.constant 0 : index
    %62 = vector.load %arg2[%c8, %c0_72, %c0_73] : memref<9x128x128xf32, #tpu.memory_space<vmem>>, vector<1x128x128xf32>
    %63 = vector.shape_cast %62 : vector<1x128x128xf32> to vector<128x128xf32>
    %cst_74 = arith.constant dense<0.000000e+00> : vector<64x128xf32>
    %64 = tpu.matmul %61, %63, %cst_74 {dimension_numbers = #tpu.dot_dimension_numbers<[1], [0], [0], [1], [0, 0, 1, 1], [], []>} : vector<64x128xf32>, vector<128x128xf32>, vector<64x128xf32> -> vector<64x128xf32>
    %65 = arith.addf %58, %64 : vector<64x128xf32>
    %66 = vector.shape_cast %65 : vector<64x128xf32> to vector<8x8x128xf32>
    %c0_75 = arith.constant 0 : index
    %c0_76 = arith.constant 0 : index
    %c0_77 = arith.constant 0 : index
    %c0_78 = arith.constant 0 : index
    %67 = vector.load %arg4[%c0_75, %c0_76, %c0_77, %c0_78] : memref<1x8x8x128xf32, #tpu.memory_space<vmem>>, vector<1x8x8x128xf32>
    %68 = vector.shape_cast %67 : vector<1x8x8x128xf32> to vector<8x8x128xf32>
    %69 = vector.shape_cast %66 : vector<8x8x128xf32> to vector<1x8x8x128xf32>
    tpu.vector_store %arg4[%c0_75, %c0_76, %c0_77, %c0_78], %69 {strides = array<i32>} : memref<1x8x8x128xf32, #tpu.memory_space<vmem>>, vector<1x8x8x128xf32>,
    %70 = vector.shape_cast %37 : vector<64x128xf32> to vector<8x8x128xf32>
    %c0_79 = arith.constant 0 : index
    %c0_80 = arith.constant 0 : index
    %c0_81 = arith.constant 0 : index
    %c0_82 = arith.constant 0 : index
    %71 = vector.load %arg5[%c0_79, %c0_80, %c0_81, %c0_82] : memref<1x8x8x128xf32, #tpu.memory_space<vmem>>, vector<1x8x8x128xf32>
    %72 = vector.shape_cast %71 : vector<1x8x8x128xf32> to vector<8x8x128xf32>
    %73 = vector.shape_cast %70 : vector<8x8x128xf32> to vector<1x8x8x128xf32>
    tpu.vector_store %arg5[%c0_79, %c0_80, %c0_81, %c0_82], %73 {strides = array<i32>} : memref<1x8x8x128xf32, #tpu.memory_space<vmem>>, vector<1x8x8x128xf32>,
    %cst_83 = arith.constant dense<0.000000e+00> : vector<128xf32>
    %74 = vector.multi_reduction <add>, %65, %cst_83 [0] : vector<64x128xf32> to vector<128xf32>
    %75 = vector.shape_cast %74 : vector<128xf32> to vector<1x128xf32>
    %c0_84 = arith.constant 0 : index
    %c0_85 = arith.constant 0 : index
    %c0_86 = arith.constant 0 : index
    %76 = vector.load %arg6[%c0_84, %c0_85, %c0_86] : memref<1x1x128xf32, #tpu.memory_space<vmem>>, vector<1x1x128xf32>
    %77 = vector.shape_cast %76 : vector<1x1x128xf32> to vector<1x128xf32>
    %78 = vector.shape_cast %75 : vector<1x128xf32> to vector<1x1x128xf32>
    tpu.vector_store %arg6[%c0_84, %c0_85, %c0_86], %78 {strides = array<i32>} : memref<1x1x128xf32, #tpu.memory_space<vmem>>, vector<1x1x128xf32>,
    %79 = arith.mulf %65, %65 : vector<64x128xf32>
    %cst_87 = arith.constant dense<0.000000e+00> : vector<128xf32>
    %80 = vector.multi_reduction <add>, %79, %cst_87 [0] : vector<64x128xf32> to vector<128xf32>
    %81 = vector.shape_cast %80 : vector<128xf32> to vector<1x128xf32>
    %c0_88 = arith.constant 0 : index
    %c0_89 = arith.constant 0 : index
    %c0_90 = arith.constant 0 : index
    %82 = vector.load %arg7[%c0_88, %c0_89, %c0_90] : memref<1x1x128xf32, #tpu.memory_space<vmem>>, vector<1x1x128xf32>
    %83 = vector.shape_cast %82 : vector<1x1x128xf32> to vector<1x128xf32>
    %84 = vector.shape_cast %81 : vector<1x128xf32> to vector<1x1x128xf32>
    tpu.vector_store %arg7[%c0_88, %c0_89, %c0_90], %84 {strides = array<i32>} : memref<1x1x128xf32, #tpu.memory_space<vmem>>, vector<1x1x128xf32>,
    %cst_91 = arith.constant dense<0.000000e+00> : vector<128xf32>
    %85 = vector.multi_reduction <add>, %37, %cst_91 [0] : vector<64x128xf32> to vector<128xf32>
    %86 = vector.shape_cast %85 : vector<128xf32> to vector<1x128xf32>
    %c0_92 = arith.constant 0 : index
    %c0_93 = arith.constant 0 : index
    %c0_94 = arith.constant 0 : index
    %87 = vector.load %arg8[%c0_92, %c0_93, %c0_94] : memref<1x1x128xf32, #tpu.memory_space<vmem>>, vector<1x1x128xf32>
    %88 = vector.shape_cast %87 : vector<1x1x128xf32> to vector<1x128xf32>
    %89 = vector.shape_cast %86 : vector<1x128xf32> to vector<1x1x128xf32>
    tpu.vector_store %arg8[%c0_92, %c0_93, %c0_94], %89 {strides = array<i32>} : memref<1x1x128xf32, #tpu.memory_space<vmem>>, vector<1x1x128xf32>,
    %90 = arith.mulf %37, %37 : vector<64x128xf32>
    %cst_95 = arith.constant dense<0.000000e+00> : vector<128xf32>
    %91 = vector.multi_reduction <add>, %90, %cst_95 [0] : vector<64x128xf32> to vector<128xf32>
    %92 = vector.shape_cast %91 : vector<128xf32> to vector<1x128xf32>
    %c0_96 = arith.constant 0 : index
    %c0_97 = arith.constant 0 : index
    %c0_98 = arith.constant 0 : index
    %93 = vector.load %arg9[%c0_96, %c0_97, %c0_98] : memref<1x1x128xf32, #tpu.memory_space<vmem>>, vector<1x1x128xf32>
    %94 = vector.shape_cast %93 : vector<1x1x128xf32> to vector<1x128xf32>
    %95 = vector.shape_cast %92 : vector<1x128xf32> to vector<1x1x128xf32>
    tpu.vector_store %arg9[%c0_96, %c0_97, %c0_98], %95 {strides = array<i32>} : memref<1x1x128xf32, #tpu.memory_space<vmem>>, vector<1x1x128xf32>,
    return
  }
  func.func @transform_0(%arg0: i32) -> (i32, i32, i32, i32, i32) {
    %c0_i32 = arith.constant 0 : i32
    %c0_i32_0 = arith.constant 0 : i32
    %c0_i32_1 = arith.constant 0 : i32
    %c0_i32_2 = arith.constant 0 : i32
    %c0_i32_3 = arith.constant 0 : i32
    return %arg0, %c0_i32, %c0_i32_0, %c0_i32_1, %c0_i32_2 : i32, i32, i32, i32, i32
  }
  func.func @transform_1(%arg0: i32) -> (i32, i32, i32) {
    %c0_i32 = arith.constant 0 : i32
    %c0_i32_0 = arith.constant 0 : i32
    %c0_i32_1 = arith.constant 0 : i32
    %c0_i32_2 = arith.constant 0 : i32
    return %c0_i32, %c0_i32_0, %c0_i32_1 : i32, i32, i32
  }
  func.func @transform_2(%arg0: i32) -> (i32, i32) {
    %c0_i32 = arith.constant 0 : i32
    %c0_i32_0 = arith.constant 0 : i32
    %c0_i32_1 = arith.constant 0 : i32
    return %c0_i32, %c0_i32_0 : i32, i32
  }
  func.func @transform_3(%arg0: i32) -> (i32, i32, i32, i32) {
    %c0_i32 = arith.constant 0 : i32
    %c0_i32_0 = arith.constant 0 : i32
    %c0_i32_1 = arith.constant 0 : i32
    %c0_i32_2 = arith.constant 0 : i32
    return %arg0, %c0_i32, %c0_i32_0, %c0_i32_1 : i32, i32, i32, i32
  }
  func.func @transform_4(%arg0: i32) -> (i32, i32, i32, i32) {
    %c0_i32 = arith.constant 0 : i32
    %c0_i32_0 = arith.constant 0 : i32
    %c0_i32_1 = arith.constant 0 : i32
    %c0_i32_2 = arith.constant 0 : i32
    return %arg0, %c0_i32, %c0_i32_0, %c0_i32_1 : i32, i32, i32, i32
  }
  func.func @transform_5(%arg0: i32) -> (i32, i32, i32) {
    %c0_i32 = arith.constant 0 : i32
    %c0_i32_0 = arith.constant 0 : i32
    %c0_i32_1 = arith.constant 0 : i32
    return %arg0, %c0_i32, %c0_i32_0 : i32, i32, i32
  }
  func.func @transform_6(%arg0: i32) -> (i32, i32, i32) {
    %c0_i32 = arith.constant 0 : i32
    %c0_i32_0 = arith.constant 0 : i32
    %c0_i32_1 = arith.constant 0 : i32
    return %arg0, %c0_i32, %c0_i32_0 : i32, i32, i32
  }
  func.func @transform_7(%arg0: i32) -> (i32, i32, i32) {
    %c0_i32 = arith.constant 0 : i32
    %c0_i32_0 = arith.constant 0 : i32
    %c0_i32_1 = arith.constant 0 : i32
    return %arg0, %c0_i32, %c0_i32_0 : i32, i32, i32
  }
  func.func @transform_8(%arg0: i32) -> (i32, i32, i32) {
    %c0_i32 = arith.constant 0 : i32
    %c0_i32_0 = arith.constant 0 : i32
    %c0_i32_1 = arith.constant 0 : i32
    return %arg0, %c0_i32, %c0_i32_0 : i32, i32, i32
  }
}

</mosaic_0001>

<llo_original>
// kernel: resblock_forward.5
$region0: #{resblock_forward.5}
  #allocation0 [shape = 'u32[]', space=smem, size = 0x4, offset = 0x4, fixed_abs, tag = 'smem constant byte address 0x4 - core index']
  #allocation1 [shape = 'u32[144,128]{1,0:T(1,128)}', space=vmem, size = 0x12000, scoped, tag = 'internal scratch']
  %s0 = inlined_call_operand.vmem [shape: f32[2,8,8,128], index: 0, kind: input, shape index: {}]
  %s1 = inlined_call_operand.vmem [shape: f32[2,8,8,128], index: 1, kind: input, shape index: {}]
  %s2 = inlined_call_operand.vmem [shape: f32[1,128], index: 2, kind: input, shape index: {}]
  %s3 = inlined_call_operand.vmem [shape: f32[1,128], index: 3, kind: input, shape index: {}]
  %s4 = inlined_call_operand.vmem [shape: f32[1,128], index: 4, kind: input, shape index: {}]
  %s5 = inlined_call_operand.vmem [shape: f32[2,8,8,128], index: 5, kind: output, shape index: {}]
  %s6 = sld [smem:[#allocation0]]
  $region53: #{resblock_forward.5} parent=0
    _
  %s8 = ssub.s32 1, %s6
  %s9 = scalar_select 0, %s8, %s6
  loop: start=0, step=1, limit=4
  $region2: #{resblock_forward.5} parent=0 // loop_pre_header
    _
  $region3: #{resblock_forward.5} parent=0 // loop_header
    %s11 = sphi 0, %s15
    %p12 = scmp.ge.s32.totalorder %s11, 4
    %s21 = sphi 0, %s23
    %s24 = sphi 0, %s21
    %s25 = sphi 0, %s24
    %s41 = sphi 0, %s25
    %s47 = sphi 0, %s49
    %s50 = sphi 0, %s47
    %s51 = sphi 0, %s50
    %s67 = sphi 0, %s51
    %s71 = sphi 0, %s71
    %s73 = sphi 0, %s71
    %s74 = sphi 0, %s73
    %s88 = sphi 0, %s74
    %s92 = sphi 0, %s92
    %s94 = sphi 0, %s92
    %s95 = sphi 0, %s94
    %s109 = sphi 0, %s95
    %s113 = sphi 0, %s113
    %s115 = sphi 0, %s113
    %s116 = sphi 0, %s115
    %s130 = sphi 0, %s116
    %s136 = sphi 0, %s138
    %s139 = sphi 0, %s136
    %s140 = sphi 0, %s139
    %s156 = sphi 0, %s140
  $region4: #{resblock_forward.5} parent=0 // loop_header_branch
    %14 = sbr.rel (%p12) target = $region8
  $region5: #{resblock_forward.5} parent=0 // loop_body
    %s16 = ssub.s32 %s11, 1
    %s17 = ssub.s32 %s11, 2
    %s18 = sadd.s32 %s11, 1
    %s19 = ssub.s32 %s11, %s18
    %p20 = scmp.eq.s32.totalorder %s19, 0
    %s22 = sadd.s32 %s21, 1
    %s23 = scalar_select %p20, %s21, %s22
    %p26 = pneg %p20
    %p27 = scmp.eq.s32.totalorder %s11, 1
    %p28 = por %p26, %p27
    %p29 = scmp.ne.s32.totalorder %s21, %s24
    %p30 = scmp.eq.s32.totalorder %s11, 0
    %p31 = por %p29, %p30
    %p32 = scmp.ne.s32.totalorder %s21, %s24
    %p33 = scmp.eq.s32.totalorder %s16, 1
    %p34 = por %p32, %p33
    %p35 = scmp.ne.s32.totalorder %s24, %s25
    %p36 = scmp.eq.s32.totalorder %s16, 0
    %p37 = por %p35, %p36
    %p38 = scmp.ne.s32.totalorder %s24, %s25
    %p39 = scmp.eq.s32.totalorder %s17, 1
    %p40 = por %p38, %p39
    %p42 = scmp.ne.s32.totalorder %s25, %s41
    %p43 = scmp.eq.s32.totalorder %s17, 0
    %p44 = por %p42, %p43
    %s45 = ssub.s32 %s11, %s18
    %p46 = scmp.eq.s32.totalorder %s45, 0
    %s48 = sadd.s32 %s47, 1
    %s49 = scalar_select %p46, %s47, %s48
    %p52 = pneg %p46
    %p53 = scmp.eq.s32.totalorder %s11, 1
    %p54 = por %p52, %p53
    %p55 = scmp.ne.s32.totalorder %s47, %s50
    %p56 = scmp.eq.s32.totalorder %s11, 0
    %p57 = por %p55, %p56
    %p58 = scmp.ne.s32.totalorder %s47, %s50
    %p59 = scmp.eq.s32.totalorder %s16, 1
    %p60 = por %p58, %p59
    %p61 = scmp.ne.s32.totalorder %s50, %s51
    %p62 = scmp.eq.s32.totalorder %s16, 0
    %p63 = por %p61, %p62
    %p64 = scmp.ne.s32.totalorder %s50, %s51
    %p65 = scmp.eq.s32.totalorder %s17, 1
    %p66 = por %p64, %p65
    %p68 = scmp.ne.s32.totalorder %s51, %s67
    %p69 = scmp.eq.s32.totalorder %s17, 0
    %p70 = por %p68, %p69
    %s72 = sadd.s32 %s71, 1
    %p75 = scmp.eq.s32.totalorder %s11, 1
    %p76 = scmp.ne.s32.totalorder %s71, %s73
    %p77 = scmp.eq.s32.totalorder %s11, 0
    %p78 = por %p76, %p77
    %p79 = scmp.ne.s32.totalorder %s71, %s73
    %p80 = scmp.eq.s32.totalorder %s16, 1
    %p81 = por %p79, %p80
    %p82 = scmp.ne.s32.totalorder %s73, %s74
    %p83 = scmp.eq.s32.totalorder %s16, 0
    %p84 = por %p82, %p83
    %p85 = scmp.ne.s32.totalorder %s73, %s74
    %p86 = scmp.eq.s32.totalorder %s17, 1
    %p87 = por %p85, %p86
    %p89 = scmp.ne.s32.totalorder %s74, %s88
    %p90 = scmp.eq.s32.totalorder %s17, 0
    %p91 = por %p89, %p90
    %s93 = sadd.s32 %s92, 1
    %p96 = scmp.eq.s32.totalorder %s11, 1
    %p97 = scmp.ne.s32.totalorder %s92, %s94
    %p98 = scmp.eq.s32.totalorder %s11, 0
    %p99 = por %p97, %p98
    %p100 = scmp.ne.s32.totalorder %s92, %s94
    %p101 = scmp.eq.s32.totalorder %s16, 1
    %p102 = por %p100, %p101
    %p103 = scmp.ne.s32.totalorder %s94, %s95
    %p104 = scmp.eq.s32.totalorder %s16, 0
    %p105 = por %p103, %p104
    %p106 = scmp.ne.s32.totalorder %s94, %s95
    %p107 = scmp.eq.s32.totalorder %s17, 1
    %p108 = por %p106, %p107
    %p110 = scmp.ne.s32.totalorder %s95, %s109
    %p111 = scmp.eq.s32.totalorder %s17, 0
    %p112 = por %p110, %p111
    %s114 = sadd.s32 %s113, 1
    %p117 = scmp.eq.s32.totalorder %s11, 1
    %p118 = scmp.ne.s32.totalorder %s113, %s115
    %p119 = scmp.eq.s32.totalorder %s11, 0
    %p120 = por %p118, %p119
    %p121 = scmp.ne.s32.totalorder %s113, %s115
    %p122 = scmp.eq.s32.totalorder %s16, 1
    %p123 = por %p121, %p122
    %p124 = scmp.ne.s32.totalorder %s115, %s116
    %p125 = scmp.eq.s32.totalorder %s16, 0
    %p126 = por %p124, %p125
    %p127 = scmp.ne.s32.totalorder %s115, %s116
    %p128 = scmp.eq.s32.totalorder %s17, 1
    %p129 = por %p127, %p128
    %p131 = scmp.ne.s32.totalorder %s116, %s130
    %p132 = scmp.eq.s32.totalorder %s17, 0
    %p133 = por %p131, %p132
    %s134 = ssub.s32 %s11, %s18
    %p135 = scmp.eq.s32.totalorder %s134, 0
    %s137 = sadd.s32 %s136, 1
    %s138 = scalar_select %p135, %s136, %s137
    %p141 = pneg %p135
    %p142 = scmp.eq.s32.totalorder %s11, 1
    %p143 = por %p141, %p142
    %p144 = scmp.ne.s32.totalorder %s136, %s139
    %p145 = scmp.eq.s32.totalorder %s11, 0
    %p146 = por %p144, %p145
    %p147 = scmp.ne.s32.totalorder %s136, %s139
    %p148 = scmp.eq.s32.totalorder %s16, 1
    %p149 = por %p147, %p148
    %p150 = scmp.ne.s32.totalorder %s139, %s140
    %p151 = scmp.eq.s32.totalorder %s16, 0
    %p152 = por %p150, %p151
    %p153 = scmp.ne.s32.totalorder %s139, %s140
    %p154 = scmp.eq.s32.totalorder %s17, 1
    %p155 = por %p153, %p154
    %p157 = scmp.ne.s32.totalorder %s140, %s156
    %p158 = scmp.eq.s32.totalorder %s17, 0
    %p159 = por %p157, %p158
    %p160 = scmp.le.s32.totalorder 1, %s11
    %p161 = scmp.lt.s32.totalorder %s11, 3
    %p162 = pnand %p160, %p161
    %p163 = pneg %p162
    // Predicated region
    $region9: #{resblock_forward.5} parent=5 // pred_check
      _
    $region10: #{resblock_forward.5} parent=5 // pred_check_branch
      %165 = sbr.rel (%p162) target = $region12
    $region11: #{resblock_forward.5} parent=5 // pred_region
      %s166 = ssub.s32 %s11, 1
      // Predicated region
      $region13: #{resblock_forward.5} parent=11 // pred_check
        %p167 = pneg %p84
      $region14: #{resblock_forward.5} parent=11 // pred_check_branch
        %169 = sbr.rel (%p167) target = $region16
      $region15: #{resblock_forward.5} parent=11 // pred_region
        _
      $region16: #{resblock_forward.5} parent=11 // pred_fallthru
        _
      // Predicated region
      $region17: #{resblock_forward.5} parent=11 // pred_check
        %p170 = pneg %p105
      $region18: #{resblock_forward.5} parent=11 // pred_check_branch
        %172 = sbr.rel (%p170) target = $region20
      $region19: #{resblock_forward.5} parent=11 // pred_region
        _
      $region20: #{resblock_forward.5} parent=11 // pred_fallthru
        _
      // Predicated region
      $region21: #{resblock_forward.5} parent=11 // pred_check
        %p173 = pneg %p126
      $region22: #{resblock_forward.5} parent=11 // pred_check_branch
        %175 = sbr.rel (%p173) target = $region24
      $region23: #{resblock_forward.5} parent=11 // pred_region
        _
      $region24: #{resblock_forward.5} parent=11 // pred_fallthru
        _
    $region12: #{resblock_forward.5} parent=5 // pred_fallthru
      _
    %p176 = scmp.lt.s32.totalorder %s11, 2
    // Predicated region
    $region25: #{resblock_forward.5} parent=5 // pred_check
      %p177 = pneg %p176
    $region26: #{resblock_forward.5} parent=5 // pred_check_branch
      %179 = sbr.rel (%p177) target = $region28
    $region27: #{resblock_forward.5} parent=5 // pred_region
      // Predicated region
      $region29: #{resblock_forward.5} parent=27 // pred_check
        %p180 = pneg %p31
      $region30: #{resblock_forward.5} parent=27 // pred_check_branch
        %182 = sbr.rel (%p180) target = $region32
      $region31: #{resblock_forward.5} parent=27 // pred_region
        %p183 = scmp.lt.s32.totalorder %s11, 1
        %s184 = scalar_select %p183, %s11, 1
        %s185 = smul.addr %s184, 8
        %s186 = smul.addr %s185, 8
        %s187 = scalar_lea.vmem %s0, %s186
      $region32: #{resblock_forward.5} parent=27 // pred_fallthru
        _
      // Predicated region
      $region33: #{resblock_forward.5} parent=27 // pred_check
        %p188 = pneg %p57
      $region34: #{resblock_forward.5} parent=27 // pred_check_branch
        %190 = sbr.rel (%p188) target = $region36
      $region35: #{resblock_forward.5} parent=27 // pred_region
        %p191 = scmp.lt.s32.totalorder %s11, 1
        %s192 = scalar_select %p191, %s11, 1
        %s193 = smul.addr %s192, 8
        %s194 = smul.addr %s193, 8
        %s195 = scalar_lea.vmem %s1, %s194
      $region36: #{resblock_forward.5} parent=27 // pred_fallthru
        _
    $region28: #{resblock_forward.5} parent=5 // pred_fallthru
      _
    %p196 = scmp.le.s32.totalorder 1, %s11
    %p197 = scmp.lt.s32.totalorder %s11, 3
    %p198 = pnand %p196, %p197
    %p199 = pneg %p198
    // Predicated region
    $region37: #{resblock_forward.5} parent=5 // pred_check
      _
    $region38: #{resblock_forward.5} parent=5 // pred_check_branch
      %201 = sbr.rel (%p198) target = $region40
    $region39: #{resblock_forward.5} parent=5 // pred_region
      %s202 = ssub.s32 %s11, 1
      %p203 = scmp.lt.s32.totalorder %s16, 1
      %s204 = scalar_select %p203, %s16, 1
      %s205 = smul.addr %s204, 8
      %s206 = smul.addr %s205, 8
      %s207 = scalar_lea.vmem %s0, %s206
      %p208 = pneg %p37
      %p209 = pneg %p34
      %p210 = scmp.lt.s32.totalorder %s16, 1
      %s211 = scalar_select %p210, %s16, 1
      %s212 = smul.addr %s211, 8
      %s213 = smul.addr %s212, 8
      %s214 = scalar_lea.vmem %s1, %s213
      %p215 = pneg %p63
      %p216 = pneg %p60
      %p217 = pneg %p84
      %p218 = pneg %p81
      %p219 = pneg %p105
      %p220 = pneg %p102
      %p221 = pneg %p126
      %p222 = pneg %p123
      %p223 = pneg %p152
      %p224 = pneg %p149
      %p225 = scmp.lt.s32.totalorder %s16, 1
      %s226 = scalar_select %p225, %s16, 1
      %s227 = smul.addr %s226, 8
      %s228 = smul.addr %s227, 8
      %s229 = scalar_lea.vmem %s5, %s228
      %p230 = scmp.lt.s32.totalorder %s16, 1
      %s231 = scalar_select %p230, %s16, 1
      %s232 = smul.addr %s231, 8
      %s233 = smul.addr %s232, 8
      %s234 = scalar_lea.vmem %s0, %s233
      %p235 = scmp.lt.s32.totalorder %s16, 1
      %s236 = scalar_select %p235, %s16, 1
      %s237 = smul.addr %s236, 8
      %s238 = smul.addr %s237, 8
      %s239 = scalar_lea.vmem %s1, %s238
      %p240 = scmp.lt.s32.totalorder %s16, 1
      %s241 = scalar_select %p240, %s16, 1
      %s242 = smul.addr %s241, 8
      %s243 = smul.addr %s242, 8
      %s244 = scalar_lea.vmem %s5, %s243
      %v245 = vld [vmem:[%s234] sm:$0xff]
      %v246 = vld [vmem:[%s234 + $0x8] sm:$0xff]
      %v247 = vld [vmem:[%s234 + $0x10] sm:$0xff]
      %v248 = vld [vmem:[%s234 + $0x18] sm:$0xff]
      %v249 = vld [vmem:[%s234 + $0x20] sm:$0xff]
      %v250 = vld [vmem:[%s234 + $0x28] sm:$0xff]
      %v251 = vld [vmem:[%s234 + $0x30] sm:$0xff]
      %v252 = vld [vmem:[%s234 + $0x38] sm:$0xff]
      %v253 = vld [vmem:[%s2] sm:$0x1]
      %v255 = vlaneseq
      %v256 = vshrl.u32 %v255, 7
      %v257 = vsub.s32 0, %v256
      %v258 = vrot.slane %v253, %v257
      %v260 = vmul.f32 %v245, %v258
      %v261 = vmul.f32 %v246, %v258
      %v262 = vmul.f32 %v247, %v258
      %v263 = vmul.f32 %v248, %v258
      %v264 = vmul.f32 %v249, %v258
      %v265 = vmul.f32 %v250, %v258
      %v266 = vmul.f32 %v251, %v258
      %v267 = vmul.f32 %v252, %v258
      %v268 = vld [vmem:[%s239] sm:$0xff]
      %v269 = vld [vmem:[%s239 + $0x8] sm:$0xff]
      %v270 = vld [vmem:[%s239 + $0x10] sm:$0xff]
      %v271 = vld [vmem:[%s239 + $0x18] sm:$0xff]
      %v272 = vld [vmem:[%s239 + $0x20] sm:$0xff]
      %v273 = vld [vmem:[%s239 + $0x28] sm:$0xff]
      %v274 = vld [vmem:[%s239 + $0x30] sm:$0xff]
      %v275 = vld [vmem:[%s239 + $0x38] sm:$0xff]
      %v276 = vld [vmem:[%s3] sm:$0x1]
      %v278 = vlaneseq
      %v279 = vshrl.u32 %v278, 7
      %v280 = vsub.s32 0, %v279
      %v281 = vrot.slane %v276, %v280
      %v283 = vmul.f32 %v268, %v281
      %v284 = vmul.f32 %v269, %v281
      %v285 = vmul.f32 %v270, %v281
      %v286 = vmul.f32 %v271, %v281
      %v287 = vmul.f32 %v272, %v281
      %v288 = vmul.f32 %v273, %v281
      %v289 = vmul.f32 %v274, %v281
      %v290 = vmul.f32 %v275, %v281
      %v291 = vadd.f32 %v260, %v283
      %v292 = vadd.f32 %v261, %v284
      %v293 = vadd.f32 %v262, %v285
      %v294 = vadd.f32 %v263, %v286
      %v295 = vadd.f32 %v264, %v287
      %v296 = vadd.f32 %v265, %v288
      %v297 = vadd.f32 %v266, %v289
      %v298 = vadd.f32 %v267, %v290
      %v299 = vld [vmem:[%s4] sm:$0x1]
      %v301 = vlaneseq
      %v302 = vshrl.u32 %v301, 7
      %v303 = vsub.s32 0, %v302
      %v304 = vrot.slane %v299, %v303
      %v306 = vadd.f32 %v291, %v304
      %v307 = vadd.f32 %v292, %v304
      %v308 = vadd.f32 %v293, %v304
      %v309 = vadd.f32 %v294, %v304
      %v310 = vadd.f32 %v295, %v304
      %v311 = vadd.f32 %v296, %v304
      %v312 = vadd.f32 %v297, %v304
      %v313 = vadd.f32 %v298, %v304
      %v314 = vmax.f32 %v306, 0.0
      %v315 = vmax.f32 %v307, 0.0
      %v316 = vmax.f32 %v308, 0.0
      %v317 = vmax.f32 %v309, 0.0
      %v318 = vmax.f32 %v310, 0.0
      %v319 = vmax.f32 %v311, 0.0
      %v320 = vmax.f32 %v312, 0.0
      %v321 = vmax.f32 %v313, 0.0
      %322 = vst [vmem:[%s244] sm:$0xff] %v314
      %323 = vst [vmem:[%s244 + $0x8] sm:$0xff] %v315
      %324 = vst [vmem:[%s244 + $0x10] sm:$0xff] %v316
      %325 = vst [vmem:[%s244 + $0x18] sm:$0xff] %v317
      %326 = vst [vmem:[%s244 + $0x20] sm:$0xff] %v318
      %327 = vst [vmem:[%s244 + $0x28] sm:$0xff] %v319
      %328 = vst [vmem:[%s244 + $0x30] sm:$0xff] %v320
      %329 = vst [vmem:[%s244 + $0x38] sm:$0xff] %v321
      %p330 = scmp.lt.s32.totalorder %s16, 1
      %s331 = scalar_select %p330, %s16, 1
      %s332 = smul.addr %s331, 8
      %s333 = smul.addr %s332, 8
      %s334 = scalar_lea.vmem %s5, %s333
      // Predicated region
      $region41: #{resblock_forward.5} parent=39 // pred_check
        %p335 = pneg %p149
      $region42: #{resblock_forward.5} parent=39 // pred_check_branch
        %337 = sbr.rel (%p335) target = $region44
      $region43: #{resblock_forward.5} parent=39 // pred_region
        _
      $region44: #{resblock_forward.5} parent=39 // pred_fallthru
        _
    $region40: #{resblock_forward.5} parent=5 // pred_fallthru
      _
    %p338 = scmp.le.s32.totalorder 2, %s11
    // Predicated region
    $region45: #{resblock_forward.5} parent=5 // pred_check
      %p339 = pneg %p338
    $region46: #{resblock_forward.5} parent=5 // pred_check_branch
      %341 = sbr.rel (%p339) target = $region48
    $region47: #{resblock_forward.5} parent=5 // pred_region
      %s342 = ssub.s32 %s11, 2
      // Predicated region
      $region49: #{resblock_forward.5} parent=47 // pred_check
        %p343 = pneg %p155
      $region50: #{resblock_forward.5} parent=47 // pred_check_branch
        %345 = sbr.rel (%p343) target = $region52
      $region51: #{resblock_forward.5} parent=47 // pred_region
        %p346 = scmp.lt.s32.totalorder %s17, 1
        %s347 = scalar_select %p346, %s17, 1
        %s348 = smul.addr %s347, 8
        %s349 = smul.addr %s348, 8
        %s350 = scalar_lea.vmem %s5, %s349
      $region52: #{resblock_forward.5} parent=47 // pred_fallthru
        _
    $region48: #{resblock_forward.5} parent=5 // pred_fallthru
      _
  $region6: #{resblock_forward.5} parent=0 // loop_footer
    %s15 = sadd.s32 1, %s11
  $region7: #{resblock_forward.5} parent=0 // loop_footer_branch
    %10 = sbr.rel target = $region3
  $region8: #{resblock_forward.5} parent=0 // loop_exit
    _

// kernel: resblock_forward.4
$region0: #{resblock_forward.4}
  #allocation0 [shape = 'u32[]', space=smem, size = 0x4, offset = 0x4, fixed_abs, tag = 'smem constant byte address 0x4 - core index']
  #allocation1 [shape = 'u32[144,128]{1,0:T(1,128)}', space=vmem, size = 0x12000, scoped, tag = 'internal scratch']
  #allocation2 [shape = 'f32[10,10,128]{2,1,0:T(8,128)}', space=vmem, size = 0x14000, scoped, tag = 'scratch operand']
  %s0 = inlined_call_operand.vmem [shape: f32[2,8,8,128], index: 0, kind: input, shape index: {}]
  %s1 = inlined_call_operand.vmem [shape: f32[1,128], index: 1, kind: input, shape index: {}]
  %s2 = inlined_call_operand.vmem [shape: f32[1,128], index: 2, kind: input, shape index: {}]
  %s3 = inlined_call_operand.vmem [shape: f32[9,128,128], index: 3, kind: input, shape index: {}]
  %s4 = inlined_call_operand.vmem [shape: f32[2,8,8,128], index: 4, kind: output, shape index: {0}]
  %s5 = inlined_call_operand.vmem [shape: f32[2,1,128], index: 5, kind: output, shape index: {1}]
  %s6 = inlined_call_operand.vmem [shape: f32[2,1,128], index: 6, kind: output, shape index: {2}]
  %7 = xla_tuple %s4, %s5, %s6
  %s8 = sld [smem:[#allocation0]]
  $region65: #{resblock_forward.4} parent=0
    _
  %s10 = ssub.s32 1, %s8
  %s11 = scalar_select 0, %s10, %s8
  loop: start=0, step=1, limit=4
  $region2: #{resblock_forward.4} parent=0 // loop_pre_header
    _
  $region3: #{resblock_forward.4} parent=0 // loop_header
    %s13 = sphi 0, %s17
    %p14 = scmp.ge.s32.totalorder %s13, 4
    %s23 = sphi 0, %s25
    %s26 = sphi 0, %s23
    %s27 = sphi 0, %s26
    %s43 = sphi 0, %s27
    %s47 = sphi 0, %s47
    %s49 = sphi 0, %s47
    %s50 = sphi 0, %s49
    %s64 = sphi 0, %s50
    %s68 = sphi 0, %s68
    %s70 = sphi 0, %s68
    %s71 = sphi 0, %s70
    %s85 = sphi 0, %s71
    %s89 = sphi 0, %s89
    %s91 = sphi 0, %s89
    %s92 = sphi 0, %s91
    %s106 = sphi 0, %s92
    %s112 = sphi 0, %s114
    %s115 = sphi 0, %s112
    %s116 = sphi 0, %s115
    %s132 = sphi 0, %s116
    %s138 = sphi 0, %s140
    %s141 = sphi 0, %s138
    %s142 = sphi 0, %s141
    %s158 = sphi 0, %s142
    %s164 = sphi 0, %s166
    %s167 = sphi 0, %s164
    %s168 = sphi 0, %s167
    %s184 = sphi 0, %s168
  $region4: #{resblock_forward.4} parent=0 // loop_header_branch
    %16 = sbr.rel (%p14) target = $region8
  $region5: #{resblock_forward.4} parent=0 // loop_body
    %s18 = ssub.s32 %s13, 1
    %s19 = ssub.s32 %s13, 2
    %s20 = sadd.s32 %s13, 1
    %s21 = ssub.s32 %s13, %s20
    %p22 = scmp.eq.s32.totalorder %s21, 0
    %s24 = sadd.s32 %s23, 1
    %s25 = scalar_select %p22, %s23, %s24
    %p28 = pneg %p22
    %p29 = scmp.eq.s32.totalorder %s13, 1
    %p30 = por %p28, %p29
    %p31 = scmp.ne.s32.totalorder %s23, %s26
    %p32 = scmp.eq.s32.totalorder %s13, 0
    %p33 = por %p31, %p32
    %p34 = scmp.ne.s32.totalorder %s23, %s26
    %p35 = scmp.eq.s32.totalorder %s18, 1
    %p36 = por %p34, %p35
    %p37 = scmp.ne.s32.totalorder %s26, %s27
    %p38 = scmp.eq.s32.totalorder %s18, 0
    %p39 = por %p37, %p38
    %p40 = scmp.ne.s32.totalorder %s26, %s27
    %p41 = scmp.eq.s32.totalorder %s19, 1
    %p42 = por %p40, %p41
    %p44 = scmp.ne.s32.totalorder %s27, %s43
    %p45 = scmp.eq.s32.totalorder %s19, 0
    %p46 = por %p44, %p45
    %s48 = sadd.s32 %s47, 1
    %p51 = scmp.eq.s32.totalorder %s13, 1
    %p52 = scmp.ne.s32.totalorder %s47, %s49
    %p53 = scmp.eq.s32.totalorder %s13, 0
    %p54 = por %p52, %p53
    %p55 = scmp.ne.s32.totalorder %s47, %s49
    %p56 = scmp.eq.s32.totalorder %s18, 1
    %p57 = por %p55, %p56
    %p58 = scmp.ne.s32.totalorder %s49, %s50
    %p59 = scmp.eq.s32.totalorder %s18, 0
    %p60 = por %p58, %p59
    %p61 = scmp.ne.s32.totalorder %s49, %s50
    %p62 = scmp.eq.s32.totalorder %s19, 1
    %p63 = por %p61, %p62
    %p65 = scmp.ne.s32.totalorder %s50, %s64
    %p66 = scmp.eq.s32.totalorder %s19, 0
    %p67 = por %p65, %p66
    %s69 = sadd.s32 %s68, 1
    %p72 = scmp.eq.s32.totalorder %s13, 1
    %p73 = scmp.ne.s32.totalorder %s68, %s70
    %p74 = scmp.eq.s32.totalorder %s13, 0
    %p75 = por %p73, %p74
    %p76 = scmp.ne.s32.totalorder %s68, %s70
    %p77 = scmp.eq.s32.totalorder %s18, 1
    %p78 = por %p76, %p77
    %p79 = scmp.ne.s32.totalorder %s70, %s71
    %p80 = scmp.eq.s32.totalorder %s18, 0
    %p81 = por %p79, %p80
    %p82 = scmp.ne.s32.totalorder %s70, %s71
    %p83 = scmp.eq.s32.totalorder %s19, 1
    %p84 = por %p82, %p83
    %p86 = scmp.ne.s32.totalorder %s71, %s85
    %p87 = scmp.eq.s32.totalorder %s19, 0
    %p88 = por %p86, %p87
    %s90 = sadd.s32 %s89, 1
    %p93 = scmp.eq.s32.totalorder %s13, 1
    %p94 = scmp.ne.s32.totalorder %s89, %s91
    %p95 = scmp.eq.s32.totalorder %s13, 0
    %p96 = por %p94, %p95
    %p97 = scmp.ne.s32.totalorder %s89, %s91
    %p98 = scmp.eq.s32.totalorder %s18, 1
    %p99 = por %p97, %p98
    %p100 = scmp.ne.s32.totalorder %s91, %s92
    %p101 = scmp.eq.s32.totalorder %s18, 0
    %p102 = por %p100, %p101
    %p103 = scmp.ne.s32.totalorder %s91, %s92
    %p104 = scmp.eq.s32.totalorder %s19, 1
    %p105 = por %p103, %p104
    %p107 = scmp.ne.s32.totalorder %s92, %s106
    %p108 = scmp.eq.s32.totalorder %s19, 0
    %p109 = por %p107, %p108
    %s110 = ssub.s32 %s13, %s20
    %p111 = scmp.eq.s32.totalorder %s110, 0
    %s113 = sadd.s32 %s112, 1
    %s114 = scalar_select %p111, %s112, %s113
    %p117 = pneg %p111
    %p118 = scmp.eq.s32.totalorder %s13, 1
    %p119 = por %p117, %p118
    %p120 = scmp.ne.s32.totalorder %s112, %s115
    %p121 = scmp.eq.s32.totalorder %s13, 0
    %p122 = por %p120, %p121
    %p123 = scmp.ne.s32.totalorder %s112, %s115
    %p124 = scmp.eq.s32.totalorder %s18, 1
    %p125 = por %p123, %p124
    %p126 = scmp.ne.s32.totalorder %s115, %s116
    %p127 = scmp.eq.s32.totalorder %s18, 0
    %p128 = por %p126, %p127
    %p129 = scmp.ne.s32.totalorder %s115, %s116
    %p130 = scmp.eq.s32.totalorder %s19, 1
    %p131 = por %p129, %p130
    %p133 = scmp.ne.s32.totalorder %s116, %s132
    %p134 = scmp.eq.s32.totalorder %s19, 0
    %p135 = por %p133, %p134
    %s136 = ssub.s32 %s13, %s20
    %p137 = scmp.eq.s32.totalorder %s136, 0
    %s139 = sadd.s32 %s138, 1
    %s140 = scalar_select %p137, %s138, %s139
    %p143 = pneg %p137
    %p144 = scmp.eq.s32.totalorder %s13, 1
    %p145 = por %p143, %p144
    %p146 = scmp.ne.s32.totalorder %s138, %s141
    %p147 = scmp.eq.s32.totalorder %s13, 0
    %p148 = por %p146, %p147
    %p149 = scmp.ne.s32.totalorder %s138, %s141
    %p150 = scmp.eq.s32.totalorder %s18, 1
    %p151 = por %p149, %p150
    %p152 = scmp.ne.s32.totalorder %s141, %s142
    %p153 = scmp.eq.s32.totalorder %s18, 0
    %p154 = por %p152, %p153
    %p155 = scmp.ne.s32.totalorder %s141, %s142
    %p156 = scmp.eq.s32.totalorder %s19, 1
    %p157 = por %p155, %p156
    %p159 = scmp.ne.s32.totalorder %s142, %s158
    %p160 = scmp.eq.s32.totalorder %s19, 0
    %p161 = por %p159, %p160
    %s162 = ssub.s32 %s13, %s20
    %p163 = scmp.eq.s32.totalorder %s162, 0
    %s165 = sadd.s32 %s164, 1
    %s166 = scalar_select %p163, %s164, %s165
    %p169 = pneg %p163
    %p170 = scmp.eq.s32.totalorder %s13, 1
    %p171 = por %p169, %p170
    %p172 = scmp.ne.s32.totalorder %s164, %s167
    %p173 = scmp.eq.s32.totalorder %s13, 0
    %p174 = por %p172, %p173
    %p175 = scmp.ne.s32.totalorder %s164, %s167
    %p176 = scmp.eq.s32.totalorder %s18, 1
    %p177 = por %p175, %p176
    %p178 = scmp.ne.s32.totalorder %s167, %s168
    %p179 = scmp.eq.s32.totalorder %s18, 0
    %p180 = por %p178, %p179
    %p181 = scmp.ne.s32.totalorder %s167, %s168
    %p182 = scmp.eq.s32.totalorder %s19, 1
    %p183 = por %p181, %p182
    %p185 = scmp.ne.s32.totalorder %s168, %s184
    %p186 = scmp.eq.s32.totalorder %s19, 0
    %p187 = por %p185, %p186
    %p188 = scmp.le.s32.totalorder 1, %s13
    %p189 = scmp.lt.s32.totalorder %s13, 3
    %p190 = pnand %p188, %p189
    %p191 = pneg %p190
    // Predicated region
    $region9: #{resblock_forward.4} parent=5 // pred_check
      _
    $region10: #{resblock_forward.4} parent=5 // pred_check_branch
      %193 = sbr.rel (%p190) target = $region12
    $region11: #{resblock_forward.4} parent=5 // pred_region
      %s194 = ssub.s32 %s13, 1
      // Predicated region
      $region13: #{resblock_forward.4} parent=11 // pred_check
        %p195 = pneg %p60
      $region14: #{resblock_forward.4} parent=11 // pred_check_branch
        %197 = sbr.rel (%p195) target = $region16
      $region15: #{resblock_forward.4} parent=11 // pred_region
        _
      $region16: #{resblock_forward.4} parent=11 // pred_fallthru
        _
      // Predicated region
      $region17: #{resblock_forward.4} parent=11 // pred_check
        %p198 = pneg %p81
      $region18: #{resblock_forward.4} parent=11 // pred_check_branch
        %200 = sbr.rel (%p198) target = $region20
      $region19: #{resblock_forward.4} parent=11 // pred_region
        _
      $region20: #{resblock_forward.4} parent=11 // pred_fallthru
        _
      // Predicated region
      $region21: #{resblock_forward.4} parent=11 // pred_check
        %p201 = pneg %p102
      $region22: #{resblock_forward.4} parent=11 // pred_check_branch
        %203 = sbr.rel (%p201) target = $region24
      $region23: #{resblock_forward.4} parent=11 // pred_region
        _
      $region24: #{resblock_forward.4} parent=11 // pred_fallthru
        _
    $region12: #{resblock_forward.4} parent=5 // pred_fallthru
      _
    %p204 = scmp.lt.s32.totalorder %s13, 2
    // Predicated region
    $region25: #{resblock_forward.4} parent=5 // pred_check
      %p205 = pneg %p204
    $region26: #{resblock_forward.4} parent=5 // pred_check_branch
      %207 = sbr.rel (%p205) target = $region28
    $region27: #{resblock_forward.4} parent=5 // pred_region
      // Predicated region
      $region29: #{resblock_forward.4} parent=27 // pred_check
        %p208 = pneg %p33
      $region30: #{resblock_forward.4} parent=27 // pred_check_branch
        %210 = sbr.rel (%p208) target = $region32
      $region31: #{resblock_forward.4} parent=27 // pred_region
        %p211 = scmp.lt.s32.totalorder %s13, 1
        %s212 = scalar_select %p211, %s13, 1
        %s213 = smul.addr %s212, 8
        %s214 = smul.addr %s213, 8
        %s215 = scalar_lea.vmem %s0, %s214
      $region32: #{resblock_forward.4} parent=27 // pred_fallthru
        _
    $region28: #{resblock_forward.4} parent=5 // pred_fallthru
      _
    %p216 = scmp.le.s32.totalorder 1, %s13
    %p217 = scmp.lt.s32.totalorder %s13, 3
    %p218 = pnand %p216, %p217
    %p219 = pneg %p218
    // Predicated region
    $region33: #{resblock_forward.4} parent=5 // pred_check
      _
    $region34: #{resblock_forward.4} parent=5 // pred_check_branch
      %221 = sbr.rel (%p218) target = $region36
    $region35: #{resblock_forward.4} parent=5 // pred_region
      %s222 = ssub.s32 %s13, 1
      %p223 = scmp.lt.s32.totalorder %s18, 1
      %s224 = scalar_select %p223, %s18, 1
      %s225 = smul.addr %s224, 8
      %s226 = smul.addr %s225, 8
      %s227 = scalar_lea.vmem %s0, %s226
      %p228 = pneg %p39
      %p229 = pneg %p36
      %p230 = pneg %p60
      %p231 = pneg %p57
      %p232 = pneg %p81
      %p233 = pneg %p78
      %p234 = pneg %p102
      %p235 = pneg %p99
      %p236 = pneg %p128
      %p237 = pneg %p125
      %p238 = scmp.lt.s32.totalorder %s18, 1
      %s239 = scalar_select %p238, %s18, 1
      %s240 = smul.addr %s239, 8
      %s241 = smul.addr %s240, 8
      %s242 = scalar_lea.vmem %s4, %s241
      %p243 = pneg %p154
      %p244 = pneg %p151
      %p245 = scmp.lt.s32.totalorder %s18, 1
      %s246 = scalar_select %p245, %s18, 1
      %s247 = scalar_lea.vmem %s5, %s246
      %p248 = pneg %p180
      %p249 = pneg %p177
      %p250 = scmp.lt.s32.totalorder %s18, 1
      %s251 = scalar_select %p250, %s18, 1
      %s252 = scalar_lea.vmem %s6, %s251
      %p253 = scmp.lt.s32.totalorder %s18, 1
      %s254 = scalar_select %p253, %s18, 1
      %s255 = smul.addr %s254, 8
      %s256 = smul.addr %s255, 8
      %s257 = scalar_lea.vmem %s0, %s256
      %p258 = scmp.lt.s32.totalorder %s18, 1
      %s259 = scalar_select %p258, %s18, 1
      %s260 = smul.addr %s259, 8
      %s261 = smul.addr %s260, 8
      %s262 = scalar_lea.vmem %s4, %s261
      %p263 = scmp.lt.s32.totalorder %s18, 1
      %s264 = scalar_select %p263, %s18, 1
      %s265 = scalar_lea.vmem %s5, %s264
      %p266 = scmp.lt.s32.totalorder %s18, 1
      %s267 = scalar_select %p266, %s18, 1
      %s268 = scalar_lea.vmem %s6, %s267
      %v269 = vld [vmem:[%s257] sm:$0xff]
      %v270 = vld [vmem:[%s257 + $0x8] sm:$0xff]
      %v271 = vld [vmem:[%s257 + $0x10] sm:$0xff]
      %v272 = vld [vmem:[%s257 + $0x18] sm:$0xff]
      %v273 = vld [vmem:[%s257 + $0x20] sm:$0xff]
      %v274 = vld [vmem:[%s257 + $0x28] sm:$0xff]
      %v275 = vld [vmem:[%s257 + $0x30] sm:$0xff]
      %v276 = vld [vmem:[%s257 + $0x38] sm:$0xff]
      %v277 = vld [vmem:[%s1] sm:$0x1]
      %v279 = vlaneseq
      %v280 = vshrl.u32 %v279, 7
      %v281 = vsub.s32 0, %v280
      %v282 = vrot.slane %v277, %v281
      %v284 = vmul.f32 %v269, %v282
      %v285 = vmul.f32 %v270, %v282
      %v286 = vmul.f32 %v271, %v282
      %v287 = vmul.f32 %v272, %v282
      %v288 = vmul.f32 %v273, %v282
      %v289 = vmul.f32 %v274, %v282
      %v290 = vmul.f32 %v275, %v282
      %v291 = vmul.f32 %v276, %v282
      %v292 = vld [vmem:[%s2] sm:$0x1]
      %v294 = vlaneseq
      %v295 = vshrl.u32 %v294, 7
      %v296 = vsub.s32 0, %v295
      %v297 = vrot.slane %v292, %v296
      %v299 = vadd.f32 %v284, %v297
      %v300 = vadd.f32 %v285, %v297
      %v301 = vadd.f32 %v286, %v297
      %v302 = vadd.f32 %v287, %v297
      %v303 = vadd.f32 %v288, %v297
      %v304 = vadd.f32 %v289, %v297
      %v305 = vadd.f32 %v290, %v297
      %v306 = vadd.f32 %v291, %v297
      %v307 = vmax.f32 %v299, 0.0
      %v308 = vmax.f32 %v300, 0.0
      %v309 = vmax.f32 %v301, 0.0
      %v310 = vmax.f32 %v302, 0.0
      %v311 = vmax.f32 %v303, 0.0
      %v312 = vmax.f32 %v304, 0.0
      %v313 = vmax.f32 %v305, 0.0
      %v314 = vmax.f32 %v306, 0.0
      %315 = vst [vmem:[#allocation2] sm:$0xff] 0.0
      %316 = vst [vmem:[#allocation2 + $0x8] sm:$0x3] 0.0
      %317 = vst [vmem:[#allocation2 + $0x10] sm:$0xff] 0.0
      %318 = vst [vmem:[#allocation2 + $0x18] sm:$0x3] 0.0
      %319 = vst [vmem:[#allocation2 + $0x20] sm:$0xff] 0.0
      %320 = vst [vmem:[#allocation2 + $0x28] sm:$0x3] 0.0
      %321 = vst [vmem:[#allocation2 + $0x30] sm:$0xff] 0.0
      %322 = vst [vmem:[#allocation2 + $0x38] sm:$0x3] 0.0
      %323 = vst [vmem:[#allocation2 + $0x40] sm:$0xff] 0.0
      %324 = vst [vmem:[#allocation2 + $0x48] sm:$0x3] 0.0
      %325 = vst [vmem:[#allocation2 + $0x50] sm:$0xff] 0.0
      %326 = vst [vmem:[#allocation2 + $0x58] sm:$0x3] 0.0
      %327 = vst [vmem:[#allocation2 + $0x60] sm:$0xff] 0.0
      %328 = vst [vmem:[#allocation2 + $0x68] sm:$0x3] 0.0
      %329 = vst [vmem:[#allocation2 + $0x70] sm:$0xff] 0.0
      %330 = vst [vmem:[#allocation2 + $0x78] sm:$0x3] 0.0
      %331 = vst [vmem:[#allocation2 + $0x80] sm:$0xff] 0.0
      %332 = vst [vmem:[#allocation2 + $0x88] sm:$0x3] 0.0
      %333 = vst [vmem:[#allocation2 + $0x90] sm:$0xff] 0.0
      %334 = vst [vmem:[#allocation2 + $0x98] sm:$0x3] 0.0
      %s335 = scalar_lea.vmem [#allocation2], 16
      %336 = vst [vmem:[%s335 + $0x1] sm:$0xff] %v307
      %337 = vst [vmem:[%s335 + $0x11] sm:$0xff] %v308
      %338 = vst [vmem:[%s335 + $0x21] sm:$0xff] %v309
      %339 = vst [vmem:[%s335 + $0x31] sm:$0xff] %v310
      %340 = vst [vmem:[%s335 + $0x41] sm:$0xff] %v311
      %341 = vst [vmem:[%s335 + $0x51] sm:$0xff] %v312
      %342 = vst [vmem:[%s335 + $0x61] sm:$0xff] %v313
      %343 = vst [vmem:[%s335 + $0x71] sm:$0xff] %v314
      %v344 = vld [vmem:[#allocation2] sm:$0xff]
      %v345 = vld [vmem:[#allocation2 + $0x10] sm:$0xff]
      %v346 = vld [vmem:[#allocation2 + $0x20] sm:$0xff]
      %v347 = vld [vmem:[#allocation2 + $0x30] sm:$0xff]
      %v348 = vld [vmem:[#allocation2 + $0x40] sm:$0xff]
      %v349 = vld [vmem:[#allocation2 + $0x50] sm:$0xff]
      %v350 = vld [vmem:[#allocation2 + $0x60] sm:$0xff]
      %v351 = vld [vmem:[#allocation2 + $0x70] sm:$0xff]
      %v352 = vld [vmem:[%s3] sm:$0xff]
      %v353 = vld [vmem:[%s3 + $0x8] sm:$0xff]
      %v354 = vld [vmem:[%s3 + $0x10] sm:$0xff]
      %v355 = vld [vmem:[%s3 + $0x18] sm:$0xff]
      %v356 = vld [vmem:[%s3 + $0x20] sm:$0xff]
      %v357 = vld [vmem:[%s3 + $0x28] sm:$0xff]
      %v358 = vld [vmem:[%s3 + $0x30] sm:$0xff]
      %v359 = vld [vmem:[%s3 + $0x38] sm:$0xff]
      %v360 = vld [vmem:[%s3 + $0x40] sm:$0xff]
      %v361 = vld [vmem:[%s3 + $0x48] sm:$0xff]
      %v362 = vld [vmem:[%s3 + $0x50] sm:$0xff]
      %v363 = vld [vmem:[%s3 + $0x58] sm:$0xff]
      %v364 = vld [vmem:[%s3 + $0x60] sm:$0xff]
      %v365 = vld [vmem:[%s3 + $0x68] sm:$0xff]
      %v366 = vld [vmem:[%s3 + $0x70] sm:$0xff]
      %v367 = vld [vmem:[%s3 + $0x78] sm:$0xff]
      %v368 = vld [vmem:[#allocation2 + $0x1] sm:$0xff]
      %v369 = vld [vmem:[#allocation2 + $0x11] sm:$0xff]
      %v370 = vld [vmem:[#allocation2 + $0x21] sm:$0xff]
      %v371 = vld [vmem:[#allocation2 + $0x31] sm:$0xff]
      %v372 = vld [vmem:[#allocation2 + $0x41] sm:$0xff]
      %v373 = vld [vmem:[#allocation2 + $0x51] sm:$0xff]
      %v374 = vld [vmem:[#allocation2 + $0x61] sm:$0xff]
      %v375 = vld [vmem:[#allocation2 + $0x71] sm:$0xff]
      %s376 = scalar_lea.vmem %s3, 128
      %v377 = vld [vmem:[%s376] sm:$0xff]
      %v378 = vld [vmem:[%s376 + $0x8] sm:$0xff]
      %v379 = vld [vmem:[%s376 + $0x10] sm:$0xff]
      %v380 = vld [vmem:[%s376 + $0x18] sm:$0xff]
      %v381 = vld [vmem:[%s376 + $0x20] sm:$0xff]
      %v382 = vld [vmem:[%s376 + $0x28] sm:$0xff]
      %v383 = vld [vmem:[%s376 + $0x30] sm:$0xff]
      %v384 = vld [vmem:[%s376 + $0x38] sm:$0xff]
      %v385 = vld [vmem:[%s376 + $0x40] sm:$0xff]
      %v386 = vld [vmem:[%s376 + $0x48] sm:$0xff]
      %v387 = vld [vmem:[%s376 + $0x50] sm:$0xff]
      %v388 = vld [vmem:[%s376 + $0x58] sm:$0xff]
      %v389 = vld [vmem:[%s376 + $0x60] sm:$0xff]
      %v390 = vld [vmem:[%s376 + $0x68] sm:$0xff]
      %v391 = vld [vmem:[%s376 + $0x70] sm:$0xff]
      %v392 = vld [vmem:[%s376 + $0x78] sm:$0xff]
      %393 = vmatprep.subr.mxu0 0.0
      %394 = vmatpush1.msra.mxu0 %v392
      %395 = vmatprep.subr.mxu0 0.0
      %396 = vmatpush1.msra.mxu0 %v391
      %397 = vmatprep.subr.mxu0 0.0
      %398 = vmatpush1.msra.mxu0 %v390
      %399 = vmatprep.subr.mxu0 0.0
      %400 = vmatpush1.msra.mxu0 %v389
      %401 = vmatprep.subr.mxu0 0.0
      %402 = vmatpush1.msra.mxu0 %v388
      %403 = vmatprep.subr.mxu0 0.0
      %404 = vmatpush1.msra.mxu0 %v387
      %405 = vmatprep.subr.mxu0 0.0
      %406 = vmatpush1.msra.mxu0 %v386
      %407 = vmatprep.subr.mxu0 0.0
      %408 = vmatpush1.msra.mxu0 %v385
      %409 = vmatprep.subr.mxu0 0.0
      %410 = vmatpush1.msra.mxu0 %v384
      %411 = vmatprep.subr.mxu0 0.0
      %412 = vmatpush1.msra.mxu0 %v383
      %413 = vmatprep.subr.mxu0 0.0
      %414 = vmatpush1.msra.mxu0 %v382
      %415 = vmatprep.subr.mxu0 0.0
      %416 = vmatpush1.msra.mxu0 %v381
      %417 = vmatprep.subr.mxu0 0.0
      %418 = vmatpush1.msra.mxu0 %v380
      %419 = vmatprep.subr.mxu0 0.0
      %420 = vmatpush1.msra.mxu0 %v379
      %421 = vmatprep.subr.mxu0 0.0
      %422 = vmatpush1.msra.mxu0 %v378
      %423 = vmatprep.subr.mxu0 0.0
      %424 = vmatpush1.msra.mxu0 %v377
      %425 = vmatprep.subr.mxu0 0.0
      %426 = vmatpush2.msra.mxu0 0.0
      %427 = vmatprep.subr.mxu0 0.0
      %428 = vmatpush2.msra.mxu0 0.0
      %429 = vmatprep.subr.mxu0 0.0
      %430 = vmatpush2.msra.mxu0 0.0
      %431 = vmatprep.subr.mxu0 0.0
      %432 = vmatpush2.msra.mxu0 0.0
      %433 = vmatprep.subr.mxu0 0.0
      %434 = vmatpush2.msra.mxu0 0.0
      %435 = vmatprep.subr.mxu0 0.0
      %436 = vmatpush2.msra.mxu0 0.0
      %437 = vmatprep.subr.mxu0 0.0
      %438 = vmatpush2.msra.mxu0 0.0
      %439 = vmatprep.subr.mxu0 0.0
      %440 = vmatpush2.msra.mxu0 0.0
      %441 = vmatprep.subr.mxu0 0.0
      %442 = vmatpush2.msra.mxu0 0.0
      %443 = vmatprep.subr.mxu0 0.0
      %444 = vmatpush2.msra.mxu0 0.0
      %445 = vmatprep.subr.mxu0 0.0
      %446 = vmatpush2.msra.mxu0 0.0
      %447 = vmatprep.subr.mxu0 0.0
      %448 = vmatpush2.msra.mxu0 0.0
      %449 = vmatprep.subr.mxu0 0.0
      %450 = vmatpush2.msra.mxu0 0.0
      %451 = vmatprep.subr.mxu0 0.0
      %452 = vmatpush2.msra.mxu0 0.0
      %453 = vmatprep.subr.mxu0 0.0
      %454 = vmatpush2.msra.mxu0 0.0
      %455 = vmatprep.subr.mxu0 0.0
      %456 = vmatpush2.msra.mxu0 0.0
      %457 = vmatprep.mubr.f32.mxu0 0.0
      %458 = vmatmul.mubr.f32.gmra.mxu0 %v368
      %v459 = vpop.f32.mrf.mxu0
      %v460 = vadd.f32 0.0, %v459
      %v461 = vpop.f32.mrf.mxu0
      %462 = vmatprep.mubr.f32.mxu0 0.0
      %463 = vmatmul.mubr.f32.gmra.mxu0 %v369
      %v464 = vpop.f32.mrf.mxu0
      %v465 = vadd.f32 0.0, %v464
      %v466 = vpop.f32.mrf.mxu0
      %467 = vmatprep.mubr.f32.mxu0 0.0
      %468 = vmatmul.mubr.f32.gmra.mxu0 %v370
      %v469 = vpop.f32.mrf.mxu0
      %v470 = vadd.f32 0.0, %v469
      %v471 = vpop.f32.mrf.mxu0
      %472 = vmatprep.mubr.f32.mxu0 0.0
      %473 = vmatmul.mubr.f32.gmra.mxu0 %v371
      %v474 = vpop.f32.mrf.mxu0
      %v475 = vadd.f32 0.0, %v474
      %v476 = vpop.f32.mrf.mxu0
      %477 = vmatprep.mubr.f32.mxu0 0.0
      %478 = vmatmul.mubr.f32.gmra.mxu0 %v372
      %v479 = vpop.f32.mrf.mxu0
      %v480 = vadd.f32 0.0, %v479
      %v481 = vpop.f32.mrf.mxu0
      %482 = vmatprep.mubr.f32.mxu0 0.0
      %483 = vmatmul.mubr.f32.gmra.mxu0 %v373
      %v484 = vpop.f32.mrf.mxu0
      %v485 = vadd.f32 0.0, %v484
      %v486 = vpop.f32.mrf.mxu0
      %487 = vmatprep.mubr.f32.mxu0 0.0
      %488 = vmatmul.mubr.f32.gmra.mxu0 %v374
      %v489 = vpop.f32.mrf.mxu0
      %v490 = vadd.f32 0.0, %v489
      %v491 = vpop.f32.mrf.mxu0
      %492 = vmatprep.mubr.f32.mxu0 0.0
      %493 = vmatmul.mubr.f32.gmra.mxu0 %v375
      %v494 = vpop.f32.mrf.mxu0
      %v495 = vadd.f32 0.0, %v494
      %v496 = vpop.f32.mrf.mxu0
      %497 = vdwg.mxu0
      %498 = vmatprep.subr.mxu0 0.0
      %499 = vmatpush1.msra.mxu0 %v367
      %500 = vmatprep.subr.mxu0 0.0
      %501 = vmatpush1.msra.mxu0 %v366
      %502 = vmatprep.subr.mxu0 0.0
      %503 = vmatpush1.msra.mxu0 %v365
      %504 = vmatprep.subr.mxu0 0.0
      %505 = vmatpush1.msra.mxu0 %v364
      %506 = vmatprep.subr.mxu0 0.0
      %507 = vmatpush1.msra.mxu0 %v363
      %508 = vmatprep.subr.mxu0 0.0
      %509 = vmatpush1.msra.mxu0 %v362
      %510 = vmatprep.subr.mxu0 0.0
      %511 = vmatpush1.msra.mxu0 %v361
      %512 = vmatprep.subr.mxu0 0.0
      %513 = vmatpush1.msra.mxu0 %v360
      %514 = vmatprep.subr.mxu0 0.0
      %515 = vmatpush1.msra.mxu0 %v359
      %516 = vmatprep.subr.mxu0 0.0
      %517 = vmatpush1.msra.mxu0 %v358
      %518 = vmatprep.subr.mxu0 0.0
      %519 = vmatpush1.msra.mxu0 %v357
      %520 = vmatprep.subr.mxu0 0.0
      %521 = vmatpush1.msra.mxu0 %v356
      %522 = vmatprep.subr.mxu0 0.0
      %523 = vmatpush1.msra.mxu0 %v355
      %524 = vmatprep.subr.mxu0 0.0
      %525 = vmatpush1.msra.mxu0 %v354
      %526 = vmatprep.subr.mxu0 0.0
      %527 = vmatpush1.msra.mxu0 %v353
      %528 = vmatprep.subr.mxu0 0.0
      %529 = vmatpush1.msra.mxu0 %v352
      %530 = vmatprep.subr.mxu0 0.0
      %531 = vmatpush2.msra.mxu0 0.0
      %532 = vmatprep.subr.mxu0 0.0
      %533 = vmatpush2.msra.mxu0 0.0
      %534 = vmatprep.subr.mxu0 0.0
      %535 = vmatpush2.msra.mxu0 0.0
      %536 = vmatprep.subr.mxu0 0.0
      %537 = vmatpush2.msra.mxu0 0.0
      %538 = vmatprep.subr.mxu0 0.0
      %539 = vmatpush2.msra.mxu0 0.0
      %540 = vmatprep.subr.mxu0 0.0
      %541 = vmatpush2.msra.mxu0 0.0
      %542 = vmatprep.subr.mxu0 0.0
      %543 = vmatpush2.msra.mxu0 0.0
      %544 = vmatprep.subr.mxu0 0.0
      %545 = vmatpush2.msra.mxu0 0.0
      %546 = vmatprep.subr.mxu0 0.0
      %547 = vmatpush2.msra.mxu0 0.0
      %548 = vmatprep.subr.mxu0 0.0
      %549 = vmatpush2.msra.mxu0 0.0
      %550 = vmatprep.subr.mxu0 0.0
      %551 = vmatpush2.msra.mxu0 0.0
      %552 = vmatprep.subr.mxu0 0.0
      %553 = vmatpush2.msra.mxu0 0.0
      %554 = vmatprep.subr.mxu0 0.0
      %555 = vmatpush2.msra.mxu0 0.0
      %556 = vmatprep.subr.mxu0 0.0
      %557 = vmatpush2.msra.mxu0 0.0
      %558 = vmatprep.subr.mxu0 0.0
      %559 = vmatpush2.msra.mxu0 0.0
      %560 = vmatprep.subr.mxu0 0.0
      %561 = vmatpush2.msra.mxu0 0.0
      %562 = vmatprep.mubr.f32.mxu0 0.0
      %563 = vmatmul.mubr.f32.gmra.mxu0 %v344
      %v564 = vpop.f32.mrf.mxu0
      %v565 = vadd.f32 %v460, %v564
      %v566 = vpop.f32.mrf.mxu0
      %567 = vmatprep.mubr.f32.mxu0 0.0
      %568 = vmatmul.mubr.f32.gmra.mxu0 %v345
      %v569 = vpop.f32.mrf.mxu0
      %v570 = vadd.f32 %v465, %v569
      %v571 = vpop.f32.mrf.mxu0
      %572 = vmatprep.mubr.f32.mxu0 0.0
      %573 = vmatmul.mubr.f32.gmra.mxu0 %v346
      %v574 = vpop.f32.mrf.mxu0
      %v575 = vadd.f32 %v470, %v574
      %v576 = vpop.f32.mrf.mxu0
      %577 = vmatprep.mubr.f32.mxu0 0.0
      %578 = vmatmul.mubr.f32.gmra.mxu0 %v347
      %v579 = vpop.f32.mrf.mxu0
      %v580 = vadd.f32 %v475, %v579
      %v581 = vpop.f32.mrf.mxu0
      %582 = vmatprep.mubr.f32.mxu0 0.0
      %583 = vmatmul.mubr.f32.gmra.mxu0 %v348
      %v584 = vpop.f32.mrf.mxu0
      %v585 = vadd.f32 %v480, %v584
      %v586 = vpop.f32.mrf.mxu0
      %587 = vmatprep.mubr.f32.mxu0 0.0
      %588 = vmatmul.mubr.f32.gmra.mxu0 %v349
      %v589 = vpop.f32.mrf.mxu0
      %v590 = vadd.f32 %v485, %v589
      %v591 = vpop.f32.mrf.mxu0
      %592 = vmatprep.mubr.f32.mxu0 0.0
      %593 = vmatmul.mubr.f32.gmra.mxu0 %v350
      %v594 = vpop.f32.mrf.mxu0
      %v595 = vadd.f32 %v490, %v594
      %v596 = vpop.f32.mrf.mxu0
      %597 = vmatprep.mubr.f32.mxu0 0.0
      %598 = vmatmul.mubr.f32.gmra.mxu0 %v351
      %v599 = vpop.f32.mrf.mxu0
      %v600 = vadd.f32 %v495, %v599
      %v601 = vpop.f32.mrf.mxu0
      %602 = vdwg.mxu0
      %v603 = vld [vmem:[#allocation2 + $0x2] sm:$0xff]
      %v604 = vld [vmem:[#allocation2 + $0x12] sm:$0xff]
      %v605 = vld [vmem:[#allocation2 + $0x22] sm:$0xff]
      %v606 = vld [vmem:[#allocation2 + $0x32] sm:$0xff]
      %v607 = vld [vmem:[#allocation2 + $0x42] sm:$0xff]
      %v608 = vld [vmem:[#allocation2 + $0x52] sm:$0xff]
      %v609 = vld [vmem:[#allocation2 + $0x62] sm:$0xff]
      %v610 = vld [vmem:[#allocation2 + $0x72] sm:$0xff]
      %s611 = scalar_lea.vmem %s3, 256
      %v612 = vld [vmem:[%s611] sm:$0xff]
      %v613 = vld [vmem:[%s611 + $0x8] sm:$0xff]
      %v614 = vld [vmem:[%s611 + $0x10] sm:$0xff]
      %v615 = vld [vmem:[%s611 + $0x18] sm:$0xff]
      %v616 = vld [vmem:[%s611 + $0x20] sm:$0xff]
      %v617 = vld [vmem:[%s611 + $0x28] sm:$0xff]
      %v618 = vld [vmem:[%s611 + $0x30] sm:$0xff]
      %v619 = vld [vmem:[%s611 + $0x38] sm:$0xff]
      %v620 = vld [vmem:[%s611 + $0x40] sm:$0xff]
      %v621 = vld [vmem:[%s611 + $0x48] sm:$0xff]
      %v622 = vld [vmem:[%s611 + $0x50] sm:$0xff]
      %v623 = vld [vmem:[%s611 + $0x58] sm:$0xff]
      %v624 = vld [vmem:[%s611 + $0x60] sm:$0xff]
      %v625 = vld [vmem:[%s611 + $0x68] sm:$0xff]
      %v626 = vld [vmem:[%s611 + $0x70] sm:$0xff]
      %v627 = vld [vmem:[%s611 + $0x78] sm:$0xff]
      %628 = vmatprep.subr.mxu0 0.0
      %629 = vmatpush1.msra.mxu0 %v627
      %630 = vmatprep.subr.mxu0 0.0
      %631 = vmatpush1.msra.mxu0 %v626
      %632 = vmatprep.subr.mxu0 0.0
      %633 = vmatpush1.msra.mxu0 %v625
      %634 = vmatprep.subr.mxu0 0.0
      %635 = vmatpush1.msra.mxu0 %v624
      %636 = vmatprep.subr.mxu0 0.0
      %637 = vmatpush1.msra.mxu0 %v623
      %638 = vmatprep.subr.mxu0 0.0
      %639 = vmatpush1.msra.mxu0 %v622
      %640 = vmatprep.subr.mxu0 0.0
      %641 = vmatpush1.msra.mxu0 %v621
      %642 = vmatprep.subr.mxu0 0.0
      %643 = vmatpush1.msra.mxu0 %v620
      %644 = vmatprep.subr.mxu0 0.0
      %645 = vmatpush1.msra.mxu0 %v619
      %646 = vmatprep.subr.mxu0 0.0
      %647 = vmatpush1.msra.mxu0 %v618
      %648 = vmatprep.subr.mxu0 0.0
      %649 = vmatpush1.msra.mxu0 %v617
      %650 = vmatprep.subr.mxu0 0.0
      %651 = vmatpush1.msra.mxu0 %v616
      %652 = vmatprep.subr.mxu0 0.0
      %653 = vmatpush1.msra.mxu0 %v615
      %654 = vmatprep.subr.mxu0 0.0
      %655 = vmatpush1.msra.mxu0 %v614
      %656 = vmatprep.subr.mxu0 0.0
      %657 = vmatpush1.msra.mxu0 %v613
      %658 = vmatprep.subr.mxu0 0.0
      %659 = vmatpush1.msra.mxu0 %v612
      %660 = vmatprep.subr.mxu0 0.0
      %661 = vmatpush2.msra.mxu0 0.0
      %662 = vmatprep.subr.mxu0 0.0
      %663 = vmatpush2.msra.mxu0 0.0
      %664 = vmatprep.subr.mxu0 0.0
      %665 = vmatpush2.msra.mxu0 0.0
      %666 = vmatprep.subr.mxu0 0.0
      %667 = vmatpush2.msra.mxu0 0.0
      %668 = vmatprep.subr.mxu0 0.0
      %669 = vmatpush2.msra.mxu0 0.0
      %670 = vmatprep.subr.mxu0 0.0
      %671 = vmatpush2.msra.mxu0 0.0
      %672 = vmatprep.subr.mxu0 0.0
      %673 = vmatpush2.msra.mxu0 0.0
      %674 = vmatprep.subr.mxu0 0.0
      %675 = vmatpush2.msra.mxu0 0.0
      %676 = vmatprep.subr.mxu0 0.0
      %677 = vmatpush2.msra.mxu0 0.0
      %678 = vmatprep.subr.mxu0 0.0
      %679 = vmatpush2.msra.mxu0 0.0
      %680 = vmatprep.subr.mxu0 0.0
      %681 = vmatpush2.msra.mxu0 0.0
      %682 = vmatprep.subr.mxu0 0.0
      %683 = vmatpush2.msra.mxu0 0.0
      %684 = vmatprep.subr.mxu0 0.0
      %685 = vmatpush2.msra.mxu0 0.0
      %686 = vmatprep.subr.mxu0 0.0
      %687 = vmatpush2.msra.mxu0 0.0
      %688 = vmatprep.subr.mxu0 0.0
      %689 = vmatpush2.msra.mxu0 0.0
      %690 = vmatprep.subr.mxu0 0.0
      %691 = vmatpush2.msra.mxu0 0.0
      %692 = vmatprep.mubr.f32.mxu0 0.0
      %693 = vmatmul.mubr.f32.gmra.mxu0 %v603
      %v694 = vpop.f32.mrf.mxu0
      %v695 = vadd.f32 0.0, %v694
      %v696 = vpop.f32.mrf.mxu0
      %697 = vmatprep.mubr.f32.mxu0 0.0
      %698 = vmatmul.mubr.f32.gmra.mxu0 %v604
      %v699 = vpop.f32.mrf.mxu0
      %v700 = vadd.f32 0.0, %v699
      %v701 = vpop.f32.mrf.mxu0
      %702 = vmatprep.mubr.f32.mxu0 0.0
      %703 = vmatmul.mubr.f32.gmra.mxu0 %v605
      %v704 = vpop.f32.mrf.mxu0
      %v705 = vadd.f32 0.0, %v704
      %v706 = vpop.f32.mrf.mxu0
      %707 = vmatprep.mubr.f32.mxu0 0.0
      %708 = vmatmul.mubr.f32.gmra.mxu0 %v606
      %v709 = vpop.f32.mrf.mxu0
      %v710 = vadd.f32 0.0, %v709
      %v711 = vpop.f32.mrf.mxu0
      %712 = vmatprep.mubr.f32.mxu0 0.0
      %713 = vmatmul.mubr.f32.gmra.mxu0 %v607
      %v714 = vpop.f32.mrf.mxu0
      %v715 = vadd.f32 0.0, %v714
      %v716 = vpop.f32.mrf.mxu0
      %717 = vmatprep.mubr.f32.mxu0 0.0
      %718 = vmatmul.mubr.f32.gmra.mxu0 %v608
      %v719 = vpop.f32.mrf.mxu0
      %v720 = vadd.f32 0.0, %v719
      %v721 = vpop.f32.mrf.mxu0
      %722 = vmatprep.mubr.f32.mxu0 0.0
      %723 = vmatmul.mubr.f32.gmra.mxu0 %v609
      %v724 = vpop.f32.mrf.mxu0
      %v725 = vadd.f32 0.0, %v724
      %v726 = vpop.f32.mrf.mxu0
      %727 = vmatprep.mubr.f32.mxu0 0.0
      %728 = vmatmul.mubr.f32.gmra.mxu0 %v610
      %v729 = vpop.f32.mrf.mxu0
      %v730 = vadd.f32 0.0, %v729
      %v731 = vpop.f32.mrf.mxu0
      %732 = vdwg.mxu0
      %v733 = vadd.f32 %v565, %v695
      %v734 = vadd.f32 %v570, %v700
      %v735 = vadd.f32 %v575, %v705
      %v736 = vadd.f32 %v580, %v710
      %v737 = vadd.f32 %v585, %v715
      %v738 = vadd.f32 %v590, %v720
      %v739 = vadd.f32 %v595, %v725
      %v740 = vadd.f32 %v600, %v730
      %v741 = vld [vmem:[%s335] sm:$0xff]
      %v742 = vld [vmem:[%s335 + $0x10] sm:$0xff]
      %v743 = vld [vmem:[%s335 + $0x20] sm:$0xff]
      %v744 = vld [vmem:[%s335 + $0x30] sm:$0xff]
      %v745 = vld [vmem:[%s335 + $0x40] sm:$0xff]
      %v746 = vld [vmem:[%s335 + $0x50] sm:$0xff]
      %v747 = vld [vmem:[%s335 + $0x60] sm:$0xff]
      %v748 = vld [vmem:[%s335 + $0x70] sm:$0xff]
      %s749 = scalar_lea.vmem %s3, 384
      %v750 = vld [vmem:[%s749] sm:$0xff]
      %v751 = vld [vmem:[%s749 + $0x8] sm:$0xff]
      %v752 = vld [vmem:[%s749 + $0x10] sm:$0xff]
      %v753 = vld [vmem:[%s749 + $0x18] sm:$0xff]
      %v754 = vld [vmem:[%s749 + $0x20] sm:$0xff]
      %v755 = vld [vmem:[%s749 + $0x28] sm:$0xff]
      %v756 = vld [vmem:[%s749 + $0x30] sm:$0xff]
      %v757 = vld [vmem:[%s749 + $0x38] sm:$0xff]
      %v758 = vld [vmem:[%s749 + $0x40] sm:$0xff]
      %v759 = vld [vmem:[%s749 + $0x48] sm:$0xff]
      %v760 = vld [vmem:[%s749 + $0x50] sm:$0xff]
      %v761 = vld [vmem:[%s749 + $0x58] sm:$0xff]
      %v762 = vld [vmem:[%s749 + $0x60] sm:$0xff]
      %v763 = vld [vmem:[%s749 + $0x68] sm:$0xff]
      %v764 = vld [vmem:[%s749 + $0x70] sm:$0xff]
      %v765 = vld [vmem:[%s749 + $0x78] sm:$0xff]
      %766 = vmatprep.subr.mxu0 0.0
      %767 = vmatpush1.msra.mxu0 %v765
      %768 = vmatprep.subr.mxu0 0.0
      %769 = vmatpush1.msra.mxu0 %v764
      %770 = vmatprep.subr.mxu0 0.0
      %771 = vmatpush1.msra.mxu0 %v763
      %772 = vmatprep.subr.mxu0 0.0
      %773 = vmatpush1.msra.mxu0 %v762
      %774 = vmatprep.subr.mxu0 0.0
      %775 = vmatpush1.msra.mxu0 %v761
      %776 = vmatprep.subr.mxu0 0.0
      %777 = vmatpush1.msra.mxu0 %v760
      %778 = vmatprep.subr.mxu0 0.0
      %779 = vmatpush1.msra.mxu0 %v759
      %780 = vmatprep.subr.mxu0 0.0
      %781 = vmatpush1.msra.mxu0 %v758
      %782 = vmatprep.subr.mxu0 0.0
      %783 = vmatpush1.msra.mxu0 %v757
      %784 = vmatprep.subr.mxu0 0.0
      %785 = vmatpush1.msra.mxu0 %v756
      %786 = vmatprep.subr.mxu0 0.0
      %787 = vmatpush1.msra.mxu0 %v755
      %788 = vmatprep.subr.mxu0 0.0
      %789 = vmatpush1.msra.mxu0 %v754
      %790 = vmatprep.subr.mxu0 0.0
      %791 = vmatpush1.msra.mxu0 %v753
      %792 = vmatprep.subr.mxu0 0.0
      %793 = vmatpush1.msra.mxu0 %v752
      %794 = vmatprep.subr.mxu0 0.0
      %795 = vmatpush1.msra.mxu0 %v751
      %796 = vmatprep.subr.mxu0 0.0
      %797 = vmatpush1.msra.mxu0 %v750
      %798 = vmatprep.subr.mxu0 0.0
      %799 = vmatpush2.msra.mxu0 0.0
      %800 = vmatprep.subr.mxu0 0.0
      %801 = vmatpush2.msra.mxu0 0.0
      %802 = vmatprep.subr.mxu0 0.0
      %803 = vmatpush2.msra.mxu0 0.0
      %804 = vmatprep.subr.mxu0 0.0
      %805 = vmatpush2.msra.mxu0 0.0
      %806 = vmatprep.subr.mxu0 0.0
      %807 = vmatpush2.msra.mxu0 0.0
      %808 = vmatprep.subr.mxu0 0.0
      %809 = vmatpush2.msra.mxu0 0.0
      %810 = vmatprep.subr.mxu0 0.0
      %811 = vmatpush2.msra.mxu0 0.0
      %812 = vmatprep.subr.mxu0 0.0
      %813 = vmatpush2.msra.mxu0 0.0
      %814 = vmatprep.subr.mxu0 0.0
      %815 = vmatpush2.msra.mxu0 0.0
      %816 = vmatprep.subr.mxu0 0.0
      %817 = vmatpush2.msra.mxu0 0.0
      %818 = vmatprep.subr.mxu0 0.0
      %819 = vmatpush2.msra.mxu0 0.0
      %820 = vmatprep.subr.mxu0 0.0
      %821 = vmatpush2.msra.mxu0 0.0
      %822 = vmatprep.subr.mxu0 0.0
      %823 = vmatpush2.msra.mxu0 0.0
      %824 = vmatprep.subr.mxu0 0.0
      %825 = vmatpush2.msra.mxu0 0.0
      %826 = vmatprep.subr.mxu0 0.0
      %827 = vmatpush2.msra.mxu0 0.0
      %828 = vmatprep.subr.mxu0 0.0
      %829 = vmatpush2.msra.mxu0 0.0
      %830 = vmatprep.mubr.f32.mxu0 0.0
      %831 = vmatmul.mubr.f32.gmra.mxu0 %v741
      %v832 = vpop.f32.mrf.mxu0
      %v833 = vadd.f32 0.0, %v832
      %v834 = vpop.f32.mrf.mxu0
      %835 = vmatprep.mubr.f32.mxu0 0.0
      %836 = vmatmul.mubr.f32.gmra.mxu0 %v742
      %v837 = vpop.f32.mrf.mxu0
      %v838 = vadd.f32 0.0, %v837
      %v839 = vpop.f32.mrf.mxu0
      %840 = vmatprep.mubr.f32.mxu0 0.0
      %841 = vmatmul.mubr.f32.gmra.mxu0 %v743
      %v842 = vpop.f32.mrf.mxu0
      %v843 = vadd.f32 0.0, %v842
      %v844 = vpop.f32.mrf.mxu0
      %845 = vmatprep.mubr.f32.mxu0 0.0
      %846 = vmatmul.mubr.f32.gmra.mxu0 %v744
      %v847 = vpop.f32.mrf.mxu0
      %v848 = vadd.f32 0.0, %v847
      %v849 = vpop.f32.mrf.mxu0
      %850 = vmatprep.mubr.f32.mxu0 0.0
      %851 = vmatmul.mubr.f32.gmra.mxu0 %v745
      %v852 = vpop.f32.mrf.mxu0
      %v853 = vadd.f32 0.0, %v852
      %v854 = vpop.f32.mrf.mxu0
      %855 = vmatprep.mubr.f32.mxu0 0.0
      %856 = vmatmul.mubr.f32.gmra.mxu0 %v746
      %v857 = vpop.f32.mrf.mxu0
      %v858 = vadd.f32 0.0, %v857
      %v859 = vpop.f32.mrf.mxu0
      %860 = vmatprep.mubr.f32.mxu0 0.0
      %861 = vmatmul.mubr.f32.gmra.mxu0 %v747
      %v862 = vpop.f32.mrf.mxu0
      %v863 = vadd.f32 0.0, %v862
      %v864 = vpop.f32.mrf.mxu0
      %865 = vmatprep.mubr.f32.mxu0 0.0
      %866 = vmatmul.mubr.f32.gmra.mxu0 %v748
      %v867 = vpop.f32.mrf.mxu0
      %v868 = vadd.f32 0.0, %v867
      %v869 = vpop.f32.mrf.mxu0
      %870 = vdwg.mxu0
      %v871 = vadd.f32 %v733, %v833
      %v872 = vadd.f32 %v734, %v838
      %v873 = vadd.f32 %v735, %v843
      %v874 = vadd.f32 %v736, %v848
      %v875 = vadd.f32 %v737, %v853
      %v876 = vadd.f32 %v738, %v858
      %v877 = vadd.f32 %v739, %v863
      %v878 = vadd.f32 %v740, %v868
      %v879 = vld [vmem:[%s335 + $0x1] sm:$0xff]
      %v880 = vld [vmem:[%s335 + $0x11] sm:$0xff]
      %v881 = vld [vmem:[%s335 + $0x21] sm:$0xff]
      %v882 = vld [vmem:[%s335 + $0x31] sm:$0xff]
      %v883 = vld [vmem:[%s335 + $0x41] sm:$0xff]
      %v884 = vld [vmem:[%s335 + $0x51] sm:$0xff]
      %v885 = vld [vmem:[%s335 + $0x61] sm:$0xff]
      %v886 = vld [vmem:[%s335 + $0x71] sm:$0xff]
      %s887 = scalar_lea.vmem %s3, 512
      %v888 = vld [vmem:[%s887] sm:$0xff]
      %v889 = vld [vmem:[%s887 + $0x8] sm:$0xff]
      %v890 = vld [vmem:[%s887 + $0x10] sm:$0xff]
      %v891 = vld [vmem:[%s887 + $0x18] sm:$0xff]
      %v892 = vld [vmem:[%s887 + $0x20] sm:$0xff]
      %v893 = vld [vmem:[%s887 + $0x28] sm:$0xff]
      %v894 = vld [vmem:[%s887 + $0x30] sm:$0xff]
      %v895 = vld [vmem:[%s887 + $0x38] sm:$0xff]
      %v896 = vld [vmem:[%s887 + $0x40] sm:$0xff]
      %v897 = vld [vmem:[%s887 + $0x48] sm:$0xff]
      %v898 = vld [vmem:[%s887 + $0x50] sm:$0xff]
      %v899 = vld [vmem:[%s887 + $0x58] sm:$0xff]
      %v900 = vld [vmem:[%s887 + $0x60] sm:$0xff]
      %v901 = vld [vmem:[%s887 + $0x68] sm:$0xff]
      %v902 = vld [vmem:[%s887 + $0x70] sm:$0xff]
      %v903 = vld [vmem:[%s887 + $0x78] sm:$0xff]
      %904 = vmatprep.subr.mxu0 0.0
      %905 = vmatpush1.msra.mxu0 %v903
      %906 = vmatprep.subr.mxu0 0.0
      %907 = vmatpush1.msra.mxu0 %v902
      %908 = vmatprep.subr.mxu0 0.0
      %909 = vmatpush1.msra.mxu0 %v901
      %910 = vmatprep.subr.mxu0 0.0
      %911 = vmatpush1.msra.mxu0 %v900
      %912 = vmatprep.subr.mxu0 0.0
      %913 = vmatpush1.msra.mxu0 %v899
      %914 = vmatprep.subr.mxu0 0.0
      %915 = vmatpush1.msra.mxu0 %v898
      %916 = vmatprep.subr.mxu0 0.0
      %917 = vmatpush1.msra.mxu0 %v897
      %918 = vmatprep.subr.mxu0 0.0
      %919 = vmatpush1.msra.mxu0 %v896
      %920 = vmatprep.subr.mxu0 0.0
      %921 = vmatpush1.msra.mxu0 %v895
      %922 = vmatprep.subr.mxu0 0.0
      %923 = vmatpush1.msra.mxu0 %v894
      %924 = vmatprep.subr.mxu0 0.0
      %925 = vmatpush1.msra.mxu0 %v893
      %926 = vmatprep.subr.mxu0 0.0
      %927 = vmatpush1.msra.mxu0 %v892
      %928 = vmatprep.subr.mxu0 0.0
      %929 = vmatpush1.msra.mxu0 %v891
      %930 = vmatprep.subr.mxu0 0.0
      %931 = vmatpush1.msra.mxu0 %v890
      %932 = vmatprep.subr.mxu0 0.0
      %933 = vmatpush1.msra.mxu0 %v889
      %934 = vmatprep.subr.mxu0 0.0
      %935 = vmatpush1.msra.mxu0 %v888
      %936 = vmatprep.subr.mxu0 0.0
      %937 = vmatpush2.msra.mxu0 0.0
      %938 = vmatprep.subr.mxu0 0.0
      %939 = vmatpush2.msra.mxu0 0.0
      %940 = vmatprep.subr.mxu0 0.0
      %941 = vmatpush2.msra.mxu0 0.0
      %942 = vmatprep.subr.mxu0 0.0
      %943 = vmatpush2.msra.mxu0 0.0
      %944 = vmatprep.subr.mxu0 0.0
      %945 = vmatpush2.msra.mxu0 0.0
      %946 = vmatprep.subr.mxu0 0.0
      %947 = vmatpush2.msra.mxu0 0.0
      %948 = vmatprep.subr.mxu0 0.0
      %949 = vmatpush2.msra.mxu0 0.0
      %950 = vmatprep.subr.mxu0 0.0
      %951 = vmatpush2.msra.mxu0 0.0
      %952 = vmatprep.subr.mxu0 0.0
      %953 = vmatpush2.msra.mxu0 0.0
      %954 = vmatprep.subr.mxu0 0.0
      %955 = vmatpush2.msra.mxu0 0.0
      %956 = vmatprep.subr.mxu0 0.0
      %957 = vmatpush2.msra.mxu0 0.0
      %958 = vmatprep.subr.mxu0 0.0
      %959 = vmatpush2.msra.mxu0 0.0
      %960 = vmatprep.subr.mxu0 0.0
      %961 = vmatpush2.msra.mxu0 0.0
      %962 = vmatprep.subr.mxu0 0.0
      %963 = vmatpush2.msra.mxu0 0.0
      %964 = vmatprep.subr.mxu0 0.0
      %965 = vmatpush2.msra.mxu0 0.0
      %966 = vmatprep.subr.mxu0 0.0
      %967 = vmatpush2.msra.mxu0 0.0
      %968 = vmatprep.mubr.f32.mxu0 0.0
      %969 = vmatmul.mubr.f32.gmra.mxu0 %v879
      %v970 = vpop.f32.mrf.mxu0
      %v971 = vadd.f32 0.0, %v970
      %v972 = vpop.f32.mrf.mxu0
      %973 = vmatprep.mubr.f32.mxu0 0.0
      %974 = vmatmul.mubr.f32.gmra.mxu0 %v880
      %v975 = vpop.f32.mrf.mxu0
      %v976 = vadd.f32 0.0, %v975
      %v977 = vpop.f32.mrf.mxu0
      %978 = vmatprep.mubr.f32.mxu0 0.0
      %979 = vmatmul.mubr.f32.gmra.mxu0 %v881
      %v980 = vpop.f32.mrf.mxu0
      %v981 = vadd.f32 0.0, %v980
      %v982 = vpop.f32.mrf.mxu0
      %983 = vmatprep.mubr.f32.mxu0 0.0
      %984 = vmatmul.mubr.f32.gmra.mxu0 %v882
      %v985 = vpop.f32.mrf.mxu0
      %v986 = vadd.f32 0.0, %v985
      %v987 = vpop.f32.mrf.mxu0
      %988 = vmatprep.mubr.f32.mxu0 0.0
      %989 = vmatmul.mubr.f32.gmra.mxu0 %v883
      %v990 = vpop.f32.mrf.mxu0
      %v991 = vadd.f32 0.0, %v990
      %v992 = vpop.f32.mrf.mxu0
      %993 = vmatprep.mubr.f32.mxu0 0.0
      %994 = vmatmul.mubr.f32.gmra.mxu0 %v884
      %v995 = vpop.f32.mrf.mxu0
      %v996 = vadd.f32 0.0, %v995
      %v997 = vpop.f32.mrf.mxu0
      %998 = vmatprep.mubr.f32.mxu0 0.0
      %999 = vmatmul.mubr.f32.gmra.mxu0 %v885
      %v1000 = vpop.f32.mrf.mxu0
      %v1001 = vadd.f32 0.0, %v1000
      %v1002 = vpop.f32.mrf.mxu0
      %1003 = vmatprep.mubr.f32.mxu0 0.0
      %1004 = vmatmul.mubr.f32.gmra.mxu0 %v886
      %v1005 = vpop.f32.mrf.mxu0
      %v1006 = vadd.f32 0.0, %v1005
      %v1007 = vpop.f32.mrf.mxu0
      %1008 = vdwg.mxu0
      %v1009 = vadd.f32 %v871, %v971
      %v1010 = vadd.f32 %v872, %v976
      %v1011 = vadd.f32 %v873, %v981
      %v1012 = vadd.f32 %v874, %v986
      %v1013 = vadd.f32 %v875, %v991
      %v1014 = vadd.f32 %v876, %v996
      %v1015 = vadd.f32 %v877, %v1001
      %v1016 = vadd.f32 %v878, %v1006
      %v1017 = vld [vmem:[%s335 + $0x2] sm:$0xff]
      %v1018 = vld [vmem:[%s335 + $0x12] sm:$0xff]
      %v1019 = vld [vmem:[%s335 + $0x22] sm:$0xff]
      %v1020 = vld [vmem:[%s335 + $0x32] sm:$0xff]
      %v1021 = vld [vmem:[%s335 + $0x42] sm:$0xff]
      %v1022 = vld [vmem:[%s335 + $0x52] sm:$0xff]
      %v1023 = vld [vmem:[%s335 + $0x62] sm:$0xff]
      %v1024 = vld [vmem:[%s335 + $0x72] sm:$0xff]
      %s1025 = scalar_lea.vmem %s3, 640
      %v1026 = vld [vmem:[%s1025] sm:$0xff]
      %v1027 = vld [vmem:[%s1025 + $0x8] sm:$0xff]
      %v1028 = vld [vmem:[%s1025 + $0x10] sm:$0xff]
      %v1029 = vld [vmem:[%s1025 + $0x18] sm:$0xff]
      %v1030 = vld [vmem:[%s1025 + $0x20] sm:$0xff]
      %v1031 = vld [vmem:[%s1025 + $0x28] sm:$0xff]
      %v1032 = vld [vmem:[%s1025 + $0x30] sm:$0xff]
      %v1033 = vld [vmem:[%s1025 + $0x38] sm:$0xff]
      %v1034 = vld [vmem:[%s1025 + $0x40] sm:$0xff]
      %v1035 = vld [vmem:[%s1025 + $0x48] sm:$0xff]
      %v1036 = vld [vmem:[%s1025 + $0x50] sm:$0xff]
      %v1037 = vld [vmem:[%s1025 + $0x58] sm:$0xff]
      %v1038 = vld [vmem:[%s1025 + $0x60] sm:$0xff]
      %v1039 = vld [vmem:[%s1025 + $0x68] sm:$0xff]
      %v1040 = vld [vmem:[%s1025 + $0x70] sm:$0xff]
      %v1041 = vld [vmem:[%s1025 + $0x78] sm:$0xff]
      %1042 = vmatprep.subr.mxu0 0.0
      %1043 = vmatpush1.msra.mxu0 %v1041
      %1044 = vmatprep.subr.mxu0 0.0
      %1045 = vmatpush1.msra.mxu0 %v1040
      %1046 = vmatprep.subr.mxu0 0.0
      %1047 = vmatpush1.msra.mxu0 %v1039
      %1048 = vmatprep.subr.mxu0 0.0
      %1049 = vmatpush1.msra.mxu0 %v1038
      %1050 = vmatprep.subr.mxu0 0.0
      %1051 = vmatpush1.msra.mxu0 %v1037
      %1052 = vmatprep.subr.mxu0 0.0
      %1053 = vmatpush1.msra.mxu0 %v1036
      %1054 = vmatprep.subr.mxu0 0.0
      %1055 = vmatpush1.msra.mxu0 %v1035
      %1056 = vmatprep.subr.mxu0 0.0
      %1057 = vmatpush1.msra.mxu0 %v1034
      %1058 = vmatprep.subr.mxu0 0.0
      %1059 = vmatpush1.msra.mxu0 %v1033
      %1060 = vmatprep.subr.mxu0 0.0
      %1061 = vmatpush1.msra.mxu0 %v1032
      %1062 = vmatprep.subr.mxu0 0.0
      %1063 = vmatpush1.msra.mxu0 %v1031
      %1064 = vmatprep.subr.mxu0 0.0
      %1065 = vmatpush1.msra.mxu0 %v1030
      %1066 = vmatprep.subr.mxu0 0.0
      %1067 = vmatpush1.msra.mxu0 %v1029
      %1068 = vmatprep.subr.mxu0 0.0
      %1069 = vmatpush1.msra.mxu0 %v1028
      %1070 = vmatprep.subr.mxu0 0.0
      %1071 = vmatpush1.msra.mxu0 %v1027
      %1072 = vmatprep.subr.mxu0 0.0
      %1073 = vmatpush1.msra.mxu0 %v1026
      %1074 = vmatprep.subr.mxu0 0.0
      %1075 = vmatpush2.msra.mxu0 0.0
      %1076 = vmatprep.subr.mxu0 0.0
      %1077 = vmatpush2.msra.mxu0 0.0
      %1078 = vmatprep.subr.mxu0 0.0
      %1079 = vmatpush2.msra.mxu0 0.0
      %1080 = vmatprep.subr.mxu0 0.0
      %1081 = vmatpush2.msra.mxu0 0.0
      %1082 = vmatprep.subr.mxu0 0.0
      %1083 = vmatpush2.msra.mxu0 0.0
      %1084 = vmatprep.subr.mxu0 0.0
      %1085 = vmatpush2.msra.mxu0 0.0
      %1086 = vmatprep.subr.mxu0 0.0
      %1087 = vmatpush2.msra.mxu0 0.0
      %1088 = vmatprep.subr.mxu0 0.0
      %1089 = vmatpush2.msra.mxu0 0.0
      %1090 = vmatprep.subr.mxu0 0.0
      %1091 = vmatpush2.msra.mxu0 0.0
      %1092 = vmatprep.subr.mxu0 0.0
      %1093 = vmatpush2.msra.mxu0 0.0
      %1094 = vmatprep.subr.mxu0 0.0
      %1095 = vmatpush2.msra.mxu0 0.0
      %1096 = vmatprep.subr.mxu0 0.0
      %1097 = vmatpush2.msra.mxu0 0.0
      %1098 = vmatprep.subr.mxu0 0.0
      %1099 = vmatpush2.msra.mxu0 0.0
      %1100 = vmatprep.subr.mxu0 0.0
      %1101 = vmatpush2.msra.mxu0 0.0
      %1102 = vmatprep.subr.mxu0 0.0
      %1103 = vmatpush2.msra.mxu0 0.0
      %1104 = vmatprep.subr.mxu0 0.0
      %1105 = vmatpush2.msra.mxu0 0.0
      %1106 = vmatprep.mubr.f32.mxu0 0.0
      %1107 = vmatmul.mubr.f32.gmra.mxu0 %v1017
      %v1108 = vpop.f32.mrf.mxu0
      %v1109 = vadd.f32 0.0, %v1108
      %v1110 = vpop.f32.mrf.mxu0
      %1111 = vmatprep.mubr.f32.mxu0 0.0
      %1112 = vmatmul.mubr.f32.gmra.mxu0 %v1018
      %v1113 = vpop.f32.mrf.mxu0
      %v1114 = vadd.f32 0.0, %v1113
      %v1115 = vpop.f32.mrf.mxu0
      %1116 = vmatprep.mubr.f32.mxu0 0.0
      %1117 = vmatmul.mubr.f32.gmra.mxu0 %v1019
      %v1118 = vpop.f32.mrf.mxu0
      %v1119 = vadd.f32 0.0, %v1118
      %v1120 = vpop.f32.mrf.mxu0
      %1121 = vmatprep.mubr.f32.mxu0 0.0
      %1122 = vmatmul.mubr.f32.gmra.mxu0 %v1020
      %v1123 = vpop.f32.mrf.mxu0
      %v1124 = vadd.f32 0.0, %v1123
      %v1125 = vpop.f32.mrf.mxu0
      %1126 = vmatprep.mubr.f32.mxu0 0.0
      %1127 = vmatmul.mubr.f32.gmra.mxu0 %v1021
      %v1128 = vpop.f32.mrf.mxu0
      %v1129 = vadd.f32 0.0, %v1128
      %v1130 = vpop.f32.mrf.mxu0
      %1131 = vmatprep.mubr.f32.mxu0 0.0
      %1132 = vmatmul.mubr.f32.gmra.mxu0 %v1022
      %v1133 = vpop.f32.mrf.mxu0
      %v1134 = vadd.f32 0.0, %v1133
      %v1135 = vpop.f32.mrf.mxu0
      %1136 = vmatprep.mubr.f32.mxu0 0.0
      %1137 = vmatmul.mubr.f32.gmra.mxu0 %v1023
      %v1138 = vpop.f32.mrf.mxu0
      %v1139 = vadd.f32 0.0, %v1138
      %v1140 = vpop.f32.mrf.mxu0
      %1141 = vmatprep.mubr.f32.mxu0 0.0
      %1142 = vmatmul.mubr.f32.gmra.mxu0 %v1024
      %v1143 = vpop.f32.mrf.mxu0
      %v1144 = vadd.f32 0.0, %v1143
      %v1145 = vpop.f32.mrf.mxu0
      %1146 = vdwg.mxu0
      %v1147 = vadd.f32 %v1009, %v1109
      %v1148 = vadd.f32 %v1010, %v1114
      %v1149 = vadd.f32 %v1011, %v1119
      %v1150 = vadd.f32 %v1012, %v1124
      %v1151 = vadd.f32 %v1013, %v1129
      %v1152 = vadd.f32 %v1014, %v1134
      %v1153 = vadd.f32 %v1015, %v1139
      %v1154 = vadd.f32 %v1016, %v1144
      %s1155 = scalar_lea.vmem [#allocation2], 32
      %v1156 = vld [vmem:[%s1155] sm:$0xff]
      %v1157 = vld [vmem:[%s1155 + $0x10] sm:$0xff]
      %v1158 = vld [vmem:[%s1155 + $0x20] sm:$0xff]
      %v1159 = vld [vmem:[%s1155 + $0x30] sm:$0xff]
      %v1160 = vld [vmem:[%s1155 + $0x40] sm:$0xff]
      %v1161 = vld [vmem:[%s1155 + $0x50] sm:$0xff]
      %v1162 = vld [vmem:[%s1155 + $0x60] sm:$0xff]
      %v1163 = vld [vmem:[%s1155 + $0x70] sm:$0xff]
      %s1164 = scalar_lea.vmem %s3, 768
      %v1165 = vld [vmem:[%s1164] sm:$0xff]
      %v1166 = vld [vmem:[%s1164 + $0x8] sm:$0xff]
      %v1167 = vld [vmem:[%s1164 + $0x10] sm:$0xff]
      %v1168 = vld [vmem:[%s1164 + $0x18] sm:$0xff]
      %v1169 = vld [vmem:[%s1164 + $0x20] sm:$0xff]
      %v1170 = vld [vmem:[%s1164 + $0x28] sm:$0xff]
      %v1171 = vld [vmem:[%s1164 + $0x30] sm:$0xff]
      %v1172 = vld [vmem:[%s1164 + $0x38] sm:$0xff]
      %v1173 = vld [vmem:[%s1164 + $0x40] sm:$0xff]
      %v1174 = vld [vmem:[%s1164 + $0x48] sm:$0xff]
      %v1175 = vld [vmem:[%s1164 + $0x50] sm:$0xff]
      %v1176 = vld [vmem:[%s1164 + $0x58] sm:$0xff]
      %v1177 = vld [vmem:[%s1164 + $0x60] sm:$0xff]
      %v1178 = vld [vmem:[%s1164 + $0x68] sm:$0xff]
      %v1179 = vld [vmem:[%s1164 + $0x70] sm:$0xff]
      %v1180 = vld [vmem:[%s1164 + $0x78] sm:$0xff]
      %1181 = vmatprep.subr.mxu0 0.0
      %1182 = vmatpush1.msra.mxu0 %v1180
      %1183 = vmatprep.subr.mxu0 0.0
      %1184 = vmatpush1.msra.mxu0 %v1179
      %1185 = vmatprep.subr.mxu0 0.0
      %1186 = vmatpush1.msra.mxu0 %v1178
      %1187 = vmatprep.subr.mxu0 0.0
      %1188 = vmatpush1.msra.mxu0 %v1177
      %1189 = vmatprep.subr.mxu0 0.0
      %1190 = vmatpush1.msra.mxu0 %v1176
      %1191 = vmatprep.subr.mxu0 0.0
      %1192 = vmatpush1.msra.mxu0 %v1175
      %1193 = vmatprep.subr.mxu0 0.0
      %1194 = vmatpush1.msra.mxu0 %v1174
      %1195 = vmatprep.subr.mxu0 0.0
      %1196 = vmatpush1.msra.mxu0 %v1173
      %1197 = vmatprep.subr.mxu0 0.0
      %1198 = vmatpush1.msra.mxu0 %v1172
      %1199 = vmatprep.subr.mxu0 0.0
      %1200 = vmatpush1.msra.mxu0 %v1171
      %1201 = vmatprep.subr.mxu0 0.0
      %1202 = vmatpush1.msra.mxu0 %v1170
      %1203 = vmatprep.subr.mxu0 0.0
      %1204 = vmatpush1.msra.mxu0 %v1169
      %1205 = vmatprep.subr.mxu0 0.0
      %1206 = vmatpush1.msra.mxu0 %v1168
      %1207 = vmatprep.subr.mxu0 0.0
      %1208 = vmatpush1.msra.mxu0 %v1167
      %1209 = vmatprep.subr.mxu0 0.0
      %1210 = vmatpush1.msra.mxu0 %v1166
      %1211 = vmatprep.subr.mxu0 0.0
      %1212 = vmatpush1.msra.mxu0 %v1165
      %1213 = vmatprep.subr.mxu0 0.0
      %1214 = vmatpush2.msra.mxu0 0.0
      %1215 = vmatprep.subr.mxu0 0.0
      %1216 = vmatpush2.msra.mxu0 0.0
      %1217 = vmatprep.subr.mxu0 0.0
      %1218 = vmatpush2.msra.mxu0 0.0
      %1219 = vmatprep.subr.mxu0 0.0
      %1220 = vmatpush2.msra.mxu0 0.0
      %1221 = vmatprep.subr.mxu0 0.0
      %1222 = vmatpush2.msra.mxu0 0.0
      %1223 = vmatprep.subr.mxu0 0.0
      %1224 = vmatpush2.msra.mxu0 0.0
      %1225 = vmatprep.subr.mxu0 0.0
      %1226 = vmatpush2.msra.mxu0 0.0
      %1227 = vmatprep.subr.mxu0 0.0
      %1228 = vmatpush2.msra.mxu0 0.0
      %1229 = vmatprep.subr.mxu0 0.0
      %1230 = vmatpush2.msra.mxu0 0.0
      %1231 = vmatprep.subr.mxu0 0.0
      %1232 = vmatpush2.msra.mxu0 0.0
      %1233 = vmatprep.subr.mxu0 0.0
      %1234 = vmatpush2.msra.mxu0 0.0
      %1235 = vmatprep.subr.mxu0 0.0
      %1236 = vmatpush2.msra.mxu0 0.0
      %1237 = vmatprep.subr.mxu0 0.0
      %1238 = vmatpush2.msra.mxu0 0.0
      %1239 = vmatprep.subr.mxu0 0.0
      %1240 = vmatpush2.msra.mxu0 0.0
      %1241 = vmatprep.subr.mxu0 0.0
      %1242 = vmatpush2.msra.mxu0 0.0
      %1243 = vmatprep.subr.mxu0 0.0
      %1244 = vmatpush2.msra.mxu0 0.0
      %1245 = vmatprep.mubr.f32.mxu0 0.0
      %1246 = vmatmul.mubr.f32.gmra.mxu0 %v1156
      %v1247 = vpop.f32.mrf.mxu0
      %v1248 = vadd.f32 0.0, %v1247
      %v1249 = vpop.f32.mrf.mxu0
      %1250 = vmatprep.mubr.f32.mxu0 0.0
      %1251 = vmatmul.mubr.f32.gmra.mxu0 %v1157
      %v1252 = vpop.f32.mrf.mxu0
      %v1253 = vadd.f32 0.0, %v1252
      %v1254 = vpop.f32.mrf.mxu0
      %1255 = vmatprep.mubr.f32.mxu0 0.0
      %1256 = vmatmul.mubr.f32.gmra.mxu0 %v1158
      %v1257 = vpop.f32.mrf.mxu0
      %v1258 = vadd.f32 0.0, %v1257
      %v1259 = vpop.f32.mrf.mxu0
      %1260 = vmatprep.mubr.f32.mxu0 0.0
      %1261 = vmatmul.mubr.f32.gmra.mxu0 %v1159
      %v1262 = vpop.f32.mrf.mxu0
      %v1263 = vadd.f32 0.0, %v1262
      %v1264 = vpop.f32.mrf.mxu0
      %1265 = vmatprep.mubr.f32.mxu0 0.0
      %1266 = vmatmul.mubr.f32.gmra.mxu0 %v1160
      %v1267 = vpop.f32.mrf.mxu0
      %v1268 = vadd.f32 0.0, %v1267
      %v1269 = vpop.f32.mrf.mxu0
      %1270 = vmatprep.mubr.f32.mxu0 0.0
      %1271 = vmatmul.mubr.f32.gmra.mxu0 %v1161
      %v1272 = vpop.f32.mrf.mxu0
      %v1273 = vadd.f32 0.0, %v1272
      %v1274 = vpop.f32.mrf.mxu0
      %1275 = vmatprep.mubr.f32.mxu0 0.0
      %1276 = vmatmul.mubr.f32.gmra.mxu0 %v1162
      %v1277 = vpop.f32.mrf.mxu0
      %v1278 = vadd.f32 0.0, %v1277
      %v1279 = vpop.f32.mrf.mxu0
      %1280 = vmatprep.mubr.f32.mxu0 0.0
      %1281 = vmatmul.mubr.f32.gmra.mxu0 %v1163
      %v1282 = vpop.f32.mrf.mxu0
      %v1283 = vadd.f32 0.0, %v1282
      %v1284 = vpop.f32.mrf.mxu0
      %1285 = vdwg.mxu0
      %v1286 = vadd.f32 %v1147, %v1248
      %v1287 = vadd.f32 %v1148, %v1253
      %v1288 = vadd.f32 %v1149, %v1258
      %v1289 = vadd.f32 %v1150, %v1263
      %v1290 = vadd.f32 %v1151, %v1268
      %v1291 = vadd.f32 %v1152, %v1273
      %v1292 = vadd.f32 %v1153, %v1278
      %v1293 = vadd.f32 %v1154, %v1283
      %v1294 = vld [vmem:[%s1155 + $0x1] sm:$0xff]
      %v1295 = vld [vmem:[%s1155 + $0x11] sm:$0xff]
      %v1296 = vld [vmem:[%s1155 + $0x21] sm:$0xff]
      %v1297 = vld [vmem:[%s1155 + $0x31] sm:$0xff]
      %v1298 = vld [vmem:[%s1155 + $0x41] sm:$0xff]
      %v1299 = vld [vmem:[%s1155 + $0x51] sm:$0xff]
      %v1300 = vld [vmem:[%s1155 + $0x61] sm:$0xff]
      %v1301 = vld [vmem:[%s1155 + $0x71] sm:$0xff]
      %s1302 = scalar_lea.vmem %s3, 896
      %v1303 = vld [vmem:[%s1302] sm:$0xff]
      %v1304 = vld [vmem:[%s1302 + $0x8] sm:$0xff]
      %v1305 = vld [vmem:[%s1302 + $0x10] sm:$0xff]
      %v1306 = vld [vmem:[%s1302 + $0x18] sm:$0xff]
      %v1307 = vld [vmem:[%s1302 + $0x20] sm:$0xff]
      %v1308 = vld [vmem:[%s1302 + $0x28] sm:$0xff]
      %v1309 = vld [vmem:[%s1302 + $0x30] sm:$0xff]
      %v1310 = vld [vmem:[%s1302 + $0x38] sm:$0xff]
      %v1311 = vld [vmem:[%s1302 + $0x40] sm:$0xff]
      %v1312 = vld [vmem:[%s1302 + $0x48] sm:$0xff]
      %v1313 = vld [vmem:[%s1302 + $0x50] sm:$0xff]
      %v1314 = vld [vmem:[%s1302 + $0x58] sm:$0xff]
      %v1315 = vld [vmem:[%s1302 + $0x60] sm:$0xff]
      %v1316 = vld [vmem:[%s1302 + $0x68] sm:$0xff]
      %v1317 = vld [vmem:[%s1302 + $0x70] sm:$0xff]
      %v1318 = vld [vmem:[%s1302 + $0x78] sm:$0xff]
      %1319 = vmatprep.subr.mxu0 0.0
      %1320 = vmatpush1.msra.mxu0 %v1318
      %1321 = vmatprep.subr.mxu0 0.0
      %1322 = vmatpush1.msra.mxu0 %v1317
      %1323 = vmatprep.subr.mxu0 0.0
      %1324 = vmatpush1.msra.mxu0 %v1316
      %1325 = vmatprep.subr.mxu0 0.0
      %1326 = vmatpush1.msra.mxu0 %v1315
      %1327 = vmatprep.subr.mxu0 0.0
      %1328 = vmatpush1.msra.mxu0 %v1314
      %1329 = vmatprep.subr.mxu0 0.0
      %1330 = vmatpush1.msra.mxu0 %v1313
      %1331 = vmatprep.subr.mxu0 0.0
      %1332 = vmatpush1.msra.mxu0 %v1312
      %1333 = vmatprep.subr.mxu0 0.0
      %1334 = vmatpush1.msra.mxu0 %v1311
      %1335 = vmatprep.subr.mxu0 0.0
      %1336 = vmatpush1.msra.mxu0 %v1310
      %1337 = vmatprep.subr.mxu0 0.0
      %1338 = vmatpush1.msra.mxu0 %v1309
      %1339 = vmatprep.subr.mxu0 0.0
      %1340 = vmatpush1.msra.mxu0 %v1308
      %1341 = vmatprep.subr.mxu0 0.0
      %1342 = vmatpush1.msra.mxu0 %v1307
      %1343 = vmatprep.subr.mxu0 0.0
      %1344 = vmatpush1.msra.mxu0 %v1306
      %1345 = vmatprep.subr.mxu0 0.0
      %1346 = vmatpush1.msra.mxu0 %v1305
      %1347 = vmatprep.subr.mxu0 0.0
      %1348 = vmatpush1.msra.mxu0 %v1304
      %1349 = vmatprep.subr.mxu0 0.0
      %1350 = vmatpush1.msra.mxu0 %v1303
      %1351 = vmatprep.subr.mxu0 0.0
      %1352 = vmatpush2.msra.mxu0 0.0
      %1353 = vmatprep.subr.mxu0 0.0
      %1354 = vmatpush2.msra.mxu0 0.0
      %1355 = vmatprep.subr.mxu0 0.0
      %1356 = vmatpush2.msra.mxu0 0.0
      %1357 = vmatprep.subr.mxu0 0.0
      %1358 = vmatpush2.msra.mxu0 0.0
      %1359 = vmatprep.subr.mxu0 0.0
      %1360 = vmatpush2.msra.mxu0 0.0
      %1361 = vmatprep.subr.mxu0 0.0
      %1362 = vmatpush2.msra.mxu0 0.0
      %1363 = vmatprep.subr.mxu0 0.0
      %1364 = vmatpush2.msra.mxu0 0.0
      %1365 = vmatprep.subr.mxu0 0.0
      %1366 = vmatpush2.msra.mxu0 0.0
      %1367 = vmatprep.subr.mxu0 0.0
      %1368 = vmatpush2.msra.mxu0 0.0
      %1369 = vmatprep.subr.mxu0 0.0
      %1370 = vmatpush2.msra.mxu0 0.0
      %1371 = vmatprep.subr.mxu0 0.0
      %1372 = vmatpush2.msra.mxu0 0.0
      %1373 = vmatprep.subr.mxu0 0.0
      %1374 = vmatpush2.msra.mxu0 0.0
      %1375 = vmatprep.subr.mxu0 0.0
      %1376 = vmatpush2.msra.mxu0 0.0
      %1377 = vmatprep.subr.mxu0 0.0
      %1378 = vmatpush2.msra.mxu0 0.0
      %1379 = vmatprep.subr.mxu0 0.0
      %1380 = vmatpush2.msra.mxu0 0.0
      %1381 = vmatprep.subr.mxu0 0.0
      %1382 = vmatpush2.msra.mxu0 0.0
      %1383 = vmatprep.mubr.f32.mxu0 0.0
      %1384 = vmatmul.mubr.f32.gmra.mxu0 %v1294
      %v1385 = vpop.f32.mrf.mxu0
      %v1386 = vadd.f32 0.0, %v1385
      %v1387 = vpop.f32.mrf.mxu0
      %1388 = vmatprep.mubr.f32.mxu0 0.0
      %1389 = vmatmul.mubr.f32.gmra.mxu0 %v1295
      %v1390 = vpop.f32.mrf.mxu0
      %v1391 = vadd.f32 0.0, %v1390
      %v1392 = vpop.f32.mrf.mxu0
      %1393 = vmatprep.mubr.f32.mxu0 0.0
      %1394 = vmatmul.mubr.f32.gmra.mxu0 %v1296
      %v1395 = vpop.f32.mrf.mxu0
      %v1396 = vadd.f32 0.0, %v1395
      %v1397 = vpop.f32.mrf.mxu0
      %1398 = vmatprep.mubr.f32.mxu0 0.0
      %1399 = vmatmul.mubr.f32.gmra.mxu0 %v1297
      %v1400 = vpop.f32.mrf.mxu0
      %v1401 = vadd.f32 0.0, %v1400
      %v1402 = vpop.f32.mrf.mxu0
      %1403 = vmatprep.mubr.f32.mxu0 0.0
      %1404 = vmatmul.mubr.f32.gmra.mxu0 %v1298
      %v1405 = vpop.f32.mrf.mxu0
      %v1406 = vadd.f32 0.0, %v1405
      %v1407 = vpop.f32.mrf.mxu0
      %1408 = vmatprep.mubr.f32.mxu0 0.0
      %1409 = vmatmul.mubr.f32.gmra.mxu0 %v1299
      %v1410 = vpop.f32.mrf.mxu0
      %v1411 = vadd.f32 0.0, %v1410
      %v1412 = vpop.f32.mrf.mxu0
      %1413 = vmatprep.mubr.f32.mxu0 0.0
      %1414 = vmatmul.mubr.f32.gmra.mxu0 %v1300
      %v1415 = vpop.f32.mrf.mxu0
      %v1416 = vadd.f32 0.0, %v1415
      %v1417 = vpop.f32.mrf.mxu0
      %1418 = vmatprep.mubr.f32.mxu0 0.0
      %1419 = vmatmul.mubr.f32.gmra.mxu0 %v1301
      %v1420 = vpop.f32.mrf.mxu0
      %v1421 = vadd.f32 0.0, %v1420
      %v1422 = vpop.f32.mrf.mxu0
      %1423 = vdwg.mxu0
      %v1424 = vadd.f32 %v1286, %v1386
      %v1425 = vadd.f32 %v1287, %v1391
      %v1426 = vadd.f32 %v1288, %v1396
      %v1427 = vadd.f32 %v1289, %v1401
      %v1428 = vadd.f32 %v1290, %v1406
      %v1429 = vadd.f32 %v1291, %v1411
      %v1430 = vadd.f32 %v1292, %v1416
      %v1431 = vadd.f32 %v1293, %v1421
      %v1432 = vld [vmem:[%s1155 + $0x2] sm:$0xff]
      %v1433 = vld [vmem:[%s1155 + $0x12] sm:$0xff]
      %v1434 = vld [vmem:[%s1155 + $0x22] sm:$0xff]
      %v1435 = vld [vmem:[%s1155 + $0x32] sm:$0xff]
      %v1436 = vld [vmem:[%s1155 + $0x42] sm:$0xff]
      %v1437 = vld [vmem:[%s1155 + $0x52] sm:$0xff]
      %v1438 = vld [vmem:[%s1155 + $0x62] sm:$0xff]
      %v1439 = vld [vmem:[%s1155 + $0x72] sm:$0xff]
      %s1440 = scalar_lea.vmem %s3, 1024
      %v1441 = vld [vmem:[%s1440] sm:$0xff]
      %v1442 = vld [vmem:[%s1440 + $0x8] sm:$0xff]
      %v1443 = vld [vmem:[%s1440 + $0x10] sm:$0xff]
      %v1444 = vld [vmem:[%s1440 + $0x18] sm:$0xff]
      %v1445 = vld [vmem:[%s1440 + $0x20] sm:$0xff]
      %v1446 = vld [vmem:[%s1440 + $0x28] sm:$0xff]
      %v1447 = vld [vmem:[%s1440 + $0x30] sm:$0xff]
      %v1448 = vld [vmem:[%s1440 + $0x38] sm:$0xff]
      %v1449 = vld [vmem:[%s1440 + $0x40] sm:$0xff]
      %v1450 = vld [vmem:[%s1440 + $0x48] sm:$0xff]
      %v1451 = vld [vmem:[%s1440 + $0x50] sm:$0xff]
      %v1452 = vld [vmem:[%s1440 + $0x58] sm:$0xff]
      %v1453 = vld [vmem:[%s1440 + $0x60] sm:$0xff]
      %v1454 = vld [vmem:[%s1440 + $0x68] sm:$0xff]
      %v1455 = vld [vmem:[%s1440 + $0x70] sm:$0xff]
      %v1456 = vld [vmem:[%s1440 + $0x78] sm:$0xff]
      %1457 = vmatprep.subr.mxu0 0.0
      %1458 = vmatpush1.msra.mxu0 %v1456
      %1459 = vmatprep.subr.mxu0 0.0
      %1460 = vmatpush1.msra.mxu0 %v1455
      %1461 = vmatprep.subr.mxu0 0.0
      %1462 = vmatpush1.msra.mxu0 %v1454
      %1463 = vmatprep.subr.mxu0 0.0
      %1464 = vmatpush1.msra.mxu0 %v1453
      %1465 = vmatprep.subr.mxu0 0.0
      %1466 = vmatpush1.msra.mxu0 %v1452
      %1467 = vmatprep.subr.mxu0 0.0
      %1468 = vmatpush1.msra.mxu0 %v1451
      %1469 = vmatprep.subr.mxu0 0.0
      %1470 = vmatpush1.msra.mxu0 %v1450
      %1471 = vmatprep.subr.mxu0 0.0
      %1472 = vmatpush1.msra.mxu0 %v1449
      %1473 = vmatprep.subr.mxu0 0.0
      %1474 = vmatpush1.msra.mxu0 %v1448
      %1475 = vmatprep.subr.mxu0 0.0
      %1476 = vmatpush1.msra.mxu0 %v1447
      %1477 = vmatprep.subr.mxu0 0.0
      %1478 = vmatpush1.msra.mxu0 %v1446
      %1479 = vmatprep.subr.mxu0 0.0
      %1480 = vmatpush1.msra.mxu0 %v1445
      %1481 = vmatprep.subr.mxu0 0.0
      %1482 = vmatpush1.msra.mxu0 %v1444
      %1483 = vmatprep.subr.mxu0 0.0
      %1484 = vmatpush1.msra.mxu0 %v1443
      %1485 = vmatprep.subr.mxu0 0.0
      %1486 = vmatpush1.msra.mxu0 %v1442
      %1487 = vmatprep.subr.mxu0 0.0
      %1488 = vmatpush1.msra.mxu0 %v1441
      %1489 = vmatprep.subr.mxu0 0.0
      %1490 = vmatpush2.msra.mxu0 0.0
      %1491 = vmatprep.subr.mxu0 0.0
      %1492 = vmatpush2.msra.mxu0 0.0
      %1493 = vmatprep.subr.mxu0 0.0
      %1494 = vmatpush2.msra.mxu0 0.0
      %1495 = vmatprep.subr.mxu0 0.0
      %1496 = vmatpush2.msra.mxu0 0.0
      %1497 = vmatprep.subr.mxu0 0.0
      %1498 = vmatpush2.msra.mxu0 0.0
      %1499 = vmatprep.subr.mxu0 0.0
      %1500 = vmatpush2.msra.mxu0 0.0
      %1501 = vmatprep.subr.mxu0 0.0
      %1502 = vmatpush2.msra.mxu0 0.0
      %1503 = vmatprep.subr.mxu0 0.0
      %1504 = vmatpush2.msra.mxu0 0.0
      %1505 = vmatprep.subr.mxu0 0.0
      %1506 = vmatpush2.msra.mxu0 0.0
      %1507 = vmatprep.subr.mxu0 0.0
      %1508 = vmatpush2.msra.mxu0 0.0
      %1509 = vmatprep.subr.mxu0 0.0
      %1510 = vmatpush2.msra.mxu0 0.0
      %1511 = vmatprep.subr.mxu0 0.0
      %1512 = vmatpush2.msra.mxu0 0.0
      %1513 = vmatprep.subr.mxu0 0.0
      %1514 = vmatpush2.msra.mxu0 0.0
      %1515 = vmatprep.subr.mxu0 0.0
      %1516 = vmatpush2.msra.mxu0 0.0
      %1517 = vmatprep.subr.mxu0 0.0
      %1518 = vmatpush2.msra.mxu0 0.0
      %1519 = vmatprep.subr.mxu0 0.0
      %1520 = vmatpush2.msra.mxu0 0.0
      %1521 = vmatprep.mubr.f32.mxu0 0.0
      %1522 = vmatmul.mubr.f32.gmra.mxu0 %v1432
      %v1523 = vpop.f32.mrf.mxu0
      %v1524 = vadd.f32 0.0, %v1523
      %v1525 = vpop.f32.mrf.mxu0
      %1526 = vmatprep.mubr.f32.mxu0 0.0
      %1527 = vmatmul.mubr.f32.gmra.mxu0 %v1433
      %v1528 = vpop.f32.mrf.mxu0
      %v1529 = vadd.f32 0.0, %v1528
      %v1530 = vpop.f32.mrf.mxu0
      %1531 = vmatprep.mubr.f32.mxu0 0.0
      %1532 = vmatmul.mubr.f32.gmra.mxu0 %v1434
      %v1533 = vpop.f32.mrf.mxu0
      %v1534 = vadd.f32 0.0, %v1533
      %v1535 = vpop.f32.mrf.mxu0
      %1536 = vmatprep.mubr.f32.mxu0 0.0
      %1537 = vmatmul.mubr.f32.gmra.mxu0 %v1435
      %v1538 = vpop.f32.mrf.mxu0
      %v1539 = vadd.f32 0.0, %v1538
      %v1540 = vpop.f32.mrf.mxu0
      %1541 = vmatprep.mubr.f32.mxu0 0.0
      %1542 = vmatmul.mubr.f32.gmra.mxu0 %v1436
      %v1543 = vpop.f32.mrf.mxu0
      %v1544 = vadd.f32 0.0, %v1543
      %v1545 = vpop.f32.mrf.mxu0
      %1546 = vmatprep.mubr.f32.mxu0 0.0
      %1547 = vmatmul.mubr.f32.gmra.mxu0 %v1437
      %v1548 = vpop.f32.mrf.mxu0
      %v1549 = vadd.f32 0.0, %v1548
      %v1550 = vpop.f32.mrf.mxu0
      %1551 = vmatprep.mubr.f32.mxu0 0.0
      %1552 = vmatmul.mubr.f32.gmra.mxu0 %v1438
      %v1553 = vpop.f32.mrf.mxu0
      %v1554 = vadd.f32 0.0, %v1553
      %v1555 = vpop.f32.mrf.mxu0
      %1556 = vmatprep.mubr.f32.mxu0 0.0
      %1557 = vmatmul.mubr.f32.gmra.mxu0 %v1439
      %v1558 = vpop.f32.mrf.mxu0
      %v1559 = vadd.f32 0.0, %v1558
      %v1560 = vpop.f32.mrf.mxu0
      %1561 = vdwg.mxu0
      %v1562 = vadd.f32 %v1424, %v1524
      %v1563 = vadd.f32 %v1425, %v1529
      %v1564 = vadd.f32 %v1426, %v1534
      %v1565 = vadd.f32 %v1427, %v1539
      %v1566 = vadd.f32 %v1428, %v1544
      %v1567 = vadd.f32 %v1429, %v1549
      %v1568 = vadd.f32 %v1430, %v1554
      %v1569 = vadd.f32 %v1431, %v1559
      %1570 = vst [vmem:[%s262] sm:$0xff] %v1562
      %1571 = vst [vmem:[%s262 + $0x8] sm:$0xff] %v1563
      %1572 = vst [vmem:[%s262 + $0x10] sm:$0xff] %v1564
      %1573 = vst [vmem:[%s262 + $0x18] sm:$0xff] %v1565
      %1574 = vst [vmem:[%s262 + $0x20] sm:$0xff] %v1566
      %1575 = vst [vmem:[%s262 + $0x28] sm:$0xff] %v1567
      %1576 = vst [vmem:[%s262 + $0x30] sm:$0xff] %v1568
      %1577 = vst [vmem:[%s262 + $0x38] sm:$0xff] %v1569
      %v1578 = vadd.f32 %v1562, %v1563
      %v1579 = vadd.f32 %v1578, %v1564
      %v1580 = vadd.f32 %v1579, %v1565
      %v1581 = vadd.f32 %v1580, %v1566
      %v1582 = vadd.f32 %v1581, %v1567
      %v1583 = vadd.f32 %v1582, %v1568
      %v1584 = vadd.f32 %v1583, %v1569
      %v1585 = vrot.slane %v1584, 4
      %v1586 = vadd.f32 %v1584, %v1585
      %v1587 = vrot.slane %v1586, 2
      %v1588 = vadd.f32 %v1586, %v1587
      %v1589 = vrot.slane %v1588, 1
      %v1590 = vadd.f32 %v1588, %v1589
      %1591 = vst [vmem:[%s265] sm:$0x1] %v1590
      %v1592 = vmul.f32 %v1562, %v1562
      %v1593 = vmul.f32 %v1563, %v1563
      %v1594 = vmul.f32 %v1564, %v1564
      %v1595 = vmul.f32 %v1565, %v1565
      %v1596 = vmul.f32 %v1566, %v1566
      %v1597 = vmul.f32 %v1567, %v1567
      %v1598 = vmul.f32 %v1568, %v1568
      %v1599 = vmul.f32 %v1569, %v1569
      %v1600 = vadd.f32 %v1592, %v1593
      %v1601 = vadd.f32 %v1600, %v1594
      %v1602 = vadd.f32 %v1601, %v1595
      %v1603 = vadd.f32 %v1602, %v1596
      %v1604 = vadd.f32 %v1603, %v1597
      %v1605 = vadd.f32 %v1604, %v1598
      %v1606 = vadd.f32 %v1605, %v1599
      %v1607 = vrot.slane %v1606, 4
      %v1608 = vadd.f32 %v1606, %v1607
      %v1609 = vrot.slane %v1608, 2
      %v1610 = vadd.f32 %v1608, %v1609
      %v1611 = vrot.slane %v1610, 1
      %v1612 = vadd.f32 %v1610, %v1611
      %1613 = vst [vmem:[%s268] sm:$0x1] %v1612
      %p1614 = scmp.lt.s32.totalorder %s18, 1
      %s1615 = scalar_select %p1614, %s18, 1
      %s1616 = smul.addr %s1615, 8
      %s1617 = smul.addr %s1616, 8
      %s1618 = scalar_lea.vmem %s4, %s1617
      %p1619 = scmp.lt.s32.totalorder %s18, 1
      %s1620 = scalar_select %p1619, %s18, 1
      %s1621 = scalar_lea.vmem %s5, %s1620
      %p1622 = scmp.lt.s32.totalorder %s18, 1
      %s1623 = scalar_select %p1622, %s18, 1
      %s1624 = scalar_lea.vmem %s6, %s1623
      // Predicated region
      $region37: #{resblock_forward.4} parent=35 // pred_check
        %p1625 = pneg %p125
      $region38: #{resblock_forward.4} parent=35 // pred_check_branch
        %1627 = sbr.rel (%p1625) target = $region40
      $region39: #{resblock_forward.4} parent=35 // pred_region
        _
      $region40: #{resblock_forward.4} parent=35 // pred_fallthru
        _
      // Predicated region
      $region41: #{resblock_forward.4} parent=35 // pred_check
        %p1628 = pneg %p151
      $region42: #{resblock_forward.4} parent=35 // pred_check_branch
        %1630 = sbr.rel (%p1628) target = $region44
      $region43: #{resblock_forward.4} parent=35 // pred_region
        _
      $region44: #{resblock_forward.4} parent=35 // pred_fallthru
        _
      // Predicated region
      $region45: #{resblock_forward.4} parent=35 // pred_check
        %p1631 = pneg %p177
      $region46: #{resblock_forward.4} parent=35 // pred_check_branch
        %1633 = sbr.rel (%p1631) target = $region48
      $region47: #{resblock_forward.4} parent=35 // pred_region
        _
      $region48: #{resblock_forward.4} parent=35 // pred_fallthru
        _
    $region36: #{resblock_forward.4} parent=5 // pred_fallthru
      _
    %p1634 = scmp.le.s32.totalorder 2, %s13
    // Predicated region
    $region49: #{resblock_forward.4} parent=5 // pred_check
      %p1635 = pneg %p1634
    $region50: #{resblock_forward.4} parent=5 // pred_check_branch
      %1637 = sbr.rel (%p1635) target = $region52
    $region51: #{resblock_forward.4} parent=5 // pred_region
      %s1638 = ssub.s32 %s13, 2
      // Predicated region
      $region53: #{resblock_forward.4} parent=51 // pred_check
        %p1639 = pneg %p131
      $region54: #{resblock_forward.4} parent=51 // pred_check_branch
        %1641 = sbr.rel (%p1639) target = $region56
      $region55: #{resblock_forward.4} parent=51 // pred_region
        %p1642 = scmp.lt.s32.totalorder %s19, 1
        %s1643 = scalar_select %p1642, %s19, 1
        %s1644 = smul.addr %s1643, 8
        %s1645 = smul.addr %s1644, 8
        %s1646 = scalar_lea.vmem %s4, %s1645
      $region56: #{resblock_forward.4} parent=51 // pred_fallthru
        _
      // Predicated region
      $region57: #{resblock_forward.4} parent=51 // pred_check
        %p1647 = pneg %p157
      $region58: #{resblock_forward.4} parent=51 // pred_check_branch
        %1649 = sbr.rel (%p1647) target = $region60
      $region59: #{resblock_forward.4} parent=51 // pred_region
        %p1650 = scmp.lt.s32.totalorder %s19, 1
        %s1651 = scalar_select %p1650, %s19, 1
        %s1652 = scalar_lea.vmem %s5, %s1651
      $region60: #{resblock_forward.4} parent=51 // pred_fallthru
        _
      // Predicated region
      $region61: #{resblock_forward.4} parent=51 // pred_check
        %p1653 = pneg %p183
      $region62: #{resblock_forward.4} parent=51 // pred_check_branch
        %1655 = sbr.rel (%p1653) target = $region64
      $region63: #{resblock_forward.4} parent=51 // pred_region
        %p1656 = scmp.lt.s32.totalorder %s19, 1
        %s1657 = scalar_select %p1656, %s19, 1
        %s1658 = scalar_lea.vmem %s6, %s1657
      $region64: #{resblock_forward.4} parent=51 // pred_fallthru
        _
    $region52: #{resblock_forward.4} parent=5 // pred_fallthru
      _
  $region6: #{resblock_forward.4} parent=0 // loop_footer
    %s17 = sadd.s32 1, %s13
  $region7: #{resblock_forward.4} parent=0 // loop_footer_branch
    %12 = sbr.rel target = $region3
  $region8: #{resblock_forward.4} parent=0 // loop_exit
    _

// kernel: resblock_forward.3
$region0: #{resblock_forward.3}
  #allocation0 [shape = 'u32[]', space=smem, size = 0x4, offset = 0x4, fixed_abs, tag = 'smem constant byte address 0x4 - core index']
  #allocation1 [shape = 'u32[144,128]{1,0:T(1,128)}', space=vmem, size = 0x12000, scoped, tag = 'internal scratch']
  %s0 = inlined_call_operand.vmem [shape: f32[2,4,9,9,128], index: 0, kind: input, shape index: {}]
  %s1 = inlined_call_operand.vmem [shape: f32[9,128,128], index: 1, kind: input, shape index: {}]
  %s2 = inlined_call_operand.vmem [shape: f32[128,128], index: 2, kind: input, shape index: {}]
  %s3 = inlined_call_operand.vmem [shape: f32[2,8,8,128], index: 3, kind: output, shape index: {0}]
  %s4 = inlined_call_operand.vmem [shape: f32[2,8,8,128], index: 4, kind: output, shape index: {1}]
  %s5 = inlined_call_operand.vmem [shape: f32[2,1,128], index: 5, kind: output, shape index: {2}]
  %s6 = inlined_call_operand.vmem [shape: f32[2,1,128], index: 6, kind: output, shape index: {3}]
  %s7 = inlined_call_operand.vmem [shape: f32[2,1,128], index: 7, kind: output, shape index: {4}]
  %s8 = inlined_call_operand.vmem [shape: f32[2,1,128], index: 8, kind: output, shape index: {5}]
  %9 = xla_tuple %s3, %s4, %s5, %s6, %s7, %s8
  %s10 = sld [smem:[#allocation0]]
  $region85: #{resblock_forward.3} parent=0
    _
  %s12 = ssub.s32 1, %s10
  %s13 = scalar_select 0, %s12, %s10
  loop: start=0, step=1, limit=4
  $region2: #{resblock_forward.3} parent=0 // loop_pre_header
    _
  $region3: #{resblock_forward.3} parent=0 // loop_header
    %s15 = sphi 0, %s19
    %p16 = scmp.ge.s32.totalorder %s15, 4
    %s25 = sphi 0, %s27
    %s28 = sphi 0, %s25
    %s29 = sphi 0, %s28
    %s45 = sphi 0, %s29
    %s49 = sphi 0, %s49
    %s51 = sphi 0, %s49
    %s52 = sphi 0, %s51
    %s66 = sphi 0, %s52
    %s70 = sphi 0, %s70
    %s72 = sphi 0, %s70
    %s73 = sphi 0, %s72
    %s87 = sphi 0, %s73
    %s93 = sphi 0, %s95
    %s96 = sphi 0, %s93
    %s97 = sphi 0, %s96
    %s113 = sphi 0, %s97
    %s119 = sphi 0, %s121
    %s122 = sphi 0, %s119
    %s123 = sphi 0, %s122
    %s139 = sphi 0, %s123
    %s145 = sphi 0, %s147
    %s148 = sphi 0, %s145
    %s149 = sphi 0, %s148
    %s165 = sphi 0, %s149
    %s171 = sphi 0, %s173
    %s174 = sphi 0, %s171
    %s175 = sphi 0, %s174
    %s191 = sphi 0, %s175
    %s197 = sphi 0, %s199
    %s200 = sphi 0, %s197
    %s201 = sphi 0, %s200
    %s217 = sphi 0, %s201
    %s223 = sphi 0, %s225
    %s226 = sphi 0, %s223
    %s227 = sphi 0, %s226
    %s243 = sphi 0, %s227
  $region4: #{resblock_forward.3} parent=0 // loop_header_branch
    %18 = sbr.rel (%p16) target = $region8
  $region5: #{resblock_forward.3} parent=0 // loop_body
    %s20 = ssub.s32 %s15, 1
    %s21 = ssub.s32 %s15, 2
    %s22 = sadd.s32 %s15, 1
    %s23 = ssub.s32 %s15, %s22
    %p24 = scmp.eq.s32.totalorder %s23, 0
    %s26 = sadd.s32 %s25, 1
    %s27 = scalar_select %p24, %s25, %s26
    %p30 = pneg %p24
    %p31 = scmp.eq.s32.totalorder %s15, 1
    %p32 = por %p30, %p31
    %p33 = scmp.ne.s32.totalorder %s25, %s28
    %p34 = scmp.eq.s32.totalorder %s15, 0
    %p35 = por %p33, %p34
    %p36 = scmp.ne.s32.totalorder %s25, %s28
    %p37 = scmp.eq.s32.totalorder %s20, 1
    %p38 = por %p36, %p37
    %p39 = scmp.ne.s32.totalorder %s28, %s29
    %p40 = scmp.eq.s32.totalorder %s20, 0
    %p41 = por %p39, %p40
    %p42 = scmp.ne.s32.totalorder %s28, %s29
    %p43 = scmp.eq.s32.totalorder %s21, 1
    %p44 = por %p42, %p43
    %p46 = scmp.ne.s32.totalorder %s29, %s45
    %p47 = scmp.eq.s32.totalorder %s21, 0
    %p48 = por %p46, %p47
    %s50 = sadd.s32 %s49, 1
    %p53 = scmp.eq.s32.totalorder %s15, 1
    %p54 = scmp.ne.s32.totalorder %s49, %s51
    %p55 = scmp.eq.s32.totalorder %s15, 0
    %p56 = por %p54, %p55
    %p57 = scmp.ne.s32.totalorder %s49, %s51
    %p58 = scmp.eq.s32.totalorder %s20, 1
    %p59 = por %p57, %p58
    %p60 = scmp.ne.s32.totalorder %s51, %s52
    %p61 = scmp.eq.s32.totalorder %s20, 0
    %p62 = por %p60, %p61
    %p63 = scmp.ne.s32.totalorder %s51, %s52
    %p64 = scmp.eq.s32.totalorder %s21, 1
    %p65 = por %p63, %p64
    %p67 = scmp.ne.s32.totalorder %s52, %s66
    %p68 = scmp.eq.s32.totalorder %s21, 0
    %p69 = por %p67, %p68
    %s71 = sadd.s32 %s70, 1
    %p74 = scmp.eq.s32.totalorder %s15, 1
    %p75 = scmp.ne.s32.totalorder %s70, %s72
    %p76 = scmp.eq.s32.totalorder %s15, 0
    %p77 = por %p75, %p76
    %p78 = scmp.ne.s32.totalorder %s70, %s72
    %p79 = scmp.eq.s32.totalorder %s20, 1
    %p80 = por %p78, %p79
    %p81 = scmp.ne.s32.totalorder %s72, %s73
    %p82 = scmp.eq.s32.totalorder %s20, 0
    %p83 = por %p81, %p82
    %p84 = scmp.ne.s32.totalorder %s72, %s73
    %p85 = scmp.eq.s32.totalorder %s21, 1
    %p86 = por %p84, %p85
    %p88 = scmp.ne.s32.totalorder %s73, %s87
    %p89 = scmp.eq.s32.totalorder %s21, 0
    %p90 = por %p88, %p89
    %s91 = ssub.s32 %s15, %s22
    %p92 = scmp.eq.s32.totalorder %s91, 0
    %s94 = sadd.s32 %s93, 1
    %s95 = scalar_select %p92, %s93, %s94
    %p98 = pneg %p92
    %p99 = scmp.eq.s32.totalorder %s15, 1
    %p100 = por %p98, %p99
    %p101 = scmp.ne.s32.totalorder %s93, %s96
    %p102 = scmp.eq.s32.totalorder %s15, 0
    %p103 = por %p101, %p102
    %p104 = scmp.ne.s32.totalorder %s93, %s96
    %p105 = scmp.eq.s32.totalorder %s20, 1
    %p106 = por %p104, %p105
    %p107 = scmp.ne.s32.totalorder %s96, %s97
    %p108 = scmp.eq.s32.totalorder %s20, 0
    %p109 = por %p107, %p108
    %p110 = scmp.ne.s32.totalorder %s96, %s97
    %p111 = scmp.eq.s32.totalorder %s21, 1
    %p112 = por %p110, %p111
    %p114 = scmp.ne.s32.totalorder %s97, %s113
    %p115 = scmp.eq.s32.totalorder %s21, 0
    %p116 = por %p114, %p115
    %s117 = ssub.s32 %s15, %s22
    %p118 = scmp.eq.s32.totalorder %s117, 0
    %s120 = sadd.s32 %s119, 1
    %s121 = scalar_select %p118, %s119, %s120
    %p124 = pneg %p118
    %p125 = scmp.eq.s32.totalorder %s15, 1
    %p126 = por %p124, %p125
    %p127 = scmp.ne.s32.totalorder %s119, %s122
    %p128 = scmp.eq.s32.totalorder %s15, 0
    %p129 = por %p127, %p128
    %p130 = scmp.ne.s32.totalorder %s119, %s122
    %p131 = scmp.eq.s32.totalorder %s20, 1
    %p132 = por %p130, %p131
    %p133 = scmp.ne.s32.totalorder %s122, %s123
    %p134 = scmp.eq.s32.totalorder %s20, 0
    %p135 = por %p133, %p134
    %p136 = scmp.ne.s32.totalorder %s122, %s123
    %p137 = scmp.eq.s32.totalorder %s21, 1
    %p138 = por %p136, %p137
    %p140 = scmp.ne.s32.totalorder %s123, %s139
    %p141 = scmp.eq.s32.totalorder %s21, 0
    %p142 = por %p140, %p141
    %s143 = ssub.s32 %s15, %s22
    %p144 = scmp.eq.s32.totalorder %s143, 0
    %s146 = sadd.s32 %s145, 1
    %s147 = scalar_select %p144, %s145, %s146
    %p150 = pneg %p144
    %p151 = scmp.eq.s32.totalorder %s15, 1
    %p152 = por %p150, %p151
    %p153 = scmp.ne.s32.totalorder %s145, %s148
    %p154 = scmp.eq.s32.totalorder %s15, 0
    %p155 = por %p153, %p154
    %p156 = scmp.ne.s32.totalorder %s145, %s148
    %p157 = scmp.eq.s32.totalorder %s20, 1
    %p158 = por %p156, %p157
    %p159 = scmp.ne.s32.totalorder %s148, %s149
    %p160 = scmp.eq.s32.totalorder %s20, 0
    %p161 = por %p159, %p160
    %p162 = scmp.ne.s32.totalorder %s148, %s149
    %p163 = scmp.eq.s32.totalorder %s21, 1
    %p164 = por %p162, %p163
    %p166 = scmp.ne.s32.totalorder %s149, %s165
    %p167 = scmp.eq.s32.totalorder %s21, 0
    %p168 = por %p166, %p167
    %s169 = ssub.s32 %s15, %s22
    %p170 = scmp.eq.s32.totalorder %s169, 0
    %s172 = sadd.s32 %s171, 1
    %s173 = scalar_select %p170, %s171, %s172
    %p176 = pneg %p170
    %p177 = scmp.eq.s32.totalorder %s15, 1
    %p178 = por %p176, %p177
    %p179 = scmp.ne.s32.totalorder %s171, %s174
    %p180 = scmp.eq.s32.totalorder %s15, 0
    %p181 = por %p179, %p180
    %p182 = scmp.ne.s32.totalorder %s171, %s174
    %p183 = scmp.eq.s32.totalorder %s20, 1
    %p184 = por %p182, %p183
    %p185 = scmp.ne.s32.totalorder %s174, %s175
    %p186 = scmp.eq.s32.totalorder %s20, 0
    %p187 = por %p185, %p186
    %p188 = scmp.ne.s32.totalorder %s174, %s175
    %p189 = scmp.eq.s32.totalorder %s21, 1
    %p190 = por %p188, %p189
    %p192 = scmp.ne.s32.totalorder %s175, %s191
    %p193 = scmp.eq.s32.totalorder %s21, 0
    %p194 = por %p192, %p193
    %s195 = ssub.s32 %s15, %s22
    %p196 = scmp.eq.s32.totalorder %s195, 0
    %s198 = sadd.s32 %s197, 1
    %s199 = scalar_select %p196, %s197, %s198
    %p202 = pneg %p196
    %p203 = scmp.eq.s32.totalorder %s15, 1
    %p204 = por %p202, %p203
    %p205 = scmp.ne.s32.totalorder %s197, %s200
    %p206 = scmp.eq.s32.totalorder %s15, 0
    %p207 = por %p205, %p206
    %p208 = scmp.ne.s32.totalorder %s197, %s200
    %p209 = scmp.eq.s32.totalorder %s20, 1
    %p210 = por %p208, %p209
    %p211 = scmp.ne.s32.totalorder %s200, %s201
    %p212 = scmp.eq.s32.totalorder %s20, 0
    %p213 = por %p211, %p212
    %p214 = scmp.ne.s32.totalorder %s200, %s201
    %p215 = scmp.eq.s32.totalorder %s21, 1
    %p216 = por %p214, %p215
    %p218 = scmp.ne.s32.totalorder %s201, %s217
    %p219 = scmp.eq.s32.totalorder %s21, 0
    %p220 = por %p218, %p219
    %s221 = ssub.s32 %s15, %s22
    %p222 = scmp.eq.s32.totalorder %s221, 0
    %s224 = sadd.s32 %s223, 1
    %s225 = scalar_select %p222, %s223, %s224
    %p228 = pneg %p222
    %p229 = scmp.eq.s32.totalorder %s15, 1
    %p230 = por %p228, %p229
    %p231 = scmp.ne.s32.totalorder %s223, %s226
    %p232 = scmp.eq.s32.totalorder %s15, 0
    %p233 = por %p231, %p232
    %p234 = scmp.ne.s32.totalorder %s223, %s226
    %p235 = scmp.eq.s32.totalorder %s20, 1
    %p236 = por %p234, %p235
    %p237 = scmp.ne.s32.totalorder %s226, %s227
    %p238 = scmp.eq.s32.totalorder %s20, 0
    %p239 = por %p237, %p238
    %p240 = scmp.ne.s32.totalorder %s226, %s227
    %p241 = scmp.eq.s32.totalorder %s21, 1
    %p242 = por %p240, %p241
    %p244 = scmp.ne.s32.totalorder %s227, %s243
    %p245 = scmp.eq.s32.totalorder %s21, 0
    %p246 = por %p244, %p245
    %p247 = scmp.le.s32.totalorder 1, %s15
    %p248 = scmp.lt.s32.totalorder %s15, 3
    %p249 = pnand %p247, %p248
    %p250 = pneg %p249
    // Predicated region
    $region9: #{resblock_forward.3} parent=5 // pred_check
      _
    $region10: #{resblock_forward.3} parent=5 // pred_check_branch
      %252 = sbr.rel (%p249) target = $region12
    $region11: #{resblock_forward.3} parent=5 // pred_region
      %s253 = ssub.s32 %s15, 1
      // Predicated region
      $region13: #{resblock_forward.3} parent=11 // pred_check
        %p254 = pneg %p62
      $region14: #{resblock_forward.3} parent=11 // pred_check_branch
        %256 = sbr.rel (%p254) target = $region16
      $region15: #{resblock_forward.3} parent=11 // pred_region
        _
      $region16: #{resblock_forward.3} parent=11 // pred_fallthru
        _
      // Predicated region
      $region17: #{resblock_forward.3} parent=11 // pred_check
        %p257 = pneg %p83
      $region18: #{resblock_forward.3} parent=11 // pred_check_branch
        %259 = sbr.rel (%p257) target = $region20
      $region19: #{resblock_forward.3} parent=11 // pred_region
        _
      $region20: #{resblock_forward.3} parent=11 // pred_fallthru
        _
    $region12: #{resblock_forward.3} parent=5 // pred_fallthru
      _
    %p260 = scmp.lt.s32.totalorder %s15, 2
    // Predicated region
    $region21: #{resblock_forward.3} parent=5 // pred_check
      %p261 = pneg %p260
    $region22: #{resblock_forward.3} parent=5 // pred_check_branch
      %263 = sbr.rel (%p261) target = $region24
    $region23: #{resblock_forward.3} parent=5 // pred_region
      // Predicated region
      $region25: #{resblock_forward.3} parent=23 // pred_check
        %p264 = pneg %p35
      $region26: #{resblock_forward.3} parent=23 // pred_check_branch
        %266 = sbr.rel (%p264) target = $region28
      $region27: #{resblock_forward.3} parent=23 // pred_region
        %p267 = scmp.lt.s32.totalorder %s15, 1
        %s268 = scalar_select %p267, %s15, 1
        %s269 = smul.addr %s268, 72
        %s270 = smul.addr %s269, 8
        %s271 = scalar_lea.vmem %s0, %s270
      $region28: #{resblock_forward.3} parent=23 // pred_fallthru
        _
    $region24: #{resblock_forward.3} parent=5 // pred_fallthru
      _
    %p272 = scmp.le.s32.totalorder 1, %s15
    %p273 = scmp.lt.s32.totalorder %s15, 3
    %p274 = pnand %p272, %p273
    %p275 = pneg %p274
    // Predicated region
    $region29: #{resblock_forward.3} parent=5 // pred_check
      _
    $region30: #{resblock_forward.3} parent=5 // pred_check_branch
      %277 = sbr.rel (%p274) target = $region32
    $region31: #{resblock_forward.3} parent=5 // pred_region
      %s278 = ssub.s32 %s15, 1
      %p279 = scmp.lt.s32.totalorder %s20, 1
      %s280 = scalar_select %p279, %s20, 1
      %s281 = smul.addr %s280, 72
      %s282 = smul.addr %s281, 8
      %s283 = scalar_lea.vmem %s0, %s282
      %p284 = pneg %p41
      %p285 = pneg %p38
      %p286 = pneg %p62
      %p287 = pneg %p59
      %p288 = pneg %p83
      %p289 = pneg %p80
      %p290 = pneg %p109
      %p291 = pneg %p106
      %p292 = scmp.lt.s32.totalorder %s20, 1
      %s293 = scalar_select %p292, %s20, 1
      %s294 = smul.addr %s293, 8
      %s295 = smul.addr %s294, 8
      %s296 = scalar_lea.vmem %s3, %s295
      %p297 = pneg %p135
      %p298 = pneg %p132
      %p299 = scmp.lt.s32.totalorder %s20, 1
      %s300 = scalar_select %p299, %s20, 1
      %s301 = smul.addr %s300, 8
      %s302 = smul.addr %s301, 8
      %s303 = scalar_lea.vmem %s4, %s302
      %p304 = pneg %p161
      %p305 = pneg %p158
      %p306 = scmp.lt.s32.totalorder %s20, 1
      %s307 = scalar_select %p306, %s20, 1
      %s308 = scalar_lea.vmem %s5, %s307
      %p309 = pneg %p187
      %p310 = pneg %p184
      %p311 = scmp.lt.s32.totalorder %s20, 1
      %s312 = scalar_select %p311, %s20, 1
      %s313 = scalar_lea.vmem %s6, %s312
      %p314 = pneg %p213
      %p315 = pneg %p210
      %p316 = scmp.lt.s32.totalorder %s20, 1
      %s317 = scalar_select %p316, %s20, 1
      %s318 = scalar_lea.vmem %s7, %s317
      %p319 = pneg %p239
      %p320 = pneg %p236
      %p321 = scmp.lt.s32.totalorder %s20, 1
      %s322 = scalar_select %p321, %s20, 1
      %s323 = scalar_lea.vmem %s8, %s322
      %p324 = scmp.lt.s32.totalorder %s20, 1
      %s325 = scalar_select %p324, %s20, 1
      %s326 = smul.addr %s325, 72
      %s327 = smul.addr %s326, 8
      %s328 = scalar_lea.vmem %s0, %s327
      %p329 = scmp.lt.s32.totalorder %s20, 1
      %s330 = scalar_select %p329, %s20, 1
      %s331 = smul.addr %s330, 8
      %s332 = smul.addr %s331, 8
      %s333 = scalar_lea.vmem %s3, %s332
      %p334 = scmp.lt.s32.totalorder %s20, 1
      %s335 = scalar_select %p334, %s20, 1
      %s336 = smul.addr %s335, 8
      %s337 = smul.addr %s336, 8
      %s338 = scalar_lea.vmem %s4, %s337
      %p339 = scmp.lt.s32.totalorder %s20, 1
      %s340 = scalar_select %p339, %s20, 1
      %s341 = scalar_lea.vmem %s5, %s340
      %p342 = scmp.lt.s32.totalorder %s20, 1
      %s343 = scalar_select %p342, %s20, 1
      %s344 = scalar_lea.vmem %s6, %s343
      %p345 = scmp.lt.s32.totalorder %s20, 1
      %s346 = scalar_select %p345, %s20, 1
      %s347 = scalar_lea.vmem %s7, %s346
      %p348 = scmp.lt.s32.totalorder %s20, 1
      %s349 = scalar_select %p348, %s20, 1
      %s350 = scalar_lea.vmem %s8, %s349
      %v351 = vld [vmem:[%s328] sm:$0xff]
      %v352 = vld [vmem:[%s328 + $0x10] sm:$0xff]
      %v353 = vld [vmem:[%s328 + $0x20] sm:$0xff]
      %v354 = vld [vmem:[%s328 + $0x30] sm:$0xff]
      %v355 = vld [vmem:[%s328 + $0x40] sm:$0xff]
      %v356 = vld [vmem:[%s328 + $0x50] sm:$0xff]
      %v357 = vld [vmem:[%s328 + $0x60] sm:$0xff]
      %v358 = vld [vmem:[%s328 + $0x70] sm:$0xff]
      %v359 = vld [vmem:[%s1] sm:$0xff]
      %v360 = vld [vmem:[%s1 + $0x8] sm:$0xff]
      %v361 = vld [vmem:[%s1 + $0x10] sm:$0xff]
      %v362 = vld [vmem:[%s1 + $0x18] sm:$0xff]
      %v363 = vld [vmem:[%s1 + $0x20] sm:$0xff]
      %v364 = vld [vmem:[%s1 + $0x28] sm:$0xff]
      %v365 = vld [vmem:[%s1 + $0x30] sm:$0xff]
      %v366 = vld [vmem:[%s1 + $0x38] sm:$0xff]
      %v367 = vld [vmem:[%s1 + $0x40] sm:$0xff]
      %v368 = vld [vmem:[%s1 + $0x48] sm:$0xff]
      %v369 = vld [vmem:[%s1 + $0x50] sm:$0xff]
      %v370 = vld [vmem:[%s1 + $0x58] sm:$0xff]
      %v371 = vld [vmem:[%s1 + $0x60] sm:$0xff]
      %v372 = vld [vmem:[%s1 + $0x68] sm:$0xff]
      %v373 = vld [vmem:[%s1 + $0x70] sm:$0xff]
      %v374 = vld [vmem:[%s1 + $0x78] sm:$0xff]
      %s375 = scalar_lea.vmem %s328, 144
      %v376 = vld [vmem:[%s375] sm:$0xff]
      %v377 = vld [vmem:[%s375 + $0x10] sm:$0xff]
      %v378 = vld [vmem:[%s375 + $0x20] sm:$0xff]
      %v379 = vld [vmem:[%s375 + $0x30] sm:$0xff]
      %v380 = vld [vmem:[%s375 + $0x40] sm:$0xff]
      %v381 = vld [vmem:[%s375 + $0x50] sm:$0xff]
      %v382 = vld [vmem:[%s375 + $0x60] sm:$0xff]
      %v383 = vld [vmem:[%s375 + $0x70] sm:$0xff]
      %s384 = scalar_lea.vmem %s1, 128
      %v385 = vld [vmem:[%s384] sm:$0xff]
      %v386 = vld [vmem:[%s384 + $0x8] sm:$0xff]
      %v387 = vld [vmem:[%s384 + $0x10] sm:$0xff]
      %v388 = vld [vmem:[%s384 + $0x18] sm:$0xff]
      %v389 = vld [vmem:[%s384 + $0x20] sm:$0xff]
      %v390 = vld [vmem:[%s384 + $0x28] sm:$0xff]
      %v391 = vld [vmem:[%s384 + $0x30] sm:$0xff]
      %v392 = vld [vmem:[%s384 + $0x38] sm:$0xff]
      %v393 = vld [vmem:[%s384 + $0x40] sm:$0xff]
      %v394 = vld [vmem:[%s384 + $0x48] sm:$0xff]
      %v395 = vld [vmem:[%s384 + $0x50] sm:$0xff]
      %v396 = vld [vmem:[%s384 + $0x58] sm:$0xff]
      %v397 = vld [vmem:[%s384 + $0x60] sm:$0xff]
      %v398 = vld [vmem:[%s384 + $0x68] sm:$0xff]
      %v399 = vld [vmem:[%s384 + $0x70] sm:$0xff]
      %v400 = vld [vmem:[%s384 + $0x78] sm:$0xff]
      %401 = vmatprep.subr.mxu0 0.0
      %402 = vmatpush1.msra.mxu0 %v400
      %403 = vmatprep.subr.mxu0 0.0
      %404 = vmatpush1.msra.mxu0 %v399
      %405 = vmatprep.subr.mxu0 0.0
      %406 = vmatpush1.msra.mxu0 %v398
      %407 = vmatprep.subr.mxu0 0.0
      %408 = vmatpush1.msra.mxu0 %v397
      %409 = vmatprep.subr.mxu0 0.0
      %410 = vmatpush1.msra.mxu0 %v396
      %411 = vmatprep.subr.mxu0 0.0
      %412 = vmatpush1.msra.mxu0 %v395
      %413 = vmatprep.subr.mxu0 0.0
      %414 = vmatpush1.msra.mxu0 %v394
      %415 = vmatprep.subr.mxu0 0.0
      %416 = vmatpush1.msra.mxu0 %v393
      %417 = vmatprep.subr.mxu0 0.0
      %418 = vmatpush1.msra.mxu0 %v392
      %419 = vmatprep.subr.mxu0 0.0
      %420 = vmatpush1.msra.mxu0 %v391
      %421 = vmatprep.subr.mxu0 0.0
      %422 = vmatpush1.msra.mxu0 %v390
      %423 = vmatprep.subr.mxu0 0.0
      %424 = vmatpush1.msra.mxu0 %v389
      %425 = vmatprep.subr.mxu0 0.0
      %426 = vmatpush1.msra.mxu0 %v388
      %427 = vmatprep.subr.mxu0 0.0
      %428 = vmatpush1.msra.mxu0 %v387
      %429 = vmatprep.subr.mxu0 0.0
      %430 = vmatpush1.msra.mxu0 %v386
      %431 = vmatprep.subr.mxu0 0.0
      %432 = vmatpush1.msra.mxu0 %v385
      %433 = vmatprep.subr.mxu0 0.0
      %434 = vmatpush2.msra.mxu0 0.0
      %435 = vmatprep.subr.mxu0 0.0
      %436 = vmatpush2.msra.mxu0 0.0
      %437 = vmatprep.subr.mxu0 0.0
      %438 = vmatpush2.msra.mxu0 0.0
      %439 = vmatprep.subr.mxu0 0.0
      %440 = vmatpush2.msra.mxu0 0.0
      %441 = vmatprep.subr.mxu0 0.0
      %442 = vmatpush2.msra.mxu0 0.0
      %443 = vmatprep.subr.mxu0 0.0
      %444 = vmatpush2.msra.mxu0 0.0
      %445 = vmatprep.subr.mxu0 0.0
      %446 = vmatpush2.msra.mxu0 0.0
      %447 = vmatprep.subr.mxu0 0.0
      %448 = vmatpush2.msra.mxu0 0.0
      %449 = vmatprep.subr.mxu0 0.0
      %450 = vmatpush2.msra.mxu0 0.0
      %451 = vmatprep.subr.mxu0 0.0
      %452 = vmatpush2.msra.mxu0 0.0
      %453 = vmatprep.subr.mxu0 0.0
      %454 = vmatpush2.msra.mxu0 0.0
      %455 = vmatprep.subr.mxu0 0.0
      %456 = vmatpush2.msra.mxu0 0.0
      %457 = vmatprep.subr.mxu0 0.0
      %458 = vmatpush2.msra.mxu0 0.0
      %459 = vmatprep.subr.mxu0 0.0
      %460 = vmatpush2.msra.mxu0 0.0
      %461 = vmatprep.subr.mxu0 0.0
      %462 = vmatpush2.msra.mxu0 0.0
      %463 = vmatprep.subr.mxu0 0.0
      %464 = vmatpush2.msra.mxu0 0.0
      %465 = vmatprep.mubr.f32.mxu0 0.0
      %466 = vmatmul.mubr.f32.gmra.mxu0 %v376
      %v467 = vpop.f32.mrf.mxu0
      %v468 = vadd.f32 0.0, %v467
      %v469 = vpop.f32.mrf.mxu0
      %470 = vmatprep.mubr.f32.mxu0 0.0
      %471 = vmatmul.mubr.f32.gmra.mxu0 %v377
      %v472 = vpop.f32.mrf.mxu0
      %v473 = vadd.f32 0.0, %v472
      %v474 = vpop.f32.mrf.mxu0
      %475 = vmatprep.mubr.f32.mxu0 0.0
      %476 = vmatmul.mubr.f32.gmra.mxu0 %v378
      %v477 = vpop.f32.mrf.mxu0
      %v478 = vadd.f32 0.0, %v477
      %v479 = vpop.f32.mrf.mxu0
      %480 = vmatprep.mubr.f32.mxu0 0.0
      %481 = vmatmul.mubr.f32.gmra.mxu0 %v379
      %v482 = vpop.f32.mrf.mxu0
      %v483 = vadd.f32 0.0, %v482
      %v484 = vpop.f32.mrf.mxu0
      %485 = vmatprep.mubr.f32.mxu0 0.0
      %486 = vmatmul.mubr.f32.gmra.mxu0 %v380
      %v487 = vpop.f32.mrf.mxu0
      %v488 = vadd.f32 0.0, %v487
      %v489 = vpop.f32.mrf.mxu0
      %490 = vmatprep.mubr.f32.mxu0 0.0
      %491 = vmatmul.mubr.f32.gmra.mxu0 %v381
      %v492 = vpop.f32.mrf.mxu0
      %v493 = vadd.f32 0.0, %v492
      %v494 = vpop.f32.mrf.mxu0
      %495 = vmatprep.mubr.f32.mxu0 0.0
      %496 = vmatmul.mubr.f32.gmra.mxu0 %v382
      %v497 = vpop.f32.mrf.mxu0
      %v498 = vadd.f32 0.0, %v497
      %v499 = vpop.f32.mrf.mxu0
      %500 = vmatprep.mubr.f32.mxu0 0.0
      %501 = vmatmul.mubr.f32.gmra.mxu0 %v383
      %v502 = vpop.f32.mrf.mxu0
      %v503 = vadd.f32 0.0, %v502
      %v504 = vpop.f32.mrf.mxu0
      %505 = vdwg.mxu0
      %506 = vmatprep.subr.mxu0 0.0
      %507 = vmatpush1.msra.mxu0 %v374
      %508 = vmatprep.subr.mxu0 0.0
      %509 = vmatpush1.msra.mxu0 %v373
      %510 = vmatprep.subr.mxu0 0.0
      %511 = vmatpush1.msra.mxu0 %v372
      %512 = vmatprep.subr.mxu0 0.0
      %513 = vmatpush1.msra.mxu0 %v371
      %514 = vmatprep.subr.mxu0 0.0
      %515 = vmatpush1.msra.mxu0 %v370
      %516 = vmatprep.subr.mxu0 0.0
      %517 = vmatpush1.msra.mxu0 %v369
      %518 = vmatprep.subr.mxu0 0.0
      %519 = vmatpush1.msra.mxu0 %v368
      %520 = vmatprep.subr.mxu0 0.0
      %521 = vmatpush1.msra.mxu0 %v367
      %522 = vmatprep.subr.mxu0 0.0
      %523 = vmatpush1.msra.mxu0 %v366
      %524 = vmatprep.subr.mxu0 0.0
      %525 = vmatpush1.msra.mxu0 %v365
      %526 = vmatprep.subr.mxu0 0.0
      %527 = vmatpush1.msra.mxu0 %v364
      %528 = vmatprep.subr.mxu0 0.0
      %529 = vmatpush1.msra.mxu0 %v363
      %530 = vmatprep.subr.mxu0 0.0
      %531 = vmatpush1.msra.mxu0 %v362
      %532 = vmatprep.subr.mxu0 0.0
      %533 = vmatpush1.msra.mxu0 %v361
      %534 = vmatprep.subr.mxu0 0.0
      %535 = vmatpush1.msra.mxu0 %v360
      %536 = vmatprep.subr.mxu0 0.0
      %537 = vmatpush1.msra.mxu0 %v359
      %538 = vmatprep.subr.mxu0 0.0
      %539 = vmatpush2.msra.mxu0 0.0
      %540 = vmatprep.subr.mxu0 0.0
      %541 = vmatpush2.msra.mxu0 0.0
      %542 = vmatprep.subr.mxu0 0.0
      %543 = vmatpush2.msra.mxu0 0.0
      %544 = vmatprep.subr.mxu0 0.0
      %545 = vmatpush2.msra.mxu0 0.0
      %546 = vmatprep.subr.mxu0 0.0
      %547 = vmatpush2.msra.mxu0 0.0
      %548 = vmatprep.subr.mxu0 0.0
      %549 = vmatpush2.msra.mxu0 0.0
      %550 = vmatprep.subr.mxu0 0.0
      %551 = vmatpush2.msra.mxu0 0.0
      %552 = vmatprep.subr.mxu0 0.0
      %553 = vmatpush2.msra.mxu0 0.0
      %554 = vmatprep.subr.mxu0 0.0
      %555 = vmatpush2.msra.mxu0 0.0
      %556 = vmatprep.subr.mxu0 0.0
      %557 = vmatpush2.msra.mxu0 0.0
      %558 = vmatprep.subr.mxu0 0.0
      %559 = vmatpush2.msra.mxu0 0.0
      %560 = vmatprep.subr.mxu0 0.0
      %561 = vmatpush2.msra.mxu0 0.0
      %562 = vmatprep.subr.mxu0 0.0
      %563 = vmatpush2.msra.mxu0 0.0
      %564 = vmatprep.subr.mxu0 0.0
      %565 = vmatpush2.msra.mxu0 0.0
      %566 = vmatprep.subr.mxu0 0.0
      %567 = vmatpush2.msra.mxu0 0.0
      %568 = vmatprep.subr.mxu0 0.0
      %569 = vmatpush2.msra.mxu0 0.0
      %570 = vmatprep.mubr.f32.mxu0 0.0
      %571 = vmatmul.mubr.f32.gmra.mxu0 %v351
      %v572 = vpop.f32.mrf.mxu0
      %v573 = vadd.f32 %v468, %v572
      %v574 = vpop.f32.mrf.mxu0
      %575 = vmatprep.mubr.f32.mxu0 0.0
      %576 = vmatmul.mubr.f32.gmra.mxu0 %v352
      %v577 = vpop.f32.mrf.mxu0
      %v578 = vadd.f32 %v473, %v577
      %v579 = vpop.f32.mrf.mxu0
      %580 = vmatprep.mubr.f32.mxu0 0.0
      %581 = vmatmul.mubr.f32.gmra.mxu0 %v353
      %v582 = vpop.f32.mrf.mxu0
      %v583 = vadd.f32 %v478, %v582
      %v584 = vpop.f32.mrf.mxu0
      %585 = vmatprep.mubr.f32.mxu0 0.0
      %586 = vmatmul.mubr.f32.gmra.mxu0 %v354
      %v587 = vpop.f32.mrf.mxu0
      %v588 = vadd.f32 %v483, %v587
      %v589 = vpop.f32.mrf.mxu0
      %590 = vmatprep.mubr.f32.mxu0 0.0
      %591 = vmatmul.mubr.f32.gmra.mxu0 %v355
      %v592 = vpop.f32.mrf.mxu0
      %v593 = vadd.f32 %v488, %v592
      %v594 = vpop.f32.mrf.mxu0
      %595 = vmatprep.mubr.f32.mxu0 0.0
      %596 = vmatmul.mubr.f32.gmra.mxu0 %v356
      %v597 = vpop.f32.mrf.mxu0
      %v598 = vadd.f32 %v493, %v597
      %v599 = vpop.f32.mrf.mxu0
      %600 = vmatprep.mubr.f32.mxu0 0.0
      %601 = vmatmul.mubr.f32.gmra.mxu0 %v357
      %v602 = vpop.f32.mrf.mxu0
      %v603 = vadd.f32 %v498, %v602
      %v604 = vpop.f32.mrf.mxu0
      %605 = vmatprep.mubr.f32.mxu0 0.0
      %606 = vmatmul.mubr.f32.gmra.mxu0 %v358
      %v607 = vpop.f32.mrf.mxu0
      %v608 = vadd.f32 %v503, %v607
      %v609 = vpop.f32.mrf.mxu0
      %610 = vdwg.mxu0
      %v611 = vld [vmem:[%s328 + $0x1] sm:$0xff]
      %v612 = vld [vmem:[%s328 + $0x11] sm:$0xff]
      %v613 = vld [vmem:[%s328 + $0x21] sm:$0xff]
      %v614 = vld [vmem:[%s328 + $0x31] sm:$0xff]
      %v615 = vld [vmem:[%s328 + $0x41] sm:$0xff]
      %v616 = vld [vmem:[%s328 + $0x51] sm:$0xff]
      %v617 = vld [vmem:[%s328 + $0x61] sm:$0xff]
      %v618 = vld [vmem:[%s328 + $0x71] sm:$0xff]
      %s619 = scalar_lea.vmem %s1, 256
      %v620 = vld [vmem:[%s619] sm:$0xff]
      %v621 = vld [vmem:[%s619 + $0x8] sm:$0xff]
      %v622 = vld [vmem:[%s619 + $0x10] sm:$0xff]
      %v623 = vld [vmem:[%s619 + $0x18] sm:$0xff]
      %v624 = vld [vmem:[%s619 + $0x20] sm:$0xff]
      %v625 = vld [vmem:[%s619 + $0x28] sm:$0xff]
      %v626 = vld [vmem:[%s619 + $0x30] sm:$0xff]
      %v627 = vld [vmem:[%s619 + $0x38] sm:$0xff]
      %v628 = vld [vmem:[%s619 + $0x40] sm:$0xff]
      %v629 = vld [vmem:[%s619 + $0x48] sm:$0xff]
      %v630 = vld [vmem:[%s619 + $0x50] sm:$0xff]
      %v631 = vld [vmem:[%s619 + $0x58] sm:$0xff]
      %v632 = vld [vmem:[%s619 + $0x60] sm:$0xff]
      %v633 = vld [vmem:[%s619 + $0x68] sm:$0xff]
      %v634 = vld [vmem:[%s619 + $0x70] sm:$0xff]
      %v635 = vld [vmem:[%s619 + $0x78] sm:$0xff]
      %636 = vmatprep.subr.mxu0 0.0
      %637 = vmatpush1.msra.mxu0 %v635
      %638 = vmatprep.subr.mxu0 0.0
      %639 = vmatpush1.msra.mxu0 %v634
      %640 = vmatprep.subr.mxu0 0.0
      %641 = vmatpush1.msra.mxu0 %v633
      %642 = vmatprep.subr.mxu0 0.0
      %643 = vmatpush1.msra.mxu0 %v632
      %644 = vmatprep.subr.mxu0 0.0
      %645 = vmatpush1.msra.mxu0 %v631
      %646 = vmatprep.subr.mxu0 0.0
      %647 = vmatpush1.msra.mxu0 %v630
      %648 = vmatprep.subr.mxu0 0.0
      %649 = vmatpush1.msra.mxu0 %v629
      %650 = vmatprep.subr.mxu0 0.0
      %651 = vmatpush1.msra.mxu0 %v628
      %652 = vmatprep.subr.mxu0 0.0
      %653 = vmatpush1.msra.mxu0 %v627
      %654 = vmatprep.subr.mxu0 0.0
      %655 = vmatpush1.msra.mxu0 %v626
      %656 = vmatprep.subr.mxu0 0.0
      %657 = vmatpush1.msra.mxu0 %v625
      %658 = vmatprep.subr.mxu0 0.0
      %659 = vmatpush1.msra.mxu0 %v624
      %660 = vmatprep.subr.mxu0 0.0
      %661 = vmatpush1.msra.mxu0 %v623
      %662 = vmatprep.subr.mxu0 0.0
      %663 = vmatpush1.msra.mxu0 %v622
      %664 = vmatprep.subr.mxu0 0.0
      %665 = vmatpush1.msra.mxu0 %v621
      %666 = vmatprep.subr.mxu0 0.0
      %667 = vmatpush1.msra.mxu0 %v620
      %668 = vmatprep.subr.mxu0 0.0
      %669 = vmatpush2.msra.mxu0 0.0
      %670 = vmatprep.subr.mxu0 0.0
      %671 = vmatpush2.msra.mxu0 0.0
      %672 = vmatprep.subr.mxu0 0.0
      %673 = vmatpush2.msra.mxu0 0.0
      %674 = vmatprep.subr.mxu0 0.0
      %675 = vmatpush2.msra.mxu0 0.0
      %676 = vmatprep.subr.mxu0 0.0
      %677 = vmatpush2.msra.mxu0 0.0
      %678 = vmatprep.subr.mxu0 0.0
      %679 = vmatpush2.msra.mxu0 0.0
      %680 = vmatprep.subr.mxu0 0.0
      %681 = vmatpush2.msra.mxu0 0.0
      %682 = vmatprep.subr.mxu0 0.0
      %683 = vmatpush2.msra.mxu0 0.0
      %684 = vmatprep.subr.mxu0 0.0
      %685 = vmatpush2.msra.mxu0 0.0
      %686 = vmatprep.subr.mxu0 0.0
      %687 = vmatpush2.msra.mxu0 0.0
      %688 = vmatprep.subr.mxu0 0.0
      %689 = vmatpush2.msra.mxu0 0.0
      %690 = vmatprep.subr.mxu0 0.0
      %691 = vmatpush2.msra.mxu0 0.0
      %692 = vmatprep.subr.mxu0 0.0
      %693 = vmatpush2.msra.mxu0 0.0
      %694 = vmatprep.subr.mxu0 0.0
      %695 = vmatpush2.msra.mxu0 0.0
      %696 = vmatprep.subr.mxu0 0.0
      %697 = vmatpush2.msra.mxu0 0.0
      %698 = vmatprep.subr.mxu0 0.0
      %699 = vmatpush2.msra.mxu0 0.0
      %700 = vmatprep.mubr.f32.mxu0 0.0
      %701 = vmatmul.mubr.f32.gmra.mxu0 %v611
      %v702 = vpop.f32.mrf.mxu0
      %v703 = vadd.f32 0.0, %v702
      %v704 = vpop.f32.mrf.mxu0
      %705 = vmatprep.mubr.f32.mxu0 0.0
      %706 = vmatmul.mubr.f32.gmra.mxu0 %v612
      %v707 = vpop.f32.mrf.mxu0
      %v708 = vadd.f32 0.0, %v707
      %v709 = vpop.f32.mrf.mxu0
      %710 = vmatprep.mubr.f32.mxu0 0.0
      %711 = vmatmul.mubr.f32.gmra.mxu0 %v613
      %v712 = vpop.f32.mrf.mxu0
      %v713 = vadd.f32 0.0, %v712
      %v714 = vpop.f32.mrf.mxu0
      %715 = vmatprep.mubr.f32.mxu0 0.0
      %716 = vmatmul.mubr.f32.gmra.mxu0 %v614
      %v717 = vpop.f32.mrf.mxu0
      %v718 = vadd.f32 0.0, %v717
      %v719 = vpop.f32.mrf.mxu0
      %720 = vmatprep.mubr.f32.mxu0 0.0
      %721 = vmatmul.mubr.f32.gmra.mxu0 %v615
      %v722 = vpop.f32.mrf.mxu0
      %v723 = vadd.f32 0.0, %v722
      %v724 = vpop.f32.mrf.mxu0
      %725 = vmatprep.mubr.f32.mxu0 0.0
      %726 = vmatmul.mubr.f32.gmra.mxu0 %v616
      %v727 = vpop.f32.mrf.mxu0
      %v728 = vadd.f32 0.0, %v727
      %v729 = vpop.f32.mrf.mxu0
      %730 = vmatprep.mubr.f32.mxu0 0.0
      %731 = vmatmul.mubr.f32.gmra.mxu0 %v617
      %v732 = vpop.f32.mrf.mxu0
      %v733 = vadd.f32 0.0, %v732
      %v734 = vpop.f32.mrf.mxu0
      %735 = vmatprep.mubr.f32.mxu0 0.0
      %736 = vmatmul.mubr.f32.gmra.mxu0 %v618
      %v737 = vpop.f32.mrf.mxu0
      %v738 = vadd.f32 0.0, %v737
      %v739 = vpop.f32.mrf.mxu0
      %740 = vdwg.mxu0
      %v741 = vadd.f32 %v573, %v703
      %v742 = vadd.f32 %v578, %v708
      %v743 = vadd.f32 %v583, %v713
      %v744 = vadd.f32 %v588, %v718
      %v745 = vadd.f32 %v593, %v723
      %v746 = vadd.f32 %v598, %v728
      %v747 = vadd.f32 %v603, %v733
      %v748 = vadd.f32 %v608, %v738
      %s749 = scalar_lea.vmem %s328, 288
      %v750 = vld [vmem:[%s749] sm:$0xff]
      %v751 = vld [vmem:[%s749 + $0x10] sm:$0xff]
      %v752 = vld [vmem:[%s749 + $0x20] sm:$0xff]
      %v753 = vld [vmem:[%s749 + $0x30] sm:$0xff]
      %v754 = vld [vmem:[%s749 + $0x40] sm:$0xff]
      %v755 = vld [vmem:[%s749 + $0x50] sm:$0xff]
      %v756 = vld [vmem:[%s749 + $0x60] sm:$0xff]
      %v757 = vld [vmem:[%s749 + $0x70] sm:$0xff]
      %s758 = scalar_lea.vmem %s1, 384
      %v759 = vld [vmem:[%s758] sm:$0xff]
      %v760 = vld [vmem:[%s758 + $0x8] sm:$0xff]
      %v761 = vld [vmem:[%s758 + $0x10] sm:$0xff]
      %v762 = vld [vmem:[%s758 + $0x18] sm:$0xff]
      %v763 = vld [vmem:[%s758 + $0x20] sm:$0xff]
      %v764 = vld [vmem:[%s758 + $0x28] sm:$0xff]
      %v765 = vld [vmem:[%s758 + $0x30] sm:$0xff]
      %v766 = vld [vmem:[%s758 + $0x38] sm:$0xff]
      %v767 = vld [vmem:[%s758 + $0x40] sm:$0xff]
      %v768 = vld [vmem:[%s758 + $0x48] sm:$0xff]
      %v769 = vld [vmem:[%s758 + $0x50] sm:$0xff]
      %v770 = vld [vmem:[%s758 + $0x58] sm:$0xff]
      %v771 = vld [vmem:[%s758 + $0x60] sm:$0xff]
      %v772 = vld [vmem:[%s758 + $0x68] sm:$0xff]
      %v773 = vld [vmem:[%s758 + $0x70] sm:$0xff]
      %v774 = vld [vmem:[%s758 + $0x78] sm:$0xff]
      %775 = vmatprep.subr.mxu0 0.0
      %776 = vmatpush1.msra.mxu0 %v774
      %777 = vmatprep.subr.mxu0 0.0
      %778 = vmatpush1.msra.mxu0 %v773
      %779 = vmatprep.subr.mxu0 0.0
      %780 = vmatpush1.msra.mxu0 %v772
      %781 = vmatprep.subr.mxu0 0.0
      %782 = vmatpush1.msra.mxu0 %v771
      %783 = vmatprep.subr.mxu0 0.0
      %784 = vmatpush1.msra.mxu0 %v770
      %785 = vmatprep.subr.mxu0 0.0
      %786 = vmatpush1.msra.mxu0 %v769
      %787 = vmatprep.subr.mxu0 0.0
      %788 = vmatpush1.msra.mxu0 %v768
      %789 = vmatprep.subr.mxu0 0.0
      %790 = vmatpush1.msra.mxu0 %v767
      %791 = vmatprep.subr.mxu0 0.0
      %792 = vmatpush1.msra.mxu0 %v766
      %793 = vmatprep.subr.mxu0 0.0
      %794 = vmatpush1.msra.mxu0 %v765
      %795 = vmatprep.subr.mxu0 0.0
      %796 = vmatpush1.msra.mxu0 %v764
      %797 = vmatprep.subr.mxu0 0.0
      %798 = vmatpush1.msra.mxu0 %v763
      %799 = vmatprep.subr.mxu0 0.0
      %800 = vmatpush1.msra.mxu0 %v762
      %801 = vmatprep.subr.mxu0 0.0
      %802 = vmatpush1.msra.mxu0 %v761
      %803 = vmatprep.subr.mxu0 0.0
      %804 = vmatpush1.msra.mxu0 %v760
      %805 = vmatprep.subr.mxu0 0.0
      %806 = vmatpush1.msra.mxu0 %v759
      %807 = vmatprep.subr.mxu0 0.0
      %808 = vmatpush2.msra.mxu0 0.0
      %809 = vmatprep.subr.mxu0 0.0
      %810 = vmatpush2.msra.mxu0 0.0
      %811 = vmatprep.subr.mxu0 0.0
      %812 = vmatpush2.msra.mxu0 0.0
      %813 = vmatprep.subr.mxu0 0.0
      %814 = vmatpush2.msra.mxu0 0.0
      %815 = vmatprep.subr.mxu0 0.0
      %816 = vmatpush2.msra.mxu0 0.0
      %817 = vmatprep.subr.mxu0 0.0
      %818 = vmatpush2.msra.mxu0 0.0
      %819 = vmatprep.subr.mxu0 0.0
      %820 = vmatpush2.msra.mxu0 0.0
      %821 = vmatprep.subr.mxu0 0.0
      %822 = vmatpush2.msra.mxu0 0.0
      %823 = vmatprep.subr.mxu0 0.0
      %824 = vmatpush2.msra.mxu0 0.0
      %825 = vmatprep.subr.mxu0 0.0
      %826 = vmatpush2.msra.mxu0 0.0
      %827 = vmatprep.subr.mxu0 0.0
      %828 = vmatpush2.msra.mxu0 0.0
      %829 = vmatprep.subr.mxu0 0.0
      %830 = vmatpush2.msra.mxu0 0.0
      %831 = vmatprep.subr.mxu0 0.0
      %832 = vmatpush2.msra.mxu0 0.0
      %833 = vmatprep.subr.mxu0 0.0
      %834 = vmatpush2.msra.mxu0 0.0
      %835 = vmatprep.subr.mxu0 0.0
      %836 = vmatpush2.msra.mxu0 0.0
      %837 = vmatprep.subr.mxu0 0.0
      %838 = vmatpush2.msra.mxu0 0.0
      %839 = vmatprep.mubr.f32.mxu0 0.0
      %840 = vmatmul.mubr.f32.gmra.mxu0 %v750
      %v841 = vpop.f32.mrf.mxu0
      %v842 = vadd.f32 0.0, %v841
      %v843 = vpop.f32.mrf.mxu0
      %844 = vmatprep.mubr.f32.mxu0 0.0
      %845 = vmatmul.mubr.f32.gmra.mxu0 %v751
      %v846 = vpop.f32.mrf.mxu0
      %v847 = vadd.f32 0.0, %v846
      %v848 = vpop.f32.mrf.mxu0
      %849 = vmatprep.mubr.f32.mxu0 0.0
      %850 = vmatmul.mubr.f32.gmra.mxu0 %v752
      %v851 = vpop.f32.mrf.mxu0
      %v852 = vadd.f32 0.0, %v851
      %v853 = vpop.f32.mrf.mxu0
      %854 = vmatprep.mubr.f32.mxu0 0.0
      %855 = vmatmul.mubr.f32.gmra.mxu0 %v753
      %v856 = vpop.f32.mrf.mxu0
      %v857 = vadd.f32 0.0, %v856
      %v858 = vpop.f32.mrf.mxu0
      %859 = vmatprep.mubr.f32.mxu0 0.0
      %860 = vmatmul.mubr.f32.gmra.mxu0 %v754
      %v861 = vpop.f32.mrf.mxu0
      %v862 = vadd.f32 0.0, %v861
      %v863 = vpop.f32.mrf.mxu0
      %864 = vmatprep.mubr.f32.mxu0 0.0
      %865 = vmatmul.mubr.f32.gmra.mxu0 %v755
      %v866 = vpop.f32.mrf.mxu0
      %v867 = vadd.f32 0.0, %v866
      %v868 = vpop.f32.mrf.mxu0
      %869 = vmatprep.mubr.f32.mxu0 0.0
      %870 = vmatmul.mubr.f32.gmra.mxu0 %v756
      %v871 = vpop.f32.mrf.mxu0
      %v872 = vadd.f32 0.0, %v871
      %v873 = vpop.f32.mrf.mxu0
      %874 = vmatprep.mubr.f32.mxu0 0.0
      %875 = vmatmul.mubr.f32.gmra.mxu0 %v757
      %v876 = vpop.f32.mrf.mxu0
      %v877 = vadd.f32 0.0, %v876
      %v878 = vpop.f32.mrf.mxu0
      %879 = vdwg.mxu0
      %v880 = vadd.f32 %v741, %v842
      %v881 = vadd.f32 %v742, %v847
      %v882 = vadd.f32 %v743, %v852
      %v883 = vadd.f32 %v744, %v857
      %v884 = vadd.f32 %v745, %v862
      %v885 = vadd.f32 %v746, %v867
      %v886 = vadd.f32 %v747, %v872
      %v887 = vadd.f32 %v748, %v877
      %s888 = scalar_lea.vmem %s328, 432
      %v889 = vld [vmem:[%s888] sm:$0xff]
      %v890 = vld [vmem:[%s888 + $0x10] sm:$0xff]
      %v891 = vld [vmem:[%s888 + $0x20] sm:$0xff]
      %v892 = vld [vmem:[%s888 + $0x30] sm:$0xff]
      %v893 = vld [vmem:[%s888 + $0x40] sm:$0xff]
      %v894 = vld [vmem:[%s888 + $0x50] sm:$0xff]
      %v895 = vld [vmem:[%s888 + $0x60] sm:$0xff]
      %v896 = vld [vmem:[%s888 + $0x70] sm:$0xff]
      %s897 = scalar_lea.vmem %s1, 512
      %v898 = vld [vmem:[%s897] sm:$0xff]
      %v899 = vld [vmem:[%s897 + $0x8] sm:$0xff]
      %v900 = vld [vmem:[%s897 + $0x10] sm:$0xff]
      %v901 = vld [vmem:[%s897 + $0x18] sm:$0xff]
      %v902 = vld [vmem:[%s897 + $0x20] sm:$0xff]
      %v903 = vld [vmem:[%s897 + $0x28] sm:$0xff]
      %v904 = vld [vmem:[%s897 + $0x30] sm:$0xff]
      %v905 = vld [vmem:[%s897 + $0x38] sm:$0xff]
      %v906 = vld [vmem:[%s897 + $0x40] sm:$0xff]
      %v907 = vld [vmem:[%s897 + $0x48] sm:$0xff]
      %v908 = vld [vmem:[%s897 + $0x50] sm:$0xff]
      %v909 = vld [vmem:[%s897 + $0x58] sm:$0xff]
      %v910 = vld [vmem:[%s897 + $0x60] sm:$0xff]
      %v911 = vld [vmem:[%s897 + $0x68] sm:$0xff]
      %v912 = vld [vmem:[%s897 + $0x70] sm:$0xff]
      %v913 = vld [vmem:[%s897 + $0x78] sm:$0xff]
      %914 = vmatprep.subr.mxu0 0.0
      %915 = vmatpush1.msra.mxu0 %v913
      %916 = vmatprep.subr.mxu0 0.0
      %917 = vmatpush1.msra.mxu0 %v912
      %918 = vmatprep.subr.mxu0 0.0
      %919 = vmatpush1.msra.mxu0 %v911
      %920 = vmatprep.subr.mxu0 0.0
      %921 = vmatpush1.msra.mxu0 %v910
      %922 = vmatprep.subr.mxu0 0.0
      %923 = vmatpush1.msra.mxu0 %v909
      %924 = vmatprep.subr.mxu0 0.0
      %925 = vmatpush1.msra.mxu0 %v908
      %926 = vmatprep.subr.mxu0 0.0
      %927 = vmatpush1.msra.mxu0 %v907
      %928 = vmatprep.subr.mxu0 0.0
      %929 = vmatpush1.msra.mxu0 %v906
      %930 = vmatprep.subr.mxu0 0.0
      %931 = vmatpush1.msra.mxu0 %v905
      %932 = vmatprep.subr.mxu0 0.0
      %933 = vmatpush1.msra.mxu0 %v904
      %934 = vmatprep.subr.mxu0 0.0
      %935 = vmatpush1.msra.mxu0 %v903
      %936 = vmatprep.subr.mxu0 0.0
      %937 = vmatpush1.msra.mxu0 %v902
      %938 = vmatprep.subr.mxu0 0.0
      %939 = vmatpush1.msra.mxu0 %v901
      %940 = vmatprep.subr.mxu0 0.0
      %941 = vmatpush1.msra.mxu0 %v900
      %942 = vmatprep.subr.mxu0 0.0
      %943 = vmatpush1.msra.mxu0 %v899
      %944 = vmatprep.subr.mxu0 0.0
      %945 = vmatpush1.msra.mxu0 %v898
      %946 = vmatprep.subr.mxu0 0.0
      %947 = vmatpush2.msra.mxu0 0.0
      %948 = vmatprep.subr.mxu0 0.0
      %949 = vmatpush2.msra.mxu0 0.0
      %950 = vmatprep.subr.mxu0 0.0
      %951 = vmatpush2.msra.mxu0 0.0
      %952 = vmatprep.subr.mxu0 0.0
      %953 = vmatpush2.msra.mxu0 0.0
      %954 = vmatprep.subr.mxu0 0.0
      %955 = vmatpush2.msra.mxu0 0.0
      %956 = vmatprep.subr.mxu0 0.0
      %957 = vmatpush2.msra.mxu0 0.0
      %958 = vmatprep.subr.mxu0 0.0
      %959 = vmatpush2.msra.mxu0 0.0
      %960 = vmatprep.subr.mxu0 0.0
      %961 = vmatpush2.msra.mxu0 0.0
      %962 = vmatprep.subr.mxu0 0.0
      %963 = vmatpush2.msra.mxu0 0.0
      %964 = vmatprep.subr.mxu0 0.0
      %965 = vmatpush2.msra.mxu0 0.0
      %966 = vmatprep.subr.mxu0 0.0
      %967 = vmatpush2.msra.mxu0 0.0
      %968 = vmatprep.subr.mxu0 0.0
      %969 = vmatpush2.msra.mxu0 0.0
      %970 = vmatprep.subr.mxu0 0.0
      %971 = vmatpush2.msra.mxu0 0.0
      %972 = vmatprep.subr.mxu0 0.0
      %973 = vmatpush2.msra.mxu0 0.0
      %974 = vmatprep.subr.mxu0 0.0
      %975 = vmatpush2.msra.mxu0 0.0
      %976 = vmatprep.subr.mxu0 0.0
      %977 = vmatpush2.msra.mxu0 0.0
      %978 = vmatprep.mubr.f32.mxu0 0.0
      %979 = vmatmul.mubr.f32.gmra.mxu0 %v889
      %v980 = vpop.f32.mrf.mxu0
      %v981 = vadd.f32 0.0, %v980
      %v982 = vpop.f32.mrf.mxu0
      %983 = vmatprep.mubr.f32.mxu0 0.0
      %984 = vmatmul.mubr.f32.gmra.mxu0 %v890
      %v985 = vpop.f32.mrf.mxu0
      %v986 = vadd.f32 0.0, %v985
      %v987 = vpop.f32.mrf.mxu0
      %988 = vmatprep.mubr.f32.mxu0 0.0
      %989 = vmatmul.mubr.f32.gmra.mxu0 %v891
      %v990 = vpop.f32.mrf.mxu0
      %v991 = vadd.f32 0.0, %v990
      %v992 = vpop.f32.mrf.mxu0
      %993 = vmatprep.mubr.f32.mxu0 0.0
      %994 = vmatmul.mubr.f32.gmra.mxu0 %v892
      %v995 = vpop.f32.mrf.mxu0
      %v996 = vadd.f32 0.0, %v995
      %v997 = vpop.f32.mrf.mxu0
      %998 = vmatprep.mubr.f32.mxu0 0.0
      %999 = vmatmul.mubr.f32.gmra.mxu0 %v893
      %v1000 = vpop.f32.mrf.mxu0
      %v1001 = vadd.f32 0.0, %v1000
      %v1002 = vpop.f32.mrf.mxu0
      %1003 = vmatprep.mubr.f32.mxu0 0.0
      %1004 = vmatmul.mubr.f32.gmra.mxu0 %v894
      %v1005 = vpop.f32.mrf.mxu0
      %v1006 = vadd.f32 0.0, %v1005
      %v1007 = vpop.f32.mrf.mxu0
      %1008 = vmatprep.mubr.f32.mxu0 0.0
      %1009 = vmatmul.mubr.f32.gmra.mxu0 %v895
      %v1010 = vpop.f32.mrf.mxu0
      %v1011 = vadd.f32 0.0, %v1010
      %v1012 = vpop.f32.mrf.mxu0
      %1013 = vmatprep.mubr.f32.mxu0 0.0
      %1014 = vmatmul.mubr.f32.gmra.mxu0 %v896
      %v1015 = vpop.f32.mrf.mxu0
      %v1016 = vadd.f32 0.0, %v1015
      %v1017 = vpop.f32.mrf.mxu0
      %1018 = vdwg.mxu0
      %v1019 = vadd.f32 %v880, %v981
      %v1020 = vadd.f32 %v881, %v986
      %v1021 = vadd.f32 %v882, %v991
      %v1022 = vadd.f32 %v883, %v996
      %v1023 = vadd.f32 %v884, %v1001
      %v1024 = vadd.f32 %v885, %v1006
      %v1025 = vadd.f32 %v886, %v1011
      %v1026 = vadd.f32 %v887, %v1016
      %v1027 = vld [vmem:[%s2] sm:$0xff]
      %v1028 = vld [vmem:[%s2 + $0x8] sm:$0xff]
      %v1029 = vld [vmem:[%s2 + $0x10] sm:$0xff]
      %v1030 = vld [vmem:[%s2 + $0x18] sm:$0xff]
      %v1031 = vld [vmem:[%s2 + $0x20] sm:$0xff]
      %v1032 = vld [vmem:[%s2 + $0x28] sm:$0xff]
      %v1033 = vld [vmem:[%s2 + $0x30] sm:$0xff]
      %v1034 = vld [vmem:[%s2 + $0x38] sm:$0xff]
      %v1035 = vld [vmem:[%s2 + $0x40] sm:$0xff]
      %v1036 = vld [vmem:[%s2 + $0x48] sm:$0xff]
      %v1037 = vld [vmem:[%s2 + $0x50] sm:$0xff]
      %v1038 = vld [vmem:[%s2 + $0x58] sm:$0xff]
      %v1039 = vld [vmem:[%s2 + $0x60] sm:$0xff]
      %v1040 = vld [vmem:[%s2 + $0x68] sm:$0xff]
      %v1041 = vld [vmem:[%s2 + $0x70] sm:$0xff]
      %v1042 = vld [vmem:[%s2 + $0x78] sm:$0xff]
      %1043 = vmatprep.subr.mxu0 0.0
      %1044 = vmatpush1.msra.mxu0 %v1042
      %1045 = vmatprep.subr.mxu0 0.0
      %1046 = vmatpush1.msra.mxu0 %v1041
      %1047 = vmatprep.subr.mxu0 0.0
      %1048 = vmatpush1.msra.mxu0 %v1040
      %1049 = vmatprep.subr.mxu0 0.0
      %1050 = vmatpush1.msra.mxu0 %v1039
      %1051 = vmatprep.subr.mxu0 0.0
      %1052 = vmatpush1.msra.mxu0 %v1038
      %1053 = vmatprep.subr.mxu0 0.0
      %1054 = vmatpush1.msra.mxu0 %v1037
      %1055 = vmatprep.subr.mxu0 0.0
      %1056 = vmatpush1.msra.mxu0 %v1036
      %1057 = vmatprep.subr.mxu0 0.0
      %1058 = vmatpush1.msra.mxu0 %v1035
      %1059 = vmatprep.subr.mxu0 0.0
      %1060 = vmatpush1.msra.mxu0 %v1034
      %1061 = vmatprep.subr.mxu0 0.0
      %1062 = vmatpush1.msra.mxu0 %v1033
      %1063 = vmatprep.subr.mxu0 0.0
      %1064 = vmatpush1.msra.mxu0 %v1032
      %1065 = vmatprep.subr.mxu0 0.0
      %1066 = vmatpush1.msra.mxu0 %v1031
      %1067 = vmatprep.subr.mxu0 0.0
      %1068 = vmatpush1.msra.mxu0 %v1030
      %1069 = vmatprep.subr.mxu0 0.0
      %1070 = vmatpush1.msra.mxu0 %v1029
      %1071 = vmatprep.subr.mxu0 0.0
      %1072 = vmatpush1.msra.mxu0 %v1028
      %1073 = vmatprep.subr.mxu0 0.0
      %1074 = vmatpush1.msra.mxu0 %v1027
      %1075 = vmatprep.subr.mxu0 0.0
      %1076 = vmatpush2.msra.mxu0 0.0
      %1077 = vmatprep.subr.mxu0 0.0
      %1078 = vmatpush2.msra.mxu0 0.0
      %1079 = vmatprep.subr.mxu0 0.0
      %1080 = vmatpush2.msra.mxu0 0.0
      %1081 = vmatprep.subr.mxu0 0.0
      %1082 = vmatpush2.msra.mxu0 0.0
      %1083 = vmatprep.subr.mxu0 0.0
      %1084 = vmatpush2.msra.mxu0 0.0
      %1085 = vmatprep.subr.mxu0 0.0
      %1086 = vmatpush2.msra.mxu0 0.0
      %1087 = vmatprep.subr.mxu0 0.0
      %1088 = vmatpush2.msra.mxu0 0.0
      %1089 = vmatprep.subr.mxu0 0.0
      %1090 = vmatpush2.msra.mxu0 0.0
      %1091 = vmatprep.subr.mxu0 0.0
      %1092 = vmatpush2.msra.mxu0 0.0
      %1093 = vmatprep.subr.mxu0 0.0
      %1094 = vmatpush2.msra.mxu0 0.0
      %1095 = vmatprep.subr.mxu0 0.0
      %1096 = vmatpush2.msra.mxu0 0.0
      %1097 = vmatprep.subr.mxu0 0.0
      %1098 = vmatpush2.msra.mxu0 0.0
      %1099 = vmatprep.subr.mxu0 0.0
      %1100 = vmatpush2.msra.mxu0 0.0
      %1101 = vmatprep.subr.mxu0 0.0
      %1102 = vmatpush2.msra.mxu0 0.0
      %1103 = vmatprep.subr.mxu0 0.0
      %1104 = vmatpush2.msra.mxu0 0.0
      %1105 = vmatprep.subr.mxu0 0.0
      %1106 = vmatpush2.msra.mxu0 0.0
      %1107 = vmatprep.mubr.f32.mxu0 0.0
      %1108 = vmatmul.mubr.f32.gmra.mxu0 %v889
      %v1109 = vpop.f32.mrf.mxu0
      %v1110 = vadd.f32 0.0, %v1109
      %v1111 = vpop.f32.mrf.mxu0
      %1112 = vmatprep.mubr.f32.mxu0 0.0
      %1113 = vmatmul.mubr.f32.gmra.mxu0 %v890
      %v1114 = vpop.f32.mrf.mxu0
      %v1115 = vadd.f32 0.0, %v1114
      %v1116 = vpop.f32.mrf.mxu0
      %1117 = vmatprep.mubr.f32.mxu0 0.0
      %1118 = vmatmul.mubr.f32.gmra.mxu0 %v891
      %v1119 = vpop.f32.mrf.mxu0
      %v1120 = vadd.f32 0.0, %v1119
      %v1121 = vpop.f32.mrf.mxu0
      %1122 = vmatprep.mubr.f32.mxu0 0.0
      %1123 = vmatmul.mubr.f32.gmra.mxu0 %v892
      %v1124 = vpop.f32.mrf.mxu0
      %v1125 = vadd.f32 0.0, %v1124
      %v1126 = vpop.f32.mrf.mxu0
      %1127 = vmatprep.mubr.f32.mxu0 0.0
      %1128 = vmatmul.mubr.f32.gmra.mxu0 %v893
      %v1129 = vpop.f32.mrf.mxu0
      %v1130 = vadd.f32 0.0, %v1129
      %v1131 = vpop.f32.mrf.mxu0
      %1132 = vmatprep.mubr.f32.mxu0 0.0
      %1133 = vmatmul.mubr.f32.gmra.mxu0 %v894
      %v1134 = vpop.f32.mrf.mxu0
      %v1135 = vadd.f32 0.0, %v1134
      %v1136 = vpop.f32.mrf.mxu0
      %1137 = vmatprep.mubr.f32.mxu0 0.0
      %1138 = vmatmul.mubr.f32.gmra.mxu0 %v895
      %v1139 = vpop.f32.mrf.mxu0
      %v1140 = vadd.f32 0.0, %v1139
      %v1141 = vpop.f32.mrf.mxu0
      %1142 = vmatprep.mubr.f32.mxu0 0.0
      %1143 = vmatmul.mubr.f32.gmra.mxu0 %v896
      %v1144 = vpop.f32.mrf.mxu0
      %v1145 = vadd.f32 0.0, %v1144
      %v1146 = vpop.f32.mrf.mxu0
      %1147 = vdwg.mxu0
      %v1148 = vld [vmem:[%s749 + $0x1] sm:$0xff]
      %v1149 = vld [vmem:[%s749 + $0x11] sm:$0xff]
      %v1150 = vld [vmem:[%s749 + $0x21] sm:$0xff]
      %v1151 = vld [vmem:[%s749 + $0x31] sm:$0xff]
      %v1152 = vld [vmem:[%s749 + $0x41] sm:$0xff]
      %v1153 = vld [vmem:[%s749 + $0x51] sm:$0xff]
      %v1154 = vld [vmem:[%s749 + $0x61] sm:$0xff]
      %v1155 = vld [vmem:[%s749 + $0x71] sm:$0xff]
      %s1156 = scalar_lea.vmem %s1, 640
      %v1157 = vld [vmem:[%s1156] sm:$0xff]
      %v1158 = vld [vmem:[%s1156 + $0x8] sm:$0xff]
      %v1159 = vld [vmem:[%s1156 + $0x10] sm:$0xff]
      %v1160 = vld [vmem:[%s1156 + $0x18] sm:$0xff]
      %v1161 = vld [vmem:[%s1156 + $0x20] sm:$0xff]
      %v1162 = vld [vmem:[%s1156 + $0x28] sm:$0xff]
      %v1163 = vld [vmem:[%s1156 + $0x30] sm:$0xff]
      %v1164 = vld [vmem:[%s1156 + $0x38] sm:$0xff]
      %v1165 = vld [vmem:[%s1156 + $0x40] sm:$0xff]
      %v1166 = vld [vmem:[%s1156 + $0x48] sm:$0xff]
      %v1167 = vld [vmem:[%s1156 + $0x50] sm:$0xff]
      %v1168 = vld [vmem:[%s1156 + $0x58] sm:$0xff]
      %v1169 = vld [vmem:[%s1156 + $0x60] sm:$0xff]
      %v1170 = vld [vmem:[%s1156 + $0x68] sm:$0xff]
      %v1171 = vld [vmem:[%s1156 + $0x70] sm:$0xff]
      %v1172 = vld [vmem:[%s1156 + $0x78] sm:$0xff]
      %1173 = vmatprep.subr.mxu0 0.0
      %1174 = vmatpush1.msra.mxu0 %v1172
      %1175 = vmatprep.subr.mxu0 0.0
      %1176 = vmatpush1.msra.mxu0 %v1171
      %1177 = vmatprep.subr.mxu0 0.0
      %1178 = vmatpush1.msra.mxu0 %v1170
      %1179 = vmatprep.subr.mxu0 0.0
      %1180 = vmatpush1.msra.mxu0 %v1169
      %1181 = vmatprep.subr.mxu0 0.0
      %1182 = vmatpush1.msra.mxu0 %v1168
      %1183 = vmatprep.subr.mxu0 0.0
      %1184 = vmatpush1.msra.mxu0 %v1167
      %1185 = vmatprep.subr.mxu0 0.0
      %1186 = vmatpush1.msra.mxu0 %v1166
      %1187 = vmatprep.subr.mxu0 0.0
      %1188 = vmatpush1.msra.mxu0 %v1165
      %1189 = vmatprep.subr.mxu0 0.0
      %1190 = vmatpush1.msra.mxu0 %v1164
      %1191 = vmatprep.subr.mxu0 0.0
      %1192 = vmatpush1.msra.mxu0 %v1163
      %1193 = vmatprep.subr.mxu0 0.0
      %1194 = vmatpush1.msra.mxu0 %v1162
      %1195 = vmatprep.subr.mxu0 0.0
      %1196 = vmatpush1.msra.mxu0 %v1161
      %1197 = vmatprep.subr.mxu0 0.0
      %1198 = vmatpush1.msra.mxu0 %v1160
      %1199 = vmatprep.subr.mxu0 0.0
      %1200 = vmatpush1.msra.mxu0 %v1159
      %1201 = vmatprep.subr.mxu0 0.0
      %1202 = vmatpush1.msra.mxu0 %v1158
      %1203 = vmatprep.subr.mxu0 0.0
      %1204 = vmatpush1.msra.mxu0 %v1157
      %1205 = vmatprep.subr.mxu0 0.0
      %1206 = vmatpush2.msra.mxu0 0.0
      %1207 = vmatprep.subr.mxu0 0.0
      %1208 = vmatpush2.msra.mxu0 0.0
      %1209 = vmatprep.subr.mxu0 0.0
      %1210 = vmatpush2.msra.mxu0 0.0
      %1211 = vmatprep.subr.mxu0 0.0
      %1212 = vmatpush2.msra.mxu0 0.0
      %1213 = vmatprep.subr.mxu0 0.0
      %1214 = vmatpush2.msra.mxu0 0.0
      %1215 = vmatprep.subr.mxu0 0.0
      %1216 = vmatpush2.msra.mxu0 0.0
      %1217 = vmatprep.subr.mxu0 0.0
      %1218 = vmatpush2.msra.mxu0 0.0
      %1219 = vmatprep.subr.mxu0 0.0
      %1220 = vmatpush2.msra.mxu0 0.0
      %1221 = vmatprep.subr.mxu0 0.0
      %1222 = vmatpush2.msra.mxu0 0.0
      %1223 = vmatprep.subr.mxu0 0.0
      %1224 = vmatpush2.msra.mxu0 0.0
      %1225 = vmatprep.subr.mxu0 0.0
      %1226 = vmatpush2.msra.mxu0 0.0
      %1227 = vmatprep.subr.mxu0 0.0
      %1228 = vmatpush2.msra.mxu0 0.0
      %1229 = vmatprep.subr.mxu0 0.0
      %1230 = vmatpush2.msra.mxu0 0.0
      %1231 = vmatprep.subr.mxu0 0.0
      %1232 = vmatpush2.msra.mxu0 0.0
      %1233 = vmatprep.subr.mxu0 0.0
      %1234 = vmatpush2.msra.mxu0 0.0
      %1235 = vmatprep.subr.mxu0 0.0
      %1236 = vmatpush2.msra.mxu0 0.0
      %1237 = vmatprep.mubr.f32.mxu0 0.0
      %1238 = vmatmul.mubr.f32.gmra.mxu0 %v1148
      %v1239 = vpop.f32.mrf.mxu0
      %v1240 = vadd.f32 0.0, %v1239
      %v1241 = vpop.f32.mrf.mxu0
      %1242 = vmatprep.mubr.f32.mxu0 0.0
      %1243 = vmatmul.mubr.f32.gmra.mxu0 %v1149
      %v1244 = vpop.f32.mrf.mxu0
      %v1245 = vadd.f32 0.0, %v1244
      %v1246 = vpop.f32.mrf.mxu0
      %1247 = vmatprep.mubr.f32.mxu0 0.0
      %1248 = vmatmul.mubr.f32.gmra.mxu0 %v1150
      %v1249 = vpop.f32.mrf.mxu0
      %v1250 = vadd.f32 0.0, %v1249
      %v1251 = vpop.f32.mrf.mxu0
      %1252 = vmatprep.mubr.f32.mxu0 0.0
      %1253 = vmatmul.mubr.f32.gmra.mxu0 %v1151
      %v1254 = vpop.f32.mrf.mxu0
      %v1255 = vadd.f32 0.0, %v1254
      %v1256 = vpop.f32.mrf.mxu0
      %1257 = vmatprep.mubr.f32.mxu0 0.0
      %1258 = vmatmul.mubr.f32.gmra.mxu0 %v1152
      %v1259 = vpop.f32.mrf.mxu0
      %v1260 = vadd.f32 0.0, %v1259
      %v1261 = vpop.f32.mrf.mxu0
      %1262 = vmatprep.mubr.f32.mxu0 0.0
      %1263 = vmatmul.mubr.f32.gmra.mxu0 %v1153
      %v1264 = vpop.f32.mrf.mxu0
      %v1265 = vadd.f32 0.0, %v1264
      %v1266 = vpop.f32.mrf.mxu0
      %1267 = vmatprep.mubr.f32.mxu0 0.0
      %1268 = vmatmul.mubr.f32.gmra.mxu0 %v1154
      %v1269 = vpop.f32.mrf.mxu0
      %v1270 = vadd.f32 0.0, %v1269
      %v1271 = vpop.f32.mrf.mxu0
      %1272 = vmatprep.mubr.f32.mxu0 0.0
      %1273 = vmatmul.mubr.f32.gmra.mxu0 %v1155
      %v1274 = vpop.f32.mrf.mxu0
      %v1275 = vadd.f32 0.0, %v1274
      %v1276 = vpop.f32.mrf.mxu0
      %1277 = vdwg.mxu0
      %v1278 = vadd.f32 %v1019, %v1240
      %v1279 = vadd.f32 %v1020, %v1245
      %v1280 = vadd.f32 %v1021, %v1250
      %v1281 = vadd.f32 %v1022, %v1255
      %v1282 = vadd.f32 %v1023, %v1260
      %v1283 = vadd.f32 %v1024, %v1265
      %v1284 = vadd.f32 %v1025, %v1270
      %v1285 = vadd.f32 %v1026, %v1275
      %s1286 = scalar_lea.vmem %s328, 16
      %v1287 = vld [vmem:[%s1286] sm:$0xff]
      %v1288 = vld [vmem:[%s1286 + $0x10] sm:$0xff]
      %v1289 = vld [vmem:[%s1286 + $0x20] sm:$0xff]
      %v1290 = vld [vmem:[%s1286 + $0x30] sm:$0xff]
      %v1291 = vld [vmem:[%s1286 + $0x40] sm:$0xff]
      %v1292 = vld [vmem:[%s1286 + $0x50] sm:$0xff]
      %v1293 = vld [vmem:[%s1286 + $0x60] sm:$0xff]
      %v1294 = vld [vmem:[%s1286 + $0x70] sm:$0xff]
      %s1295 = scalar_lea.vmem %s1, 768
      %v1296 = vld [vmem:[%s1295] sm:$0xff]
      %v1297 = vld [vmem:[%s1295 + $0x8] sm:$0xff]
      %v1298 = vld [vmem:[%s1295 + $0x10] sm:$0xff]
      %v1299 = vld [vmem:[%s1295 + $0x18] sm:$0xff]
      %v1300 = vld [vmem:[%s1295 + $0x20] sm:$0xff]
      %v1301 = vld [vmem:[%s1295 + $0x28] sm:$0xff]
      %v1302 = vld [vmem:[%s1295 + $0x30] sm:$0xff]
      %v1303 = vld [vmem:[%s1295 + $0x38] sm:$0xff]
      %v1304 = vld [vmem:[%s1295 + $0x40] sm:$0xff]
      %v1305 = vld [vmem:[%s1295 + $0x48] sm:$0xff]
      %v1306 = vld [vmem:[%s1295 + $0x50] sm:$0xff]
      %v1307 = vld [vmem:[%s1295 + $0x58] sm:$0xff]
      %v1308 = vld [vmem:[%s1295 + $0x60] sm:$0xff]
      %v1309 = vld [vmem:[%s1295 + $0x68] sm:$0xff]
      %v1310 = vld [vmem:[%s1295 + $0x70] sm:$0xff]
      %v1311 = vld [vmem:[%s1295 + $0x78] sm:$0xff]
      %1312 = vmatprep.subr.mxu0 0.0
      %1313 = vmatpush1.msra.mxu0 %v1311
      %1314 = vmatprep.subr.mxu0 0.0
      %1315 = vmatpush1.msra.mxu0 %v1310
      %1316 = vmatprep.subr.mxu0 0.0
      %1317 = vmatpush1.msra.mxu0 %v1309
      %1318 = vmatprep.subr.mxu0 0.0
      %1319 = vmatpush1.msra.mxu0 %v1308
      %1320 = vmatprep.subr.mxu0 0.0
      %1321 = vmatpush1.msra.mxu0 %v1307
      %1322 = vmatprep.subr.mxu0 0.0
      %1323 = vmatpush1.msra.mxu0 %v1306
      %1324 = vmatprep.subr.mxu0 0.0
      %1325 = vmatpush1.msra.mxu0 %v1305
      %1326 = vmatprep.subr.mxu0 0.0
      %1327 = vmatpush1.msra.mxu0 %v1304
      %1328 = vmatprep.subr.mxu0 0.0
      %1329 = vmatpush1.msra.mxu0 %v1303
      %1330 = vmatprep.subr.mxu0 0.0
      %1331 = vmatpush1.msra.mxu0 %v1302
      %1332 = vmatprep.subr.mxu0 0.0
      %1333 = vmatpush1.msra.mxu0 %v1301
      %1334 = vmatprep.subr.mxu0 0.0
      %1335 = vmatpush1.msra.mxu0 %v1300
      %1336 = vmatprep.subr.mxu0 0.0
      %1337 = vmatpush1.msra.mxu0 %v1299
      %1338 = vmatprep.subr.mxu0 0.0
      %1339 = vmatpush1.msra.mxu0 %v1298
      %1340 = vmatprep.subr.mxu0 0.0
      %1341 = vmatpush1.msra.mxu0 %v1297
      %1342 = vmatprep.subr.mxu0 0.0
      %1343 = vmatpush1.msra.mxu0 %v1296
      %1344 = vmatprep.subr.mxu0 0.0
      %1345 = vmatpush2.msra.mxu0 0.0
      %1346 = vmatprep.subr.mxu0 0.0
      %1347 = vmatpush2.msra.mxu0 0.0
      %1348 = vmatprep.subr.mxu0 0.0
      %1349 = vmatpush2.msra.mxu0 0.0
      %1350 = vmatprep.subr.mxu0 0.0
      %1351 = vmatpush2.msra.mxu0 0.0
      %1352 = vmatprep.subr.mxu0 0.0
      %1353 = vmatpush2.msra.mxu0 0.0
      %1354 = vmatprep.subr.mxu0 0.0
      %1355 = vmatpush2.msra.mxu0 0.0
      %1356 = vmatprep.subr.mxu0 0.0
      %1357 = vmatpush2.msra.mxu0 0.0
      %1358 = vmatprep.subr.mxu0 0.0
      %1359 = vmatpush2.msra.mxu0 0.0
      %1360 = vmatprep.subr.mxu0 0.0
      %1361 = vmatpush2.msra.mxu0 0.0
      %1362 = vmatprep.subr.mxu0 0.0
      %1363 = vmatpush2.msra.mxu0 0.0
      %1364 = vmatprep.subr.mxu0 0.0
      %1365 = vmatpush2.msra.mxu0 0.0
      %1366 = vmatprep.subr.mxu0 0.0
      %1367 = vmatpush2.msra.mxu0 0.0
      %1368 = vmatprep.subr.mxu0 0.0
      %1369 = vmatpush2.msra.mxu0 0.0
      %1370 = vmatprep.subr.mxu0 0.0
      %1371 = vmatpush2.msra.mxu0 0.0
      %1372 = vmatprep.subr.mxu0 0.0
      %1373 = vmatpush2.msra.mxu0 0.0
      %1374 = vmatprep.subr.mxu0 0.0
      %1375 = vmatpush2.msra.mxu0 0.0
      %1376 = vmatprep.mubr.f32.mxu0 0.0
      %1377 = vmatmul.mubr.f32.gmra.mxu0 %v1287
      %v1378 = vpop.f32.mrf.mxu0
      %v1379 = vadd.f32 0.0, %v1378
      %v1380 = vpop.f32.mrf.mxu0
      %1381 = vmatprep.mubr.f32.mxu0 0.0
      %1382 = vmatmul.mubr.f32.gmra.mxu0 %v1288
      %v1383 = vpop.f32.mrf.mxu0
      %v1384 = vadd.f32 0.0, %v1383
      %v1385 = vpop.f32.mrf.mxu0
      %1386 = vmatprep.mubr.f32.mxu0 0.0
      %1387 = vmatmul.mubr.f32.gmra.mxu0 %v1289
      %v1388 = vpop.f32.mrf.mxu0
      %v1389 = vadd.f32 0.0, %v1388
      %v1390 = vpop.f32.mrf.mxu0
      %1391 = vmatprep.mubr.f32.mxu0 0.0
      %1392 = vmatmul.mubr.f32.gmra.mxu0 %v1290
      %v1393 = vpop.f32.mrf.mxu0
      %v1394 = vadd.f32 0.0, %v1393
      %v1395 = vpop.f32.mrf.mxu0
      %1396 = vmatprep.mubr.f32.mxu0 0.0
      %1397 = vmatmul.mubr.f32.gmra.mxu0 %v1291
      %v1398 = vpop.f32.mrf.mxu0
      %v1399 = vadd.f32 0.0, %v1398
      %v1400 = vpop.f32.mrf.mxu0
      %1401 = vmatprep.mubr.f32.mxu0 0.0
      %1402 = vmatmul.mubr.f32.gmra.mxu0 %v1292
      %v1403 = vpop.f32.mrf.mxu0
      %v1404 = vadd.f32 0.0, %v1403
      %v1405 = vpop.f32.mrf.mxu0
      %1406 = vmatprep.mubr.f32.mxu0 0.0
      %1407 = vmatmul.mubr.f32.gmra.mxu0 %v1293
      %v1408 = vpop.f32.mrf.mxu0
      %v1409 = vadd.f32 0.0, %v1408
      %v1410 = vpop.f32.mrf.mxu0
      %1411 = vmatprep.mubr.f32.mxu0 0.0
      %1412 = vmatmul.mubr.f32.gmra.mxu0 %v1294
      %v1413 = vpop.f32.mrf.mxu0
      %v1414 = vadd.f32 0.0, %v1413
      %v1415 = vpop.f32.mrf.mxu0
      %1416 = vdwg.mxu0
      %v1417 = vadd.f32 %v1278, %v1379
      %v1418 = vadd.f32 %v1279, %v1384
      %v1419 = vadd.f32 %v1280, %v1389
      %v1420 = vadd.f32 %v1281, %v1394
      %v1421 = vadd.f32 %v1282, %v1399
      %v1422 = vadd.f32 %v1283, %v1404
      %v1423 = vadd.f32 %v1284, %v1409
      %v1424 = vadd.f32 %v1285, %v1414
      %s1425 = scalar_lea.vmem %s328, 160
      %v1426 = vld [vmem:[%s1425] sm:$0xff]
      %v1427 = vld [vmem:[%s1425 + $0x10] sm:$0xff]
      %v1428 = vld [vmem:[%s1425 + $0x20] sm:$0xff]
      %v1429 = vld [vmem:[%s1425 + $0x30] sm:$0xff]
      %v1430 = vld [vmem:[%s1425 + $0x40] sm:$0xff]
      %v1431 = vld [vmem:[%s1425 + $0x50] sm:$0xff]
      %v1432 = vld [vmem:[%s1425 + $0x60] sm:$0xff]
      %v1433 = vld [vmem:[%s1425 + $0x70] sm:$0xff]
      %s1434 = scalar_lea.vmem %s1, 896
      %v1435 = vld [vmem:[%s1434] sm:$0xff]
      %v1436 = vld [vmem:[%s1434 + $0x8] sm:$0xff]
      %v1437 = vld [vmem:[%s1434 + $0x10] sm:$0xff]
      %v1438 = vld [vmem:[%s1434 + $0x18] sm:$0xff]
      %v1439 = vld [vmem:[%s1434 + $0x20] sm:$0xff]
      %v1440 = vld [vmem:[%s1434 + $0x28] sm:$0xff]
      %v1441 = vld [vmem:[%s1434 + $0x30] sm:$0xff]
      %v1442 = vld [vmem:[%s1434 + $0x38] sm:$0xff]
      %v1443 = vld [vmem:[%s1434 + $0x40] sm:$0xff]
      %v1444 = vld [vmem:[%s1434 + $0x48] sm:$0xff]
      %v1445 = vld [vmem:[%s1434 + $0x50] sm:$0xff]
      %v1446 = vld [vmem:[%s1434 + $0x58] sm:$0xff]
      %v1447 = vld [vmem:[%s1434 + $0x60] sm:$0xff]
      %v1448 = vld [vmem:[%s1434 + $0x68] sm:$0xff]
      %v1449 = vld [vmem:[%s1434 + $0x70] sm:$0xff]
      %v1450 = vld [vmem:[%s1434 + $0x78] sm:$0xff]
      %1451 = vmatprep.subr.mxu0 0.0
      %1452 = vmatpush1.msra.mxu0 %v1450
      %1453 = vmatprep.subr.mxu0 0.0
      %1454 = vmatpush1.msra.mxu0 %v1449
      %1455 = vmatprep.subr.mxu0 0.0
      %1456 = vmatpush1.msra.mxu0 %v1448
      %1457 = vmatprep.subr.mxu0 0.0
      %1458 = vmatpush1.msra.mxu0 %v1447
      %1459 = vmatprep.subr.mxu0 0.0
      %1460 = vmatpush1.msra.mxu0 %v1446
      %1461 = vmatprep.subr.mxu0 0.0
      %1462 = vmatpush1.msra.mxu0 %v1445
      %1463 = vmatprep.subr.mxu0 0.0
      %1464 = vmatpush1.msra.mxu0 %v1444
      %1465 = vmatprep.subr.mxu0 0.0
      %1466 = vmatpush1.msra.mxu0 %v1443
      %1467 = vmatprep.subr.mxu0 0.0
      %1468 = vmatpush1.msra.mxu0 %v1442
      %1469 = vmatprep.subr.mxu0 0.0
      %1470 = vmatpush1.msra.mxu0 %v1441
      %1471 = vmatprep.subr.mxu0 0.0
      %1472 = vmatpush1.msra.mxu0 %v1440
      %1473 = vmatprep.subr.mxu0 0.0
      %1474 = vmatpush1.msra.mxu0 %v1439
      %1475 = vmatprep.subr.mxu0 0.0
      %1476 = vmatpush1.msra.mxu0 %v1438
      %1477 = vmatprep.subr.mxu0 0.0
      %1478 = vmatpush1.msra.mxu0 %v1437
      %1479 = vmatprep.subr.mxu0 0.0
      %1480 = vmatpush1.msra.mxu0 %v1436
      %1481 = vmatprep.subr.mxu0 0.0
      %1482 = vmatpush1.msra.mxu0 %v1435
      %1483 = vmatprep.subr.mxu0 0.0
      %1484 = vmatpush2.msra.mxu0 0.0
      %1485 = vmatprep.subr.mxu0 0.0
      %1486 = vmatpush2.msra.mxu0 0.0
      %1487 = vmatprep.subr.mxu0 0.0
      %1488 = vmatpush2.msra.mxu0 0.0
      %1489 = vmatprep.subr.mxu0 0.0
      %1490 = vmatpush2.msra.mxu0 0.0
      %1491 = vmatprep.subr.mxu0 0.0
      %1492 = vmatpush2.msra.mxu0 0.0
      %1493 = vmatprep.subr.mxu0 0.0
      %1494 = vmatpush2.msra.mxu0 0.0
      %1495 = vmatprep.subr.mxu0 0.0
      %1496 = vmatpush2.msra.mxu0 0.0
      %1497 = vmatprep.subr.mxu0 0.0
      %1498 = vmatpush2.msra.mxu0 0.0
      %1499 = vmatprep.subr.mxu0 0.0
      %1500 = vmatpush2.msra.mxu0 0.0
      %1501 = vmatprep.subr.mxu0 0.0
      %1502 = vmatpush2.msra.mxu0 0.0
      %1503 = vmatprep.subr.mxu0 0.0
      %1504 = vmatpush2.msra.mxu0 0.0
      %1505 = vmatprep.subr.mxu0 0.0
      %1506 = vmatpush2.msra.mxu0 0.0
      %1507 = vmatprep.subr.mxu0 0.0
      %1508 = vmatpush2.msra.mxu0 0.0
      %1509 = vmatprep.subr.mxu0 0.0
      %1510 = vmatpush2.msra.mxu0 0.0
      %1511 = vmatprep.subr.mxu0 0.0
      %1512 = vmatpush2.msra.mxu0 0.0
      %1513 = vmatprep.subr.mxu0 0.0
      %1514 = vmatpush2.msra.mxu0 0.0
      %1515 = vmatprep.mubr.f32.mxu0 0.0
      %1516 = vmatmul.mubr.f32.gmra.mxu0 %v1426
      %v1517 = vpop.f32.mrf.mxu0
      %v1518 = vadd.f32 0.0, %v1517
      %v1519 = vpop.f32.mrf.mxu0
      %1520 = vmatprep.mubr.f32.mxu0 0.0
      %1521 = vmatmul.mubr.f32.gmra.mxu0 %v1427
      %v1522 = vpop.f32.mrf.mxu0
      %v1523 = vadd.f32 0.0, %v1522
      %v1524 = vpop.f32.mrf.mxu0
      %1525 = vmatprep.mubr.f32.mxu0 0.0
      %1526 = vmatmul.mubr.f32.gmra.mxu0 %v1428
      %v1527 = vpop.f32.mrf.mxu0
      %v1528 = vadd.f32 0.0, %v1527
      %v1529 = vpop.f32.mrf.mxu0
      %1530 = vmatprep.mubr.f32.mxu0 0.0
      %1531 = vmatmul.mubr.f32.gmra.mxu0 %v1429
      %v1532 = vpop.f32.mrf.mxu0
      %v1533 = vadd.f32 0.0, %v1532
      %v1534 = vpop.f32.mrf.mxu0
      %1535 = vmatprep.mubr.f32.mxu0 0.0
      %1536 = vmatmul.mubr.f32.gmra.mxu0 %v1430
      %v1537 = vpop.f32.mrf.mxu0
      %v1538 = vadd.f32 0.0, %v1537
      %v1539 = vpop.f32.mrf.mxu0
      %1540 = vmatprep.mubr.f32.mxu0 0.0
      %1541 = vmatmul.mubr.f32.gmra.mxu0 %v1431
      %v1542 = vpop.f32.mrf.mxu0
      %v1543 = vadd.f32 0.0, %v1542
      %v1544 = vpop.f32.mrf.mxu0
      %1545 = vmatprep.mubr.f32.mxu0 0.0
      %1546 = vmatmul.mubr.f32.gmra.mxu0 %v1432
      %v1547 = vpop.f32.mrf.mxu0
      %v1548 = vadd.f32 0.0, %v1547
      %v1549 = vpop.f32.mrf.mxu0
      %1550 = vmatprep.mubr.f32.mxu0 0.0
      %1551 = vmatmul.mubr.f32.gmra.mxu0 %v1433
      %v1552 = vpop.f32.mrf.mxu0
      %v1553 = vadd.f32 0.0, %v1552
      %v1554 = vpop.f32.mrf.mxu0
      %1555 = vdwg.mxu0
      %v1556 = vadd.f32 %v1417, %v1518
      %v1557 = vadd.f32 %v1418, %v1523
      %v1558 = vadd.f32 %v1419, %v1528
      %v1559 = vadd.f32 %v1420, %v1533
      %v1560 = vadd.f32 %v1421, %v1538
      %v1561 = vadd.f32 %v1422, %v1543
      %v1562 = vadd.f32 %v1423, %v1548
      %v1563 = vadd.f32 %v1424, %v1553
      %v1564 = vld [vmem:[%s1286 + $0x1] sm:$0xff]
      %v1565 = vld [vmem:[%s1286 + $0x11] sm:$0xff]
      %v1566 = vld [vmem:[%s1286 + $0x21] sm:$0xff]
      %v1567 = vld [vmem:[%s1286 + $0x31] sm:$0xff]
      %v1568 = vld [vmem:[%s1286 + $0x41] sm:$0xff]
      %v1569 = vld [vmem:[%s1286 + $0x51] sm:$0xff]
      %v1570 = vld [vmem:[%s1286 + $0x61] sm:$0xff]
      %v1571 = vld [vmem:[%s1286 + $0x71] sm:$0xff]
      %s1572 = scalar_lea.vmem %s1, 1024
      %v1573 = vld [vmem:[%s1572] sm:$0xff]
      %v1574 = vld [vmem:[%s1572 + $0x8] sm:$0xff]
      %v1575 = vld [vmem:[%s1572 + $0x10] sm:$0xff]
      %v1576 = vld [vmem:[%s1572 + $0x18] sm:$0xff]
      %v1577 = vld [vmem:[%s1572 + $0x20] sm:$0xff]
      %v1578 = vld [vmem:[%s1572 + $0x28] sm:$0xff]
      %v1579 = vld [vmem:[%s1572 + $0x30] sm:$0xff]
      %v1580 = vld [vmem:[%s1572 + $0x38] sm:$0xff]
      %v1581 = vld [vmem:[%s1572 + $0x40] sm:$0xff]
      %v1582 = vld [vmem:[%s1572 + $0x48] sm:$0xff]
      %v1583 = vld [vmem:[%s1572 + $0x50] sm:$0xff]
      %v1584 = vld [vmem:[%s1572 + $0x58] sm:$0xff]
      %v1585 = vld [vmem:[%s1572 + $0x60] sm:$0xff]
      %v1586 = vld [vmem:[%s1572 + $0x68] sm:$0xff]
      %v1587 = vld [vmem:[%s1572 + $0x70] sm:$0xff]
      %v1588 = vld [vmem:[%s1572 + $0x78] sm:$0xff]
      %1589 = vmatprep.subr.mxu0 0.0
      %1590 = vmatpush1.msra.mxu0 %v1588
      %1591 = vmatprep.subr.mxu0 0.0
      %1592 = vmatpush1.msra.mxu0 %v1587
      %1593 = vmatprep.subr.mxu0 0.0
      %1594 = vmatpush1.msra.mxu0 %v1586
      %1595 = vmatprep.subr.mxu0 0.0
      %1596 = vmatpush1.msra.mxu0 %v1585
      %1597 = vmatprep.subr.mxu0 0.0
      %1598 = vmatpush1.msra.mxu0 %v1584
      %1599 = vmatprep.subr.mxu0 0.0
      %1600 = vmatpush1.msra.mxu0 %v1583
      %1601 = vmatprep.subr.mxu0 0.0
      %1602 = vmatpush1.msra.mxu0 %v1582
      %1603 = vmatprep.subr.mxu0 0.0
      %1604 = vmatpush1.msra.mxu0 %v1581
      %1605 = vmatprep.subr.mxu0 0.0
      %1606 = vmatpush1.msra.mxu0 %v1580
      %1607 = vmatprep.subr.mxu0 0.0
      %1608 = vmatpush1.msra.mxu0 %v1579
      %1609 = vmatprep.subr.mxu0 0.0
      %1610 = vmatpush1.msra.mxu0 %v1578
      %1611 = vmatprep.subr.mxu0 0.0
      %1612 = vmatpush1.msra.mxu0 %v1577
      %1613 = vmatprep.subr.mxu0 0.0
      %1614 = vmatpush1.msra.mxu0 %v1576
      %1615 = vmatprep.subr.mxu0 0.0
      %1616 = vmatpush1.msra.mxu0 %v1575
      %1617 = vmatprep.subr.mxu0 0.0
      %1618 = vmatpush1.msra.mxu0 %v1574
      %1619 = vmatprep.subr.mxu0 0.0
      %1620 = vmatpush1.msra.mxu0 %v1573
      %1621 = vmatprep.subr.mxu0 0.0
      %1622 = vmatpush2.msra.mxu0 0.0
      %1623 = vmatprep.subr.mxu0 0.0
      %1624 = vmatpush2.msra.mxu0 0.0
      %1625 = vmatprep.subr.mxu0 0.0
      %1626 = vmatpush2.msra.mxu0 0.0
      %1627 = vmatprep.subr.mxu0 0.0
      %1628 = vmatpush2.msra.mxu0 0.0
      %1629 = vmatprep.subr.mxu0 0.0
      %1630 = vmatpush2.msra.mxu0 0.0
      %1631 = vmatprep.subr.mxu0 0.0
      %1632 = vmatpush2.msra.mxu0 0.0
      %1633 = vmatprep.subr.mxu0 0.0
      %1634 = vmatpush2.msra.mxu0 0.0
      %1635 = vmatprep.subr.mxu0 0.0
      %1636 = vmatpush2.msra.mxu0 0.0
      %1637 = vmatprep.subr.mxu0 0.0
      %1638 = vmatpush2.msra.mxu0 0.0
      %1639 = vmatprep.subr.mxu0 0.0
      %1640 = vmatpush2.msra.mxu0 0.0
      %1641 = vmatprep.subr.mxu0 0.0
      %1642 = vmatpush2.msra.mxu0 0.0
      %1643 = vmatprep.subr.mxu0 0.0
      %1644 = vmatpush2.msra.mxu0 0.0
      %1645 = vmatprep.subr.mxu0 0.0
      %1646 = vmatpush2.msra.mxu0 0.0
      %1647 = vmatprep.subr.mxu0 0.0
      %1648 = vmatpush2.msra.mxu0 0.0
      %1649 = vmatprep.subr.mxu0 0.0
      %1650 = vmatpush2.msra.mxu0 0.0
      %1651 = vmatprep.subr.mxu0 0.0
      %1652 = vmatpush2.msra.mxu0 0.0
      %1653 = vmatprep.mubr.f32.mxu0 0.0
      %1654 = vmatmul.mubr.f32.gmra.mxu0 %v1564
      %v1655 = vpop.f32.mrf.mxu0
      %v1656 = vadd.f32 0.0, %v1655
      %v1657 = vpop.f32.mrf.mxu0
      %1658 = vmatprep.mubr.f32.mxu0 0.0
      %1659 = vmatmul.mubr.f32.gmra.mxu0 %v1565
      %v1660 = vpop.f32.mrf.mxu0
      %v1661 = vadd.f32 0.0, %v1660
      %v1662 = vpop.f32.mrf.mxu0
      %1663 = vmatprep.mubr.f32.mxu0 0.0
      %1664 = vmatmul.mubr.f32.gmra.mxu0 %v1566
      %v1665 = vpop.f32.mrf.mxu0
      %v1666 = vadd.f32 0.0, %v1665
      %v1667 = vpop.f32.mrf.mxu0
      %1668 = vmatprep.mubr.f32.mxu0 0.0
      %1669 = vmatmul.mubr.f32.gmra.mxu0 %v1567
      %v1670 = vpop.f32.mrf.mxu0
      %v1671 = vadd.f32 0.0, %v1670
      %v1672 = vpop.f32.mrf.mxu0
      %1673 = vmatprep.mubr.f32.mxu0 0.0
      %1674 = vmatmul.mubr.f32.gmra.mxu0 %v1568
      %v1675 = vpop.f32.mrf.mxu0
      %v1676 = vadd.f32 0.0, %v1675
      %v1677 = vpop.f32.mrf.mxu0
      %1678 = vmatprep.mubr.f32.mxu0 0.0
      %1679 = vmatmul.mubr.f32.gmra.mxu0 %v1569
      %v1680 = vpop.f32.mrf.mxu0
      %v1681 = vadd.f32 0.0, %v1680
      %v1682 = vpop.f32.mrf.mxu0
      %1683 = vmatprep.mubr.f32.mxu0 0.0
      %1684 = vmatmul.mubr.f32.gmra.mxu0 %v1570
      %v1685 = vpop.f32.mrf.mxu0
      %v1686 = vadd.f32 0.0, %v1685
      %v1687 = vpop.f32.mrf.mxu0
      %1688 = vmatprep.mubr.f32.mxu0 0.0
      %1689 = vmatmul.mubr.f32.gmra.mxu0 %v1571
      %v1690 = vpop.f32.mrf.mxu0
      %v1691 = vadd.f32 0.0, %v1690
      %v1692 = vpop.f32.mrf.mxu0
      %1693 = vdwg.mxu0
      %v1694 = vadd.f32 %v1556, %v1656
      %v1695 = vadd.f32 %v1557, %v1661
      %v1696 = vadd.f32 %v1558, %v1666
      %v1697 = vadd.f32 %v1559, %v1671
      %v1698 = vadd.f32 %v1560, %v1676
      %v1699 = vadd.f32 %v1561, %v1681
      %v1700 = vadd.f32 %v1562, %v1686
      %v1701 = vadd.f32 %v1563, %v1691
      %1702 = vst [vmem:[%s333] sm:$0xff] %v1694
      %1703 = vst [vmem:[%s333 + $0x8] sm:$0xff] %v1695
      %1704 = vst [vmem:[%s333 + $0x10] sm:$0xff] %v1696
      %1705 = vst [vmem:[%s333 + $0x18] sm:$0xff] %v1697
      %1706 = vst [vmem:[%s333 + $0x20] sm:$0xff] %v1698
      %1707 = vst [vmem:[%s333 + $0x28] sm:$0xff] %v1699
      %1708 = vst [vmem:[%s333 + $0x30] sm:$0xff] %v1700
      %1709 = vst [vmem:[%s333 + $0x38] sm:$0xff] %v1701
      %1710 = vst [vmem:[%s338] sm:$0xff] %v1110
      %1711 = vst [vmem:[%s338 + $0x8] sm:$0xff] %v1115
      %1712 = vst [vmem:[%s338 + $0x10] sm:$0xff] %v1120
      %1713 = vst [vmem:[%s338 + $0x18] sm:$0xff] %v1125
      %1714 = vst [vmem:[%s338 + $0x20] sm:$0xff] %v1130
      %1715 = vst [vmem:[%s338 + $0x28] sm:$0xff] %v1135
      %1716 = vst [vmem:[%s338 + $0x30] sm:$0xff] %v1140
      %1717 = vst [vmem:[%s338 + $0x38] sm:$0xff] %v1145
      %v1718 = vadd.f32 %v1694, %v1695
      %v1719 = vadd.f32 %v1718, %v1696
      %v1720 = vadd.f32 %v1719, %v1697
      %v1721 = vadd.f32 %v1720, %v1698
      %v1722 = vadd.f32 %v1721, %v1699
      %v1723 = vadd.f32 %v1722, %v1700
      %v1724 = vadd.f32 %v1723, %v1701
      %v1725 = vrot.slane %v1724, 4
      %v1726 = vadd.f32 %v1724, %v1725
      %v1727 = vrot.slane %v1726, 2
      %v1728 = vadd.f32 %v1726, %v1727
      %v1729 = vrot.slane %v1728, 1
      %v1730 = vadd.f32 %v1728, %v1729
      %1731 = vst [vmem:[%s341] sm:$0x1] %v1730
      %v1732 = vmul.f32 %v1694, %v1694
      %v1733 = vmul.f32 %v1695, %v1695
      %v1734 = vmul.f32 %v1696, %v1696
      %v1735 = vmul.f32 %v1697, %v1697
      %v1736 = vmul.f32 %v1698, %v1698
      %v1737 = vmul.f32 %v1699, %v1699
      %v1738 = vmul.f32 %v1700, %v1700
      %v1739 = vmul.f32 %v1701, %v1701
      %v1740 = vadd.f32 %v1732, %v1733
      %v1741 = vadd.f32 %v1740, %v1734
      %v1742 = vadd.f32 %v1741, %v1735
      %v1743 = vadd.f32 %v1742, %v1736
      %v1744 = vadd.f32 %v1743, %v1737
      %v1745 = vadd.f32 %v1744, %v1738
      %v1746 = vadd.f32 %v1745, %v1739
      %v1747 = vrot.slane %v1746, 4
      %v1748 = vadd.f32 %v1746, %v1747
      %v1749 = vrot.slane %v1748, 2
      %v1750 = vadd.f32 %v1748, %v1749
      %v1751 = vrot.slane %v1750, 1
      %v1752 = vadd.f32 %v1750, %v1751
      %1753 = vst [vmem:[%s344] sm:$0x1] %v1752
      %v1754 = vadd.f32 %v1110, %v1115
      %v1755 = vadd.f32 %v1754, %v1120
      %v1756 = vadd.f32 %v1755, %v1125
      %v1757 = vadd.f32 %v1756, %v1130
      %v1758 = vadd.f32 %v1757, %v1135
      %v1759 = vadd.f32 %v1758, %v1140
      %v1760 = vadd.f32 %v1759, %v1145
      %v1761 = vrot.slane %v1760, 4
      %v1762 = vadd.f32 %v1760, %v1761
      %v1763 = vrot.slane %v1762, 2
      %v1764 = vadd.f32 %v1762, %v1763
      %v1765 = vrot.slane %v1764, 1
      %v1766 = vadd.f32 %v1764, %v1765
      %1767 = vst [vmem:[%s347] sm:$0x1] %v1766
      %v1768 = vmul.f32 %v1110, %v1110
      %v1769 = vmul.f32 %v1115, %v1115
      %v1770 = vmul.f32 %v1120, %v1120
      %v1771 = vmul.f32 %v1125, %v1125
      %v1772 = vmul.f32 %v1130, %v1130
      %v1773 = vmul.f32 %v1135, %v1135
      %v1774 = vmul.f32 %v1140, %v1140
      %v1775 = vmul.f32 %v1145, %v1145
      %v1776 = vadd.f32 %v1768, %v1769
      %v1777 = vadd.f32 %v1776, %v1770
      %v1778 = vadd.f32 %v1777, %v1771
      %v1779 = vadd.f32 %v1778, %v1772
      %v1780 = vadd.f32 %v1779, %v1773
      %v1781 = vadd.f32 %v1780, %v1774
      %v1782 = vadd.f32 %v1781, %v1775
      %v1783 = vrot.slane %v1782, 4
      %v1784 = vadd.f32 %v1782, %v1783
      %v1785 = vrot.slane %v1784, 2
      %v1786 = vadd.f32 %v1784, %v1785
      %v1787 = vrot.slane %v1786, 1
      %v1788 = vadd.f32 %v1786, %v1787
      %1789 = vst [vmem:[%s350] sm:$0x1] %v1788
      %p1790 = scmp.lt.s32.totalorder %s20, 1
      %s1791 = scalar_select %p1790, %s20, 1
      %s1792 = smul.addr %s1791, 8
      %s1793 = smul.addr %s1792, 8
      %s1794 = scalar_lea.vmem %s3, %s1793
      %p1795 = scmp.lt.s32.totalorder %s20, 1
      %s1796 = scalar_select %p1795, %s20, 1
      %s1797 = smul.addr %s1796, 8
      %s1798 = smul.addr %s1797, 8
      %s1799 = scalar_lea.vmem %s4, %s1798
      %p1800 = scmp.lt.s32.totalorder %s20, 1
      %s1801 = scalar_select %p1800, %s20, 1
      %s1802 = scalar_lea.vmem %s5, %s1801
      %p1803 = scmp.lt.s32.totalorder %s20, 1
      %s1804 = scalar_select %p1803, %s20, 1
      %s1805 = scalar_lea.vmem %s6, %s1804
      %p1806 = scmp.lt.s32.totalorder %s20, 1
      %s1807 = scalar_select %p1806, %s20, 1
      %s1808 = scalar_lea.vmem %s7, %s1807
      %p1809 = scmp.lt.s32.totalorder %s20, 1
      %s1810 = scalar_select %p1809, %s20, 1
      %s1811 = scalar_lea.vmem %s8, %s1810
      // Predicated region
      $region33: #{resblock_forward.3} parent=31 // pred_check
        %p1812 = pneg %p106
      $region34: #{resblock_forward.3} parent=31 // pred_check_branch
        %1814 = sbr.rel (%p1812) target = $region36
      $region35: #{resblock_forward.3} parent=31 // pred_region
        _
      $region36: #{resblock_forward.3} parent=31 // pred_fallthru
        _
      // Predicated region
      $region37: #{resblock_forward.3} parent=31 // pred_check
        %p1815 = pneg %p132
      $region38: #{resblock_forward.3} parent=31 // pred_check_branch
        %1817 = sbr.rel (%p1815) target = $region40
      $region39: #{resblock_forward.3} parent=31 // pred_region
        _
      $region40: #{resblock_forward.3} parent=31 // pred_fallthru
        _
      // Predicated region
      $region41: #{resblock_forward.3} parent=31 // pred_check
        %p1818 = pneg %p158
      $region42: #{resblock_forward.3} parent=31 // pred_check_branch
        %1820 = sbr.rel (%p1818) target = $region44
      $region43: #{resblock_forward.3} parent=31 // pred_region
        _
      $region44: #{resblock_forward.3} parent=31 // pred_fallthru
        _
      // Predicated region
      $region45: #{resblock_forward.3} parent=31 // pred_check
        %p1821 = pneg %p184
      $region46: #{resblock_forward.3} parent=31 // pred_check_branch
        %1823 = sbr.rel (%p1821) target = $region48
      $region47: #{resblock_forward.3} parent=31 // pred_region
        _
      $region48: #{resblock_forward.3} parent=31 // pred_fallthru
        _
      // Predicated region
      $region49: #{resblock_forward.3} parent=31 // pred_check
        %p1824 = pneg %p210
      $region50: #{resblock_forward.3} parent=31 // pred_check_branch
        %1826 = sbr.rel (%p1824) target = $region52
      $region51: #{resblock_forward.3} parent=31 // pred_region
        _
      $region52: #{resblock_forward.3} parent=31 // pred_fallthru
        _
      // Predicated region
      $region53: #{resblock_forward.3} parent=31 // pred_check
        %p1827 = pneg %p236
      $region54: #{resblock_forward.3} parent=31 // pred_check_branch
        %1829 = sbr.rel (%p1827) target = $region56
      $region55: #{resblock_forward.3} parent=31 // pred_region
        _
      $region56: #{resblock_forward.3} parent=31 // pred_fallthru
        _
    $region32: #{resblock_forward.3} parent=5 // pred_fallthru
      _
    %p1830 = scmp.le.s32.totalorder 2, %s15
    // Predicated region
    $region57: #{resblock_forward.3} parent=5 // pred_check
      %p1831 = pneg %p1830
    $region58: #{resblock_forward.3} parent=5 // pred_check_branch
      %1833 = sbr.rel (%p1831) target = $region60
    $region59: #{resblock_forward.3} parent=5 // pred_region
      %s1834 = ssub.s32 %s15, 2
      // Predicated region
      $region61: #{resblock_forward.3} parent=59 // pred_check
        %p1835 = pneg %p112
      $region62: #{resblock_forward.3} parent=59 // pred_check_branch
        %1837 = sbr.rel (%p1835) target = $region64
      $region63: #{resblock_forward.3} parent=59 // pred_region
        %p1838 = scmp.lt.s32.totalorder %s21, 1
        %s1839 = scalar_select %p1838, %s21, 1
        %s1840 = smul.addr %s1839, 8
        %s1841 = smul.addr %s1840, 8
        %s1842 = scalar_lea.vmem %s3, %s1841
      $region64: #{resblock_forward.3} parent=59 // pred_fallthru
        _
      // Predicated region
      $region65: #{resblock_forward.3} parent=59 // pred_check
        %p1843 = pneg %p138
      $region66: #{resblock_forward.3} parent=59 // pred_check_branch
        %1845 = sbr.rel (%p1843) target = $region68
      $region67: #{resblock_forward.3} parent=59 // pred_region
        %p1846 = scmp.lt.s32.totalorder %s21, 1
        %s1847 = scalar_select %p1846, %s21, 1
        %s1848 = smul.addr %s1847, 8
        %s1849 = smul.addr %s1848, 8
        %s1850 = scalar_lea.vmem %s4, %s1849
      $region68: #{resblock_forward.3} parent=59 // pred_fallthru
        _
      // Predicated region
      $region69: #{resblock_forward.3} parent=59 // pred_check
        %p1851 = pneg %p164
      $region70: #{resblock_forward.3} parent=59 // pred_check_branch
        %1853 = sbr.rel (%p1851) target = $region72
      $region71: #{resblock_forward.3} parent=59 // pred_region
        %p1854 = scmp.lt.s32.totalorder %s21, 1
        %s1855 = scalar_select %p1854, %s21, 1
        %s1856 = scalar_lea.vmem %s5, %s1855
      $region72: #{resblock_forward.3} parent=59 // pred_fallthru
        _
      // Predicated region
      $region73: #{resblock_forward.3} parent=59 // pred_check
        %p1857 = pneg %p190
      $region74: #{resblock_forward.3} parent=59 // pred_check_branch
        %1859 = sbr.rel (%p1857) target = $region76
      $region75: #{resblock_forward.3} parent=59 // pred_region
        %p1860 = scmp.lt.s32.totalorder %s21, 1
        %s1861 = scalar_select %p1860, %s21, 1
        %s1862 = scalar_lea.vmem %s6, %s1861
      $region76: #{resblock_forward.3} parent=59 // pred_fallthru
        _
      // Predicated region
      $region77: #{resblock_forward.3} parent=59 // pred_check
        %p1863 = pneg %p216
      $region78: #{resblock_forward.3} parent=59 // pred_check_branch
        %1865 = sbr.rel (%p1863) target = $region80
      $region79: #{resblock_forward.3} parent=59 // pred_region
        %p1866 = scmp.lt.s32.totalorder %s21, 1
        %s1867 = scalar_select %p1866, %s21, 1
        %s1868 = scalar_lea.vmem %s7, %s1867
      $region80: #{resblock_forward.3} parent=59 // pred_fallthru
        _
      // Predicated region
      $region81: #{resblock_forward.3} parent=59 // pred_check
        %p1869 = pneg %p242
      $region82: #{resblock_forward.3} parent=59 // pred_check_branch
        %1871 = sbr.rel (%p1869) target = $region84
      $region83: #{resblock_forward.3} parent=59 // pred_region
        %p1872 = scmp.lt.s32.totalorder %s21, 1
        %s1873 = scalar_select %p1872, %s21, 1
        %s1874 = scalar_lea.vmem %s8, %s1873
      $region84: #{resblock_forward.3} parent=59 // pred_fallthru
        _
    $region60: #{resblock_forward.3} parent=5 // pred_fallthru
      _
  $region6: #{resblock_forward.3} parent=0 // loop_footer
    %s19 = sadd.s32 1, %s15
  $region7: #{resblock_forward.3} parent=0 // loop_footer_branch
    %14 = sbr.rel target = $region3
  $region8: #{resblock_forward.3} parent=0 // loop_exit
    _

</llo_original>
